<compile_context>
chip_gen: v7x
topology: tpu7x:2x2x1
jax: 0.10.0
libtpu: 0.0.40
codegen_flags: <defaults>
</compile_context>

<pallas_src>
import math

import jax
import jax.numpy as jnp
from jax import lax
from jax.experimental import pallas as pl
from jax.experimental.pallas import tpu as pltpu

# ----------------------------- config (small, BERT-like) --------------------
VOCAB = 64
B = 2              # batch
S = 8              # sequence length (real BERT uses 512)
H = 32             # hidden size
HEADS = 4
HEAD_DIM = H // HEADS
BH = B * HEADS
FF = 4 * H         # intermediate size
LAYERS = 2
EPS = 1e-12        # BERT LayerNorm eps

# vector-slab row indices (per layer): [bo, ln1_g, ln1_b, b2, ln2_g, ln2_b]
_BO, _LN1G, _LN1B, _B2, _LN2G, _LN2B = range(6)


# ----------------------------- helpers ---------------------------------------
def _layernorm(x, gamma, beta):
    mu = jnp.mean(x, axis=-1, keepdims=True)
    var = jnp.mean((x - mu) * (x - mu), axis=-1, keepdims=True)
    return (x - mu) * lax.rsqrt(var + EPS) * gamma + beta


def _bcast_heads(a, tail):
    """(HEADS, *tail) -> (B*HEADS, *tail); only leading-dim broadcast/reshape."""
    return jnp.broadcast_to(a[None], (B, HEADS) + tail).reshape((BH,) + tail)


# ----------------------------- fused kernel ----------------------------------
def fused_encoder_kernel(ids_ref, tok_ref, posplus_ref, embln_ref,
                         wqkv_ref, bqkv_ref, wo_ref, vec_ref,
                         w1_ref, b1_ref, w2_ref, o_ref):
    # ---- fused embedding: one-hot (B*S,VOCAB) x (VOCAB,H) MXU gather ----
    ids = ids_ref[...]                                          # (B*S, 1) int32
    iota = lax.broadcasted_iota(jnp.int32, (B * S, VOCAB), 1)
    onehot = jnp.where(ids == iota, 1.0, 0.0).astype(jnp.bfloat16)
    x = jnp.dot(onehot, tok_ref[...], preferred_element_type=jnp.float32)
    x = x + posplus_ref[...]                                    # + pos/type emb
    embln = embln_ref[...]                                      # (2, H)
    x = _layernorm(x, embln[0:1, :], embln[1:2, :])             # (B*S, H) f32

    scale = 1.0 / math.sqrt(HEAD_DIM)

    for li in range(LAYERS):                                    # static unroll
        vecs = vec_ref[li]                                      # (6, H) f32
        wqkv = wqkv_ref[li]                                     # (3, HEADS, H, D) bf16
        bqkv = bqkv_ref[li]                                     # (3, HEADS, 1, D) f32

        # Replicate activations over heads: (B*HEADS, S, H), leading dims only.
        xb = x.astype(jnp.bfloat16)
        xh = jnp.broadcast_to(xb.reshape(B, 1, S, H),
                              (B, HEADS, S, H)).reshape(BH, S, H)

        def proj(t):
            w = _bcast_heads(wqkv[t], (H, HEAD_DIM))            # (BH, H, D) bf16
            b = _bcast_heads(bqkv[t], (1, HEAD_DIM))            # (BH, 1, D) f32
            return jnp.einsum('bnd,bde->bne', xh, w,
                              preferred_element_type=jnp.float32) + b

        q, k, v = proj(0), proj(1), proj(2)                     # (BH, S, D) f32

        # ---- attention scores / context as single-batch 3-D einsums ----
        s = jnp.einsum('bqd,bkd->bqk', q.astype(jnp.bfloat16),
                       k.astype(jnp.bfloat16),
                       preferred_element_type=jnp.float32) * scale
        s = s - jnp.max(s, axis=-1, keepdims=True)
        p = jnp.exp(s)
        p = p / jnp.sum(p, axis=-1, keepdims=True)              # exact softmax
        ctx = jnp.einsum('bqk,bkd->bqd', p.astype(jnp.bfloat16),
                         v.astype(jnp.bfloat16),
                         preferred_element_type=jnp.float32)    # (BH, S, D)

        # ---- per-head output projection, then head-sum (no lane concat) ----
        wo_b = _bcast_heads(wo_ref[li], (HEAD_DIM, H))          # (BH, D, H) bf16
        per_head = jnp.einsum('bnd,bde->bne', ctx.astype(jnp.bfloat16), wo_b,
                              preferred_element_type=jnp.float32)  # (BH, S, H)
        attn = per_head.reshape(B, HEADS, S, H).sum(axis=1).reshape(B * S, H)
        attn = attn + vecs[_BO:_BO + 1, :]
        h1 = _layernorm(x + attn, vecs[_LN1G:_LN1G + 1, :],
                        vecs[_LN1B:_LN1B + 1, :])

        # ---- feed-forward + residual + LN ----
        ff = jnp.dot(h1.astype(jnp.bfloat16), w1_ref[li],
                     preferred_element_type=jnp.float32) + b1_ref[li]
        ff = jax.nn.gelu(ff, approximate=True)
        ff = jnp.dot(ff.astype(jnp.bfloat16), w2_ref[li],
                     preferred_element_type=jnp.float32) + vecs[_B2:_B2 + 1, :]
        x = _layernorm(h1 + ff, vecs[_LN2G:_LN2G + 1, :],
                       vecs[_LN2B:_LN2B + 1, :])

    o_ref[...] = x.reshape(B, S, H).astype(o_ref.dtype)


def fused_encoder(ids2d, p):
    args = (ids2d, p["tok_emb"], p["posplus"], p["emb_ln"],
            p["wqkv"], p["bqkv"], p["wo"], p["vecs"],
            p["w1"], p["b1"], p["w2"])
    vmem = lambda: pl.BlockSpec(memory_space=pltpu.MemorySpace.VMEM)
    return pl.pallas_call(
        fused_encoder_kernel,
        out_shape=jax.ShapeDtypeStruct((B, S, H), jnp.float32),
        in_specs=[vmem() for _ in args],
        out_specs=vmem(),
    )(*args)


# ----------------------------- parameter init --------------------------------
def init_params(key):
    def norm(k, shape, dtype=jnp.bfloat16):
        return (0.02 * jax.random.normal(k, shape, dtype=jnp.float32)).astype(dtype)

    keys = jax.random.split(key, 7)

    vecs = jnp.zeros((LAYERS, 6, H), jnp.float32)
    vecs = vecs.at[:, _LN1G, :].set(1.0)          # LayerNorm gammas -> 1
    vecs = vecs.at[:, _LN2G, :].set(1.0)

    pos = 0.02 * jax.random.normal(keys[1], (S, H), dtype=jnp.float32)
    typ = 0.02 * jax.random.normal(keys[2], (2, H), dtype=jnp.float32)
    posplus = jnp.tile(pos + typ[0:1], (B, 1))    # (B*S, H), type-0 segment

    return {
        "tok_emb": norm(keys[0], (VOCAB, H)),                           # bf16
        "posplus": posplus,                                             # f32
        "emb_ln": jnp.concatenate(
            [jnp.ones((1, H), jnp.float32), jnp.zeros((1, H), jnp.float32)], 0),
        "wqkv": norm(keys[3], (LAYERS, 3, HEADS, H, HEAD_DIM)),         # bf16
        "bqkv": jnp.zeros((LAYERS, 3, HEADS, 1, HEAD_DIM), jnp.float32),
        "wo": norm(keys[4], (LAYERS, HEADS, HEAD_DIM, H)),              # bf16
        "vecs": vecs,
        "w1": norm(keys[5], (LAYERS, H, FF)),                           # bf16
        "b1": jnp.zeros((LAYERS, 1, FF), jnp.float32),
        "w2": norm(keys[6], (LAYERS, FF, H)),                           # bf16
    }


# ----------------------------- Conditioner forward ----------------------------
@jax.jit
def conditioner_forward(token_ids, params):
    """token_ids: int32 [B, S] -> last_hidden_state float32 [B, S, H]."""
    ids2d = token_ids.reshape(B * S, 1).astype(jnp.int32)
    # Embedding gather + LN + all transformer layers in one fused Pallas kernel.
    return fused_encoder(ids2d, params)


# ----------------------------- main -------------------------------------------
if __name__ == "__main__":
    key = jax.random.PRNGKey(0)
    k_par, k_tok = jax.random.split(key)
    params = init_params(k_par)
    token_ids = jax.random.randint(k_tok, (B, S), 0, VOCAB, dtype=jnp.int32)

    out = conditioner_forward(token_ids, params)
    jax.block_until_ready(out)
    assert out.shape == (B, S, H) and out.dtype == jnp.float32
    assert bool(jnp.all(jnp.isfinite(out)))
    print("KERNEL_OK")
</pallas_src>

<mosaic_0001>
module attributes {stable_mosaic.version = 11 : i64} {
  func.func @fused_encoder_kernel(%arg0: memref<16x1xi32, #tpu.memory_space<vmem>>, %arg1: memref<64x32xbf16, #tpu.memory_space<vmem>>, %arg2: memref<16x32xf32, #tpu.memory_space<vmem>>, %arg3: memref<2x32xf32, #tpu.memory_space<vmem>>, %arg4: memref<2x3x4x32x8xbf16, #tpu.memory_space<vmem>>, %arg5: memref<2x3x4x1x8xf32, #tpu.memory_space<vmem>>, %arg6: memref<2x4x8x32xbf16, #tpu.memory_space<vmem>>, %arg7: memref<2x6x32xf32, #tpu.memory_space<vmem>>, %arg8: memref<2x32x128xbf16, #tpu.memory_space<vmem>>, %arg9: memref<2x1x128xf32, #tpu.memory_space<vmem>>, %arg10: memref<2x128x32xbf16, #tpu.memory_space<vmem>>, %arg11: memref<2x8x32xf32, #tpu.memory_space<vmem>>) attributes {dimension_semantics = [], scalar_prefetch = 0 : i64, scratch_operands = 0 : i64, tpu.core_type = #tpu.core_type<tc>} {
    %c0 = arith.constant 0 : index
    %c0_0 = arith.constant 0 : index
    %0 = vector.load %arg0[%c0, %c0_0] : memref<16x1xi32, #tpu.memory_space<vmem>>, vector<16x1xi32>
    %1 = tpu.iota {dimensions = array<i32: 1>} : vector<16x64xi32>
    %2 = vector.broadcast %0 : vector<16x1xi32> to vector<16x64xi32>
    %3 = arith.cmpi eq, %2, %1 : vector<16x64xi32>
    %cst = arith.constant 1.000000e+00 : f32
    %cst_1 = arith.constant 0.000000e+00 : f32
    %4 = vector.broadcast %cst : f32 to vector<16x64xf32>
    %5 = vector.broadcast %cst_1 : f32 to vector<16x64xf32>
    %6 = arith.select %3, %4, %5 : vector<16x64xi1>, vector<16x64xf32>
    %7 = arith.truncf %6 : vector<16x64xf32> to vector<16x64xbf16>
    %c0_2 = arith.constant 0 : index
    %c0_3 = arith.constant 0 : index
    %8 = vector.load %arg1[%c0_2, %c0_3] : memref<64x32xbf16, #tpu.memory_space<vmem>>, vector<64x32xbf16>
    %cst_4 = arith.constant dense<0.000000e+00> : vector<16x32xf32>
    %9 = tpu.matmul %7, %8, %cst_4 {dimension_numbers = #tpu.dot_dimension_numbers<[1], [0], [0], [1], [0, 0, 1, 1], [], []>} : vector<16x64xbf16>, vector<64x32xbf16>, vector<16x32xf32> -> vector<16x32xf32>
    %c0_5 = arith.constant 0 : index
    %c0_6 = arith.constant 0 : index
    %10 = vector.load %arg2[%c0_5, %c0_6] : memref<16x32xf32, #tpu.memory_space<vmem>>, vector<16x32xf32>
    %11 = arith.addf %9, %10 : vector<16x32xf32>
    %c0_7 = arith.constant 0 : index
    %c0_8 = arith.constant 0 : index
    %12 = vector.load %arg3[%c0_7, %c0_8] : memref<2x32xf32, #tpu.memory_space<vmem>>, vector<2x32xf32>
    %13 = vector.extract_strided_slice %12 {offsets = [0, 0], sizes = [1, 32], strides = [1, 1]} : vector<2x32xf32> to vector<1x32xf32>
    %14 = vector.extract_strided_slice %12 {offsets = [1, 0], sizes = [1, 32], strides = [1, 1]} : vector<2x32xf32> to vector<1x32xf32>
    %cst_9 = arith.constant dense<0.000000e+00> : vector<16xf32>
    %15 = vector.multi_reduction <add>, %11, %cst_9 [1] : vector<16x32xf32> to vector<16xf32>
    %16 = vector.shape_cast %15 : vector<16xf32> to vector<16x1xf32>
    %cst_10 = arith.constant 3.200000e+01 : f32
    %17 = vector.broadcast %cst_10 : f32 to vector<16x1xf32>
    %18 = arith.divf %16, %17 : vector<16x1xf32>
    %19 = vector.broadcast %18 : vector<16x1xf32> to vector<16x32xf32>
    %20 = arith.subf %11, %19 : vector<16x32xf32>
    %21 = vector.broadcast %18 : vector<16x1xf32> to vector<16x32xf32>
    %22 = arith.subf %11, %21 : vector<16x32xf32>
    %23 = arith.mulf %20, %22 : vector<16x32xf32>
    %cst_11 = arith.constant dense<0.000000e+00> : vector<16xf32>
    %24 = vector.multi_reduction <add>, %23, %cst_11 [1] : vector<16x32xf32> to vector<16xf32>
    %25 = vector.shape_cast %24 : vector<16xf32> to vector<16x1xf32>
    %cst_12 = arith.constant 3.200000e+01 : f32
    %26 = vector.broadcast %cst_12 : f32 to vector<16x1xf32>
    %27 = arith.divf %25, %26 : vector<16x1xf32>
    %28 = vector.broadcast %18 : vector<16x1xf32> to vector<16x32xf32>
    %29 = arith.subf %11, %28 : vector<16x32xf32>
    %cst_13 = arith.constant 9.99999996E-13 : f32
    %30 = vector.broadcast %cst_13 : f32 to vector<16x1xf32>
    %31 = arith.addf %27, %30 : vector<16x1xf32>
    %32 = math.rsqrt %31 : vector<16x1xf32>
    %33 = vector.broadcast %32 : vector<16x1xf32> to vector<16x32xf32>
    %34 = arith.mulf %29, %33 : vector<16x32xf32>
    %35 = vector.broadcast %13 : vector<1x32xf32> to vector<16x32xf32>
    %36 = arith.mulf %34, %35 : vector<16x32xf32>
    %37 = vector.broadcast %14 : vector<1x32xf32> to vector<16x32xf32>
    %38 = arith.addf %36, %37 : vector<16x32xf32>
    %c0_14 = arith.constant 0 : index
    %c0_15 = arith.constant 0 : index
    %c0_16 = arith.constant 0 : index
    %39 = vector.load %arg7[%c0_14, %c0_15, %c0_16] : memref<2x6x32xf32, #tpu.memory_space<vmem>>, vector<1x6x32xf32>
    %40 = vector.shape_cast %39 : vector<1x6x32xf32> to vector<6x32xf32>
    %c0_17 = arith.constant 0 : index
    %c0_18 = arith.constant 0 : index
    %c0_19 = arith.constant 0 : index
    %c0_20 = arith.constant 0 : index
    %c0_21 = arith.constant 0 : index
    %41 = vector.load %arg4[%c0_17, %c0_18, %c0_19, %c0_20, %c0_21] : memref<2x3x4x32x8xbf16, #tpu.memory_space<vmem>>, vector<1x3x4x32x8xbf16>
    %42 = vector.shape_cast %41 : vector<1x3x4x32x8xbf16> to vector<3x4x32x8xbf16>
    %c0_22 = arith.constant 0 : index
    %c0_23 = arith.constant 0 : index
    %c0_24 = arith.constant 0 : index
    %c0_25 = arith.constant 0 : index
    %c0_26 = arith.constant 0 : index
    %43 = vector.load %arg5[%c0_22, %c0_23, %c0_24, %c0_25, %c0_26] : memref<2x3x4x1x8xf32, #tpu.memory_space<vmem>>, vector<1x3x4x1x8xf32>
    %44 = vector.shape_cast %43 : vector<1x3x4x1x8xf32> to vector<3x4x1x8xf32>
    %45 = arith.truncf %38 : vector<16x32xf32> to vector<16x32xbf16>
    %46 = vector.shape_cast %45 : vector<16x32xbf16> to vector<2x1x8x32xbf16>
    %47 = vector.shape_cast %46 : vector<2x1x8x32xbf16> to vector<2x1x8x32xbf16>
    %48 = vector.broadcast %47 : vector<2x1x8x32xbf16> to vector<2x4x8x32xbf16>
    %49 = vector.shape_cast %48 : vector<2x4x8x32xbf16> to vector<8x8x32xbf16>
    %50 = vector.extract_strided_slice %42 {offsets = [0, 0, 0, 0], sizes = [1, 4, 32, 8], strides = [1, 1, 1, 1]} : vector<3x4x32x8xbf16> to vector<1x4x32x8xbf16>
    %51 = vector.shape_cast %50 : vector<1x4x32x8xbf16> to vector<4x32x8xbf16>
    %52 = vector.shape_cast %51 : vector<4x32x8xbf16> to vector<1x4x32x8xbf16>
    %53 = vector.shape_cast %52 : vector<1x4x32x8xbf16> to vector<1x4x32x8xbf16>
    %54 = vector.broadcast %53 : vector<1x4x32x8xbf16> to vector<2x4x32x8xbf16>
    %55 = vector.shape_cast %54 : vector<2x4x32x8xbf16> to vector<8x32x8xbf16>
    %56 = vector.extract_strided_slice %44 {offsets = [0, 0, 0, 0], sizes = [1, 4, 1, 8], strides = [1, 1, 1, 1]} : vector<3x4x1x8xf32> to vector<1x4x1x8xf32>
    %57 = vector.shape_cast %56 : vector<1x4x1x8xf32> to vector<4x1x8xf32>
    %58 = vector.shape_cast %57 : vector<4x1x8xf32> to vector<1x4x1x8xf32>
    %59 = vector.shape_cast %58 : vector<1x4x1x8xf32> to vector<1x4x1x8xf32>
    %60 = vector.broadcast %59 : vector<1x4x1x8xf32> to vector<2x4x1x8xf32>
    %61 = vector.shape_cast %60 : vector<2x4x1x8xf32> to vector<8x1x8xf32>
    "tpu.trace_start"() <{level = 10 : i32, message = "bnd,bde->bne"}> : () -> ()
    %cst_27 = arith.constant dense<0.000000e+00> : vector<8x8x8xf32>
    %62 = tpu.matmul %49, %55, %cst_27 {dimension_numbers = #tpu.dot_dimension_numbers<[2], [1], [1], [2], [0, 0, 0, 1, 1, 2], [0], [0]>} : vector<8x8x32xbf16>, vector<8x32x8xbf16>, vector<8x8x8xf32> -> vector<8x8x8xf32>
    "tpu.trace_stop"() : () -> ()
    %63 = vector.broadcast %61 : vector<8x1x8xf32> to vector<8x8x8xf32>
    %64 = arith.addf %62, %63 : vector<8x8x8xf32>
    %65 = vector.extract_strided_slice %42 {offsets = [1, 0, 0, 0], sizes = [1, 4, 32, 8], strides = [1, 1, 1, 1]} : vector<3x4x32x8xbf16> to vector<1x4x32x8xbf16>
    %66 = vector.shape_cast %65 : vector<1x4x32x8xbf16> to vector<4x32x8xbf16>
    %67 = vector.shape_cast %66 : vector<4x32x8xbf16> to vector<1x4x32x8xbf16>
    %68 = vector.shape_cast %67 : vector<1x4x32x8xbf16> to vector<1x4x32x8xbf16>
    %69 = vector.broadcast %68 : vector<1x4x32x8xbf16> to vector<2x4x32x8xbf16>
    %70 = vector.shape_cast %69 : vector<2x4x32x8xbf16> to vector<8x32x8xbf16>
    %71 = vector.extract_strided_slice %44 {offsets = [1, 0, 0, 0], sizes = [1, 4, 1, 8], strides = [1, 1, 1, 1]} : vector<3x4x1x8xf32> to vector<1x4x1x8xf32>
    %72 = vector.shape_cast %71 : vector<1x4x1x8xf32> to vector<4x1x8xf32>
    %73 = vector.shape_cast %72 : vector<4x1x8xf32> to vector<1x4x1x8xf32>
    %74 = vector.shape_cast %73 : vector<1x4x1x8xf32> to vector<1x4x1x8xf32>
    %75 = vector.broadcast %74 : vector<1x4x1x8xf32> to vector<2x4x1x8xf32>
    %76 = vector.shape_cast %75 : vector<2x4x1x8xf32> to vector<8x1x8xf32>
    "tpu.trace_start"() <{level = 10 : i32, message = "bnd,bde->bne"}> : () -> ()
    %cst_28 = arith.constant dense<0.000000e+00> : vector<8x8x8xf32>
    %77 = tpu.matmul %49, %70, %cst_28 {dimension_numbers = #tpu.dot_dimension_numbers<[2], [1], [1], [2], [0, 0, 0, 1, 1, 2], [0], [0]>} : vector<8x8x32xbf16>, vector<8x32x8xbf16>, vector<8x8x8xf32> -> vector<8x8x8xf32>
    "tpu.trace_stop"() : () -> ()
    %78 = vector.broadcast %76 : vector<8x1x8xf32> to vector<8x8x8xf32>
    %79 = arith.addf %77, %78 : vector<8x8x8xf32>
    %80 = vector.extract_strided_slice %42 {offsets = [2, 0, 0, 0], sizes = [1, 4, 32, 8], strides = [1, 1, 1, 1]} : vector<3x4x32x8xbf16> to vector<1x4x32x8xbf16>
    %81 = vector.shape_cast %80 : vector<1x4x32x8xbf16> to vector<4x32x8xbf16>
    %82 = vector.shape_cast %81 : vector<4x32x8xbf16> to vector<1x4x32x8xbf16>
    %83 = vector.shape_cast %82 : vector<1x4x32x8xbf16> to vector<1x4x32x8xbf16>
    %84 = vector.broadcast %83 : vector<1x4x32x8xbf16> to vector<2x4x32x8xbf16>
    %85 = vector.shape_cast %84 : vector<2x4x32x8xbf16> to vector<8x32x8xbf16>
    %86 = vector.extract_strided_slice %44 {offsets = [2, 0, 0, 0], sizes = [1, 4, 1, 8], strides = [1, 1, 1, 1]} : vector<3x4x1x8xf32> to vector<1x4x1x8xf32>
    %87 = vector.shape_cast %86 : vector<1x4x1x8xf32> to vector<4x1x8xf32>
    %88 = vector.shape_cast %87 : vector<4x1x8xf32> to vector<1x4x1x8xf32>
    %89 = vector.shape_cast %88 : vector<1x4x1x8xf32> to vector<1x4x1x8xf32>
    %90 = vector.broadcast %89 : vector<1x4x1x8xf32> to vector<2x4x1x8xf32>
    %91 = vector.shape_cast %90 : vector<2x4x1x8xf32> to vector<8x1x8xf32>
    "tpu.trace_start"() <{level = 10 : i32, message = "bnd,bde->bne"}> : () -> ()
    %cst_29 = arith.constant dense<0.000000e+00> : vector<8x8x8xf32>
    %92 = tpu.matmul %49, %85, %cst_29 {dimension_numbers = #tpu.dot_dimension_numbers<[2], [1], [1], [2], [0, 0, 0, 1, 1, 2], [0], [0]>} : vector<8x8x32xbf16>, vector<8x32x8xbf16>, vector<8x8x8xf32> -> vector<8x8x8xf32>
    "tpu.trace_stop"() : () -> ()
    %93 = vector.broadcast %91 : vector<8x1x8xf32> to vector<8x8x8xf32>
    %94 = arith.addf %92, %93 : vector<8x8x8xf32>
    %95 = arith.truncf %64 : vector<8x8x8xf32> to vector<8x8x8xbf16>
    %96 = arith.truncf %79 : vector<8x8x8xf32> to vector<8x8x8xbf16>
    "tpu.trace_start"() <{level = 10 : i32, message = "bqd,bkd->bqk"}> : () -> ()
    %cst_30 = arith.constant dense<0.000000e+00> : vector<8x8x8xf32>
    %97 = tpu.matmul %95, %96, %cst_30 {dimension_numbers = #tpu.dot_dimension_numbers<[2], [2], [1], [1], [0, 0, 0, 1, 1, 1], [0], [0]>} : vector<8x8x8xbf16>, vector<8x8x8xbf16>, vector<8x8x8xf32> -> vector<8x8x8xf32>
    "tpu.trace_stop"() : () -> ()
    %cst_31 = arith.constant 0.353553385 : f32
    %98 = vector.broadcast %cst_31 : f32 to vector<8x8x8xf32>
    %99 = arith.mulf %97, %98 : vector<8x8x8xf32>
    %cst_32 = arith.constant dense<0xFF800000> : vector<8x8xf32>
    %100 = vector.multi_reduction <maximumf>, %99, %cst_32 [2] : vector<8x8x8xf32> to vector<8x8xf32>
    %101 = vector.shape_cast %100 : vector<8x8xf32> to vector<8x8x1xf32>
    %102 = vector.broadcast %101 : vector<8x8x1xf32> to vector<8x8x8xf32>
    %103 = arith.subf %99, %102 : vector<8x8x8xf32>
    %104 = math.exp %103 : vector<8x8x8xf32>
    %cst_33 = arith.constant dense<0.000000e+00> : vector<8x8xf32>
    %105 = vector.multi_reduction <add>, %104, %cst_33 [2] : vector<8x8x8xf32> to vector<8x8xf32>
    %106 = vector.shape_cast %105 : vector<8x8xf32> to vector<8x8x1xf32>
    %107 = vector.broadcast %106 : vector<8x8x1xf32> to vector<8x8x8xf32>
    %108 = arith.divf %104, %107 : vector<8x8x8xf32>
    %109 = arith.truncf %108 : vector<8x8x8xf32> to vector<8x8x8xbf16>
    %110 = arith.truncf %94 : vector<8x8x8xf32> to vector<8x8x8xbf16>
    "tpu.trace_start"() <{level = 10 : i32, message = "bqk,bkd->bqd"}> : () -> ()
    %cst_34 = arith.constant dense<0.000000e+00> : vector<8x8x8xf32>
    %111 = tpu.matmul %109, %110, %cst_34 {dimension_numbers = #tpu.dot_dimension_numbers<[2], [1], [1], [2], [0, 0, 0, 1, 1, 2], [0], [0]>} : vector<8x8x8xbf16>, vector<8x8x8xbf16>, vector<8x8x8xf32> -> vector<8x8x8xf32>
    "tpu.trace_stop"() : () -> ()
    %c0_35 = arith.constant 0 : index
    %c0_36 = arith.constant 0 : index
    %c0_37 = arith.constant 0 : index
    %c0_38 = arith.constant 0 : index
    %112 = vector.load %arg6[%c0_35, %c0_36, %c0_37, %c0_38] : memref<2x4x8x32xbf16, #tpu.memory_space<vmem>>, vector<1x4x8x32xbf16>
    %113 = vector.shape_cast %112 : vector<1x4x8x32xbf16> to vector<4x8x32xbf16>
    %114 = vector.shape_cast %113 : vector<4x8x32xbf16> to vector<1x4x8x32xbf16>
    %115 = vector.shape_cast %114 : vector<1x4x8x32xbf16> to vector<1x4x8x32xbf16>
    %116 = vector.broadcast %115 : vector<1x4x8x32xbf16> to vector<2x4x8x32xbf16>
    %117 = vector.shape_cast %116 : vector<2x4x8x32xbf16> to vector<8x8x32xbf16>
    %118 = arith.truncf %111 : vector<8x8x8xf32> to vector<8x8x8xbf16>
    "tpu.trace_start"() <{level = 10 : i32, message = "bnd,bde->bne"}> : () -> ()
    %cst_39 = arith.constant dense<0.000000e+00> : vector<8x8x32xf32>
    %119 = tpu.matmul %118, %117, %cst_39 {dimension_numbers = #tpu.dot_dimension_numbers<[2], [1], [1], [2], [0, 0, 0, 1, 1, 2], [0], [0]>} : vector<8x8x8xbf16>, vector<8x8x32xbf16>, vector<8x8x32xf32> -> vector<8x8x32xf32>
    "tpu.trace_stop"() : () -> ()
    %120 = vector.shape_cast %119 : vector<8x8x32xf32> to vector<2x4x8x32xf32>
    %cst_40 = arith.constant dense<0.000000e+00> : vector<2x8x32xf32>
    %121 = vector.multi_reduction <add>, %120, %cst_40 [1] : vector<2x4x8x32xf32> to vector<2x8x32xf32>
    %122 = vector.shape_cast %121 : vector<2x8x32xf32> to vector<16x32xf32>
    %123 = vector.extract_strided_slice %40 {offsets = [0, 0], sizes = [1, 32], strides = [1, 1]} : vector<6x32xf32> to vector<1x32xf32>
    %124 = vector.broadcast %123 : vector<1x32xf32> to vector<16x32xf32>
    %125 = arith.addf %122, %124 : vector<16x32xf32>
    %126 = arith.addf %38, %125 : vector<16x32xf32>
    %127 = vector.extract_strided_slice %40 {offsets = [1, 0], sizes = [1, 32], strides = [1, 1]} : vector<6x32xf32> to vector<1x32xf32>
    %128 = vector.extract_strided_slice %40 {offsets = [2, 0], sizes = [1, 32], strides = [1, 1]} : vector<6x32xf32> to vector<1x32xf32>
    %cst_41 = arith.constant dense<0.000000e+00> : vector<16xf32>
    %129 = vector.multi_reduction <add>, %126, %cst_41 [1] : vector<16x32xf32> to vector<16xf32>
    %130 = vector.shape_cast %129 : vector<16xf32> to vector<16x1xf32>
    %cst_42 = arith.constant 3.200000e+01 : f32
    %131 = vector.broadcast %cst_42 : f32 to vector<16x1xf32>
    %132 = arith.divf %130, %131 : vector<16x1xf32>
    %133 = vector.broadcast %132 : vector<16x1xf32> to vector<16x32xf32>
    %134 = arith.subf %126, %133 : vector<16x32xf32>
    %135 = vector.broadcast %132 : vector<16x1xf32> to vector<16x32xf32>
    %136 = arith.subf %126, %135 : vector<16x32xf32>
    %137 = arith.mulf %134, %136 : vector<16x32xf32>
    %cst_43 = arith.constant dense<0.000000e+00> : vector<16xf32>
    %138 = vector.multi_reduction <add>, %137, %cst_43 [1] : vector<16x32xf32> to vector<16xf32>
    %139 = vector.shape_cast %138 : vector<16xf32> to vector<16x1xf32>
    %cst_44 = arith.constant 3.200000e+01 : f32
    %140 = vector.broadcast %cst_44 : f32 to vector<16x1xf32>
    %141 = arith.divf %139, %140 : vector<16x1xf32>
    %142 = vector.broadcast %132 : vector<16x1xf32> to vector<16x32xf32>
    %143 = arith.subf %126, %142 : vector<16x32xf32>
    %cst_45 = arith.constant 9.99999996E-13 : f32
    %144 = vector.broadcast %cst_45 : f32 to vector<16x1xf32>
    %145 = arith.addf %141, %144 : vector<16x1xf32>
    %146 = math.rsqrt %145 : vector<16x1xf32>
    %147 = vector.broadcast %146 : vector<16x1xf32> to vector<16x32xf32>
    %148 = arith.mulf %143, %147 : vector<16x32xf32>
    %149 = vector.broadcast %127 : vector<1x32xf32> to vector<16x32xf32>
    %150 = arith.mulf %148, %149 : vector<16x32xf32>
    %151 = vector.broadcast %128 : vector<1x32xf32> to vector<16x32xf32>
    %152 = arith.addf %150, %151 : vector<16x32xf32>
    %153 = arith.truncf %152 : vector<16x32xf32> to vector<16x32xbf16>
    %c0_46 = arith.constant 0 : index
    %c0_47 = arith.constant 0 : index
    %c0_48 = arith.constant 0 : index
    %154 = vector.load %arg8[%c0_46, %c0_47, %c0_48] : memref<2x32x128xbf16, #tpu.memory_space<vmem>>, vector<1x32x128xbf16>
    %155 = vector.shape_cast %154 : vector<1x32x128xbf16> to vector<32x128xbf16>
    %cst_49 = arith.constant dense<0.000000e+00> : vector<16x128xf32>
    %156 = tpu.matmul %153, %155, %cst_49 {dimension_numbers = #tpu.dot_dimension_numbers<[1], [0], [0], [1], [0, 0, 1, 1], [], []>} : vector<16x32xbf16>, vector<32x128xbf16>, vector<16x128xf32> -> vector<16x128xf32>
    %c0_50 = arith.constant 0 : index
    %c0_51 = arith.constant 0 : index
    %c0_52 = arith.constant 0 : index
    %157 = vector.load %arg9[%c0_50, %c0_51, %c0_52] : memref<2x1x128xf32, #tpu.memory_space<vmem>>, vector<1x1x128xf32>
    %158 = vector.shape_cast %157 : vector<1x1x128xf32> to vector<1x128xf32>
    %159 = vector.broadcast %158 : vector<1x128xf32> to vector<16x128xf32>
    %160 = arith.addf %156, %159 : vector<16x128xf32>
    %161 = arith.mulf %160, %160 : vector<16x128xf32>
    %162 = arith.mulf %160, %161 : vector<16x128xf32>
    %cst_53 = arith.constant 4.471500e-02 : f32
    %163 = vector.broadcast %cst_53 : f32 to vector<16x128xf32>
    %164 = arith.mulf %163, %162 : vector<16x128xf32>
    %165 = arith.addf %160, %164 : vector<16x128xf32>
    %cst_54 = arith.constant 0.797884583 : f32
    %166 = vector.broadcast %cst_54 : f32 to vector<16x128xf32>
    %167 = arith.mulf %166, %165 : vector<16x128xf32>
    %168 = math.tanh %167 : vector<16x128xf32>
    %cst_55 = arith.constant 1.000000e+00 : f32
    %169 = vector.broadcast %cst_55 : f32 to vector<16x128xf32>
    %170 = arith.addf %169, %168 : vector<16x128xf32>
    %cst_56 = arith.constant 5.000000e-01 : f32
    %171 = vector.broadcast %cst_56 : f32 to vector<16x128xf32>
    %172 = arith.mulf %171, %170 : vector<16x128xf32>
    %173 = arith.mulf %160, %172 : vector<16x128xf32>
    %174 = arith.truncf %173 : vector<16x128xf32> to vector<16x128xbf16>
    %c0_57 = arith.constant 0 : index
    %c0_58 = arith.constant 0 : index
    %c0_59 = arith.constant 0 : index
    %175 = vector.load %arg10[%c0_57, %c0_58, %c0_59] : memref<2x128x32xbf16, #tpu.memory_space<vmem>>, vector<1x128x32xbf16>
    %176 = vector.shape_cast %175 : vector<1x128x32xbf16> to vector<128x32xbf16>
    %cst_60 = arith.constant dense<0.000000e+00> : vector<16x32xf32>
    %177 = tpu.matmul %174, %176, %cst_60 {dimension_numbers = #tpu.dot_dimension_numbers<[1], [0], [0], [1], [0, 0, 1, 1], [], []>} : vector<16x128xbf16>, vector<128x32xbf16>, vector<16x32xf32> -> vector<16x32xf32>
    %178 = vector.extract_strided_slice %40 {offsets = [3, 0], sizes = [1, 32], strides = [1, 1]} : vector<6x32xf32> to vector<1x32xf32>
    %179 = vector.broadcast %178 : vector<1x32xf32> to vector<16x32xf32>
    %180 = arith.addf %177, %179 : vector<16x32xf32>
    %181 = arith.addf %152, %180 : vector<16x32xf32>
    %182 = vector.extract_strided_slice %40 {offsets = [4, 0], sizes = [1, 32], strides = [1, 1]} : vector<6x32xf32> to vector<1x32xf32>
    %183 = vector.extract_strided_slice %40 {offsets = [5, 0], sizes = [1, 32], strides = [1, 1]} : vector<6x32xf32> to vector<1x32xf32>
    %cst_61 = arith.constant dense<0.000000e+00> : vector<16xf32>
    %184 = vector.multi_reduction <add>, %181, %cst_61 [1] : vector<16x32xf32> to vector<16xf32>
    %185 = vector.shape_cast %184 : vector<16xf32> to vector<16x1xf32>
    %cst_62 = arith.constant 3.200000e+01 : f32
    %186 = vector.broadcast %cst_62 : f32 to vector<16x1xf32>
    %187 = arith.divf %185, %186 : vector<16x1xf32>
    %188 = vector.broadcast %187 : vector<16x1xf32> to vector<16x32xf32>
    %189 = arith.subf %181, %188 : vector<16x32xf32>
    %190 = vector.broadcast %187 : vector<16x1xf32> to vector<16x32xf32>
    %191 = arith.subf %181, %190 : vector<16x32xf32>
    %192 = arith.mulf %189, %191 : vector<16x32xf32>
    %cst_63 = arith.constant dense<0.000000e+00> : vector<16xf32>
    %193 = vector.multi_reduction <add>, %192, %cst_63 [1] : vector<16x32xf32> to vector<16xf32>
    %194 = vector.shape_cast %193 : vector<16xf32> to vector<16x1xf32>
    %cst_64 = arith.constant 3.200000e+01 : f32
    %195 = vector.broadcast %cst_64 : f32 to vector<16x1xf32>
    %196 = arith.divf %194, %195 : vector<16x1xf32>
    %197 = vector.broadcast %187 : vector<16x1xf32> to vector<16x32xf32>
    %198 = arith.subf %181, %197 : vector<16x32xf32>
    %cst_65 = arith.constant 9.99999996E-13 : f32
    %199 = vector.broadcast %cst_65 : f32 to vector<16x1xf32>
    %200 = arith.addf %196, %199 : vector<16x1xf32>
    %201 = math.rsqrt %200 : vector<16x1xf32>
    %202 = vector.broadcast %201 : vector<16x1xf32> to vector<16x32xf32>
    %203 = arith.mulf %198, %202 : vector<16x32xf32>
    %204 = vector.broadcast %182 : vector<1x32xf32> to vector<16x32xf32>
    %205 = arith.mulf %203, %204 : vector<16x32xf32>
    %206 = vector.broadcast %183 : vector<1x32xf32> to vector<16x32xf32>
    %207 = arith.addf %205, %206 : vector<16x32xf32>
    %c1 = arith.constant 1 : index
    %c0_66 = arith.constant 0 : index
    %c0_67 = arith.constant 0 : index
    %208 = vector.load %arg7[%c1, %c0_66, %c0_67] : memref<2x6x32xf32, #tpu.memory_space<vmem>>, vector<1x6x32xf32>
    %209 = vector.shape_cast %208 : vector<1x6x32xf32> to vector<6x32xf32>
    %c1_68 = arith.constant 1 : index
    %c0_69 = arith.constant 0 : index
    %c0_70 = arith.constant 0 : index
    %c0_71 = arith.constant 0 : index
    %c0_72 = arith.constant 0 : index
    %210 = vector.load %arg4[%c1_68, %c0_69, %c0_70, %c0_71, %c0_72] : memref<2x3x4x32x8xbf16, #tpu.memory_space<vmem>>, vector<1x3x4x32x8xbf16>
    %211 = vector.shape_cast %210 : vector<1x3x4x32x8xbf16> to vector<3x4x32x8xbf16>
    %c1_73 = arith.constant 1 : index
    %c0_74 = arith.constant 0 : index
    %c0_75 = arith.constant 0 : index
    %c0_76 = arith.constant 0 : index
    %c0_77 = arith.constant 0 : index
    %212 = vector.load %arg5[%c1_73, %c0_74, %c0_75, %c0_76, %c0_77] : memref<2x3x4x1x8xf32, #tpu.memory_space<vmem>>, vector<1x3x4x1x8xf32>
    %213 = vector.shape_cast %212 : vector<1x3x4x1x8xf32> to vector<3x4x1x8xf32>
    %214 = arith.truncf %207 : vector<16x32xf32> to vector<16x32xbf16>
    %215 = vector.shape_cast %214 : vector<16x32xbf16> to vector<2x1x8x32xbf16>
    %216 = vector.shape_cast %215 : vector<2x1x8x32xbf16> to vector<2x1x8x32xbf16>
    %217 = vector.broadcast %216 : vector<2x1x8x32xbf16> to vector<2x4x8x32xbf16>
    %218 = vector.shape_cast %217 : vector<2x4x8x32xbf16> to vector<8x8x32xbf16>
    %219 = vector.extract_strided_slice %211 {offsets = [0, 0, 0, 0], sizes = [1, 4, 32, 8], strides = [1, 1, 1, 1]} : vector<3x4x32x8xbf16> to vector<1x4x32x8xbf16>
    %220 = vector.shape_cast %219 : vector<1x4x32x8xbf16> to vector<4x32x8xbf16>
    %221 = vector.shape_cast %220 : vector<4x32x8xbf16> to vector<1x4x32x8xbf16>
    %222 = vector.shape_cast %221 : vector<1x4x32x8xbf16> to vector<1x4x32x8xbf16>
    %223 = vector.broadcast %222 : vector<1x4x32x8xbf16> to vector<2x4x32x8xbf16>
    %224 = vector.shape_cast %223 : vector<2x4x32x8xbf16> to vector<8x32x8xbf16>
    %225 = vector.extract_strided_slice %213 {offsets = [0, 0, 0, 0], sizes = [1, 4, 1, 8], strides = [1, 1, 1, 1]} : vector<3x4x1x8xf32> to vector<1x4x1x8xf32>
    %226 = vector.shape_cast %225 : vector<1x4x1x8xf32> to vector<4x1x8xf32>
    %227 = vector.shape_cast %226 : vector<4x1x8xf32> to vector<1x4x1x8xf32>
    %228 = vector.shape_cast %227 : vector<1x4x1x8xf32> to vector<1x4x1x8xf32>
    %229 = vector.broadcast %228 : vector<1x4x1x8xf32> to vector<2x4x1x8xf32>
    %230 = vector.shape_cast %229 : vector<2x4x1x8xf32> to vector<8x1x8xf32>
    "tpu.trace_start"() <{level = 10 : i32, message = "bnd,bde->bne"}> : () -> ()
    %cst_78 = arith.constant dense<0.000000e+00> : vector<8x8x8xf32>
    %231 = tpu.matmul %218, %224, %cst_78 {dimension_numbers = #tpu.dot_dimension_numbers<[2], [1], [1], [2], [0, 0, 0, 1, 1, 2], [0], [0]>} : vector<8x8x32xbf16>, vector<8x32x8xbf16>, vector<8x8x8xf32> -> vector<8x8x8xf32>
    "tpu.trace_stop"() : () -> ()
    %232 = vector.broadcast %230 : vector<8x1x8xf32> to vector<8x8x8xf32>
    %233 = arith.addf %231, %232 : vector<8x8x8xf32>
    %234 = vector.extract_strided_slice %211 {offsets = [1, 0, 0, 0], sizes = [1, 4, 32, 8], strides = [1, 1, 1, 1]} : vector<3x4x32x8xbf16> to vector<1x4x32x8xbf16>
    %235 = vector.shape_cast %234 : vector<1x4x32x8xbf16> to vector<4x32x8xbf16>
    %236 = vector.shape_cast %235 : vector<4x32x8xbf16> to vector<1x4x32x8xbf16>
    %237 = vector.shape_cast %236 : vector<1x4x32x8xbf16> to vector<1x4x32x8xbf16>
    %238 = vector.broadcast %237 : vector<1x4x32x8xbf16> to vector<2x4x32x8xbf16>
    %239 = vector.shape_cast %238 : vector<2x4x32x8xbf16> to vector<8x32x8xbf16>
    %240 = vector.extract_strided_slice %213 {offsets = [1, 0, 0, 0], sizes = [1, 4, 1, 8], strides = [1, 1, 1, 1]} : vector<3x4x1x8xf32> to vector<1x4x1x8xf32>
    %241 = vector.shape_cast %240 : vector<1x4x1x8xf32> to vector<4x1x8xf32>
    %242 = vector.shape_cast %241 : vector<4x1x8xf32> to vector<1x4x1x8xf32>
    %243 = vector.shape_cast %242 : vector<1x4x1x8xf32> to vector<1x4x1x8xf32>
    %244 = vector.broadcast %243 : vector<1x4x1x8xf32> to vector<2x4x1x8xf32>
    %245 = vector.shape_cast %244 : vector<2x4x1x8xf32> to vector<8x1x8xf32>
    "tpu.trace_start"() <{level = 10 : i32, message = "bnd,bde->bne"}> : () -> ()
    %cst_79 = arith.constant dense<0.000000e+00> : vector<8x8x8xf32>
    %246 = tpu.matmul %218, %239, %cst_79 {dimension_numbers = #tpu.dot_dimension_numbers<[2], [1], [1], [2], [0, 0, 0, 1, 1, 2], [0], [0]>} : vector<8x8x32xbf16>, vector<8x32x8xbf16>, vector<8x8x8xf32> -> vector<8x8x8xf32>
    "tpu.trace_stop"() : () -> ()
    %247 = vector.broadcast %245 : vector<8x1x8xf32> to vector<8x8x8xf32>
    %248 = arith.addf %246, %247 : vector<8x8x8xf32>
    %249 = vector.extract_strided_slice %211 {offsets = [2, 0, 0, 0], sizes = [1, 4, 32, 8], strides = [1, 1, 1, 1]} : vector<3x4x32x8xbf16> to vector<1x4x32x8xbf16>
    %250 = vector.shape_cast %249 : vector<1x4x32x8xbf16> to vector<4x32x8xbf16>
    %251 = vector.shape_cast %250 : vector<4x32x8xbf16> to vector<1x4x32x8xbf16>
    %252 = vector.shape_cast %251 : vector<1x4x32x8xbf16> to vector<1x4x32x8xbf16>
    %253 = vector.broadcast %252 : vector<1x4x32x8xbf16> to vector<2x4x32x8xbf16>
    %254 = vector.shape_cast %253 : vector<2x4x32x8xbf16> to vector<8x32x8xbf16>
    %255 = vector.extract_strided_slice %213 {offsets = [2, 0, 0, 0], sizes = [1, 4, 1, 8], strides = [1, 1, 1, 1]} : vector<3x4x1x8xf32> to vector<1x4x1x8xf32>
    %256 = vector.shape_cast %255 : vector<1x4x1x8xf32> to vector<4x1x8xf32>
    %257 = vector.shape_cast %256 : vector<4x1x8xf32> to vector<1x4x1x8xf32>
    %258 = vector.shape_cast %257 : vector<1x4x1x8xf32> to vector<1x4x1x8xf32>
    %259 = vector.broadcast %258 : vector<1x4x1x8xf32> to vector<2x4x1x8xf32>
    %260 = vector.shape_cast %259 : vector<2x4x1x8xf32> to vector<8x1x8xf32>
    "tpu.trace_start"() <{level = 10 : i32, message = "bnd,bde->bne"}> : () -> ()
    %cst_80 = arith.constant dense<0.000000e+00> : vector<8x8x8xf32>
    %261 = tpu.matmul %218, %254, %cst_80 {dimension_numbers = #tpu.dot_dimension_numbers<[2], [1], [1], [2], [0, 0, 0, 1, 1, 2], [0], [0]>} : vector<8x8x32xbf16>, vector<8x32x8xbf16>, vector<8x8x8xf32> -> vector<8x8x8xf32>
    "tpu.trace_stop"() : () -> ()
    %262 = vector.broadcast %260 : vector<8x1x8xf32> to vector<8x8x8xf32>
    %263 = arith.addf %261, %262 : vector<8x8x8xf32>
    %264 = arith.truncf %233 : vector<8x8x8xf32> to vector<8x8x8xbf16>
    %265 = arith.truncf %248 : vector<8x8x8xf32> to vector<8x8x8xbf16>
    "tpu.trace_start"() <{level = 10 : i32, message = "bqd,bkd->bqk"}> : () -> ()
    %cst_81 = arith.constant dense<0.000000e+00> : vector<8x8x8xf32>
    %266 = tpu.matmul %264, %265, %cst_81 {dimension_numbers = #tpu.dot_dimension_numbers<[2], [2], [1], [1], [0, 0, 0, 1, 1, 1], [0], [0]>} : vector<8x8x8xbf16>, vector<8x8x8xbf16>, vector<8x8x8xf32> -> vector<8x8x8xf32>
    "tpu.trace_stop"() : () -> ()
    %cst_82 = arith.constant 0.353553385 : f32
    %267 = vector.broadcast %cst_82 : f32 to vector<8x8x8xf32>
    %268 = arith.mulf %266, %267 : vector<8x8x8xf32>
    %cst_83 = arith.constant dense<0xFF800000> : vector<8x8xf32>
    %269 = vector.multi_reduction <maximumf>, %268, %cst_83 [2] : vector<8x8x8xf32> to vector<8x8xf32>
    %270 = vector.shape_cast %269 : vector<8x8xf32> to vector<8x8x1xf32>
    %271 = vector.broadcast %270 : vector<8x8x1xf32> to vector<8x8x8xf32>
    %272 = arith.subf %268, %271 : vector<8x8x8xf32>
    %273 = math.exp %272 : vector<8x8x8xf32>
    %cst_84 = arith.constant dense<0.000000e+00> : vector<8x8xf32>
    %274 = vector.multi_reduction <add>, %273, %cst_84 [2] : vector<8x8x8xf32> to vector<8x8xf32>
    %275 = vector.shape_cast %274 : vector<8x8xf32> to vector<8x8x1xf32>
    %276 = vector.broadcast %275 : vector<8x8x1xf32> to vector<8x8x8xf32>
    %277 = arith.divf %273, %276 : vector<8x8x8xf32>
    %278 = arith.truncf %277 : vector<8x8x8xf32> to vector<8x8x8xbf16>
    %279 = arith.truncf %263 : vector<8x8x8xf32> to vector<8x8x8xbf16>
    "tpu.trace_start"() <{level = 10 : i32, message = "bqk,bkd->bqd"}> : () -> ()
    %cst_85 = arith.constant dense<0.000000e+00> : vector<8x8x8xf32>
    %280 = tpu.matmul %278, %279, %cst_85 {dimension_numbers = #tpu.dot_dimension_numbers<[2], [1], [1], [2], [0, 0, 0, 1, 1, 2], [0], [0]>} : vector<8x8x8xbf16>, vector<8x8x8xbf16>, vector<8x8x8xf32> -> vector<8x8x8xf32>
    "tpu.trace_stop"() : () -> ()
    %c1_86 = arith.constant 1 : index
    %c0_87 = arith.constant 0 : index
    %c0_88 = arith.constant 0 : index
    %c0_89 = arith.constant 0 : index
    %281 = vector.load %arg6[%c1_86, %c0_87, %c0_88, %c0_89] : memref<2x4x8x32xbf16, #tpu.memory_space<vmem>>, vector<1x4x8x32xbf16>
    %282 = vector.shape_cast %281 : vector<1x4x8x32xbf16> to vector<4x8x32xbf16>
    %283 = vector.shape_cast %282 : vector<4x8x32xbf16> to vector<1x4x8x32xbf16>
    %284 = vector.shape_cast %283 : vector<1x4x8x32xbf16> to vector<1x4x8x32xbf16>
    %285 = vector.broadcast %284 : vector<1x4x8x32xbf16> to vector<2x4x8x32xbf16>
    %286 = vector.shape_cast %285 : vector<2x4x8x32xbf16> to vector<8x8x32xbf16>
    %287 = arith.truncf %280 : vector<8x8x8xf32> to vector<8x8x8xbf16>
    "tpu.trace_start"() <{level = 10 : i32, message = "bnd,bde->bne"}> : () -> ()
    %cst_90 = arith.constant dense<0.000000e+00> : vector<8x8x32xf32>
    %288 = tpu.matmul %287, %286, %cst_90 {dimension_numbers = #tpu.dot_dimension_numbers<[2], [1], [1], [2], [0, 0, 0, 1, 1, 2], [0], [0]>} : vector<8x8x8xbf16>, vector<8x8x32xbf16>, vector<8x8x32xf32> -> vector<8x8x32xf32>
    "tpu.trace_stop"() : () -> ()
    %289 = vector.shape_cast %288 : vector<8x8x32xf32> to vector<2x4x8x32xf32>
    %cst_91 = arith.constant dense<0.000000e+00> : vector<2x8x32xf32>
    %290 = vector.multi_reduction <add>, %289, %cst_91 [1] : vector<2x4x8x32xf32> to vector<2x8x32xf32>
    %291 = vector.shape_cast %290 : vector<2x8x32xf32> to vector<16x32xf32>
    %292 = vector.extract_strided_slice %209 {offsets = [0, 0], sizes = [1, 32], strides = [1, 1]} : vector<6x32xf32> to vector<1x32xf32>
    %293 = vector.broadcast %292 : vector<1x32xf32> to vector<16x32xf32>
    %294 = arith.addf %291, %293 : vector<16x32xf32>
    %295 = arith.addf %207, %294 : vector<16x32xf32>
    %296 = vector.extract_strided_slice %209 {offsets = [1, 0], sizes = [1, 32], strides = [1, 1]} : vector<6x32xf32> to vector<1x32xf32>
    %297 = vector.extract_strided_slice %209 {offsets = [2, 0], sizes = [1, 32], strides = [1, 1]} : vector<6x32xf32> to vector<1x32xf32>
    %cst_92 = arith.constant dense<0.000000e+00> : vector<16xf32>
    %298 = vector.multi_reduction <add>, %295, %cst_92 [1] : vector<16x32xf32> to vector<16xf32>
    %299 = vector.shape_cast %298 : vector<16xf32> to vector<16x1xf32>
    %cst_93 = arith.constant 3.200000e+01 : f32
    %300 = vector.broadcast %cst_93 : f32 to vector<16x1xf32>
    %301 = arith.divf %299, %300 : vector<16x1xf32>
    %302 = vector.broadcast %301 : vector<16x1xf32> to vector<16x32xf32>
    %303 = arith.subf %295, %302 : vector<16x32xf32>
    %304 = vector.broadcast %301 : vector<16x1xf32> to vector<16x32xf32>
    %305 = arith.subf %295, %304 : vector<16x32xf32>
    %306 = arith.mulf %303, %305 : vector<16x32xf32>
    %cst_94 = arith.constant dense<0.000000e+00> : vector<16xf32>
    %307 = vector.multi_reduction <add>, %306, %cst_94 [1] : vector<16x32xf32> to vector<16xf32>
    %308 = vector.shape_cast %307 : vector<16xf32> to vector<16x1xf32>
    %cst_95 = arith.constant 3.200000e+01 : f32
    %309 = vector.broadcast %cst_95 : f32 to vector<16x1xf32>
    %310 = arith.divf %308, %309 : vector<16x1xf32>
    %311 = vector.broadcast %301 : vector<16x1xf32> to vector<16x32xf32>
    %312 = arith.subf %295, %311 : vector<16x32xf32>
    %cst_96 = arith.constant 9.99999996E-13 : f32
    %313 = vector.broadcast %cst_96 : f32 to vector<16x1xf32>
    %314 = arith.addf %310, %313 : vector<16x1xf32>
    %315 = math.rsqrt %314 : vector<16x1xf32>
    %316 = vector.broadcast %315 : vector<16x1xf32> to vector<16x32xf32>
    %317 = arith.mulf %312, %316 : vector<16x32xf32>
    %318 = vector.broadcast %296 : vector<1x32xf32> to vector<16x32xf32>
    %319 = arith.mulf %317, %318 : vector<16x32xf32>
    %320 = vector.broadcast %297 : vector<1x32xf32> to vector<16x32xf32>
    %321 = arith.addf %319, %320 : vector<16x32xf32>
    %322 = arith.truncf %321 : vector<16x32xf32> to vector<16x32xbf16>
    %c1_97 = arith.constant 1 : index
    %c0_98 = arith.constant 0 : index
    %c0_99 = arith.constant 0 : index
    %323 = vector.load %arg8[%c1_97, %c0_98, %c0_99] : memref<2x32x128xbf16, #tpu.memory_space<vmem>>, vector<1x32x128xbf16>
    %324 = vector.shape_cast %323 : vector<1x32x128xbf16> to vector<32x128xbf16>
    %cst_100 = arith.constant dense<0.000000e+00> : vector<16x128xf32>
    %325 = tpu.matmul %322, %324, %cst_100 {dimension_numbers = #tpu.dot_dimension_numbers<[1], [0], [0], [1], [0, 0, 1, 1], [], []>} : vector<16x32xbf16>, vector<32x128xbf16>, vector<16x128xf32> -> vector<16x128xf32>
    %c1_101 = arith.constant 1 : index
    %c0_102 = arith.constant 0 : index
    %c0_103 = arith.constant 0 : index
    %326 = vector.load %arg9[%c1_101, %c0_102, %c0_103] : memref<2x1x128xf32, #tpu.memory_space<vmem>>, vector<1x1x128xf32>
    %327 = vector.shape_cast %326 : vector<1x1x128xf32> to vector<1x128xf32>
    %328 = vector.broadcast %327 : vector<1x128xf32> to vector<16x128xf32>
    %329 = arith.addf %325, %328 : vector<16x128xf32>
    %330 = arith.mulf %329, %329 : vector<16x128xf32>
    %331 = arith.mulf %329, %330 : vector<16x128xf32>
    %cst_104 = arith.constant 4.471500e-02 : f32
    %332 = vector.broadcast %cst_104 : f32 to vector<16x128xf32>
    %333 = arith.mulf %332, %331 : vector<16x128xf32>
    %334 = arith.addf %329, %333 : vector<16x128xf32>
    %cst_105 = arith.constant 0.797884583 : f32
    %335 = vector.broadcast %cst_105 : f32 to vector<16x128xf32>
    %336 = arith.mulf %335, %334 : vector<16x128xf32>
    %337 = math.tanh %336 : vector<16x128xf32>
    %cst_106 = arith.constant 1.000000e+00 : f32
    %338 = vector.broadcast %cst_106 : f32 to vector<16x128xf32>
    %339 = arith.addf %338, %337 : vector<16x128xf32>
    %cst_107 = arith.constant 5.000000e-01 : f32
    %340 = vector.broadcast %cst_107 : f32 to vector<16x128xf32>
    %341 = arith.mulf %340, %339 : vector<16x128xf32>
    %342 = arith.mulf %329, %341 : vector<16x128xf32>
    %343 = arith.truncf %342 : vector<16x128xf32> to vector<16x128xbf16>
    %c1_108 = arith.constant 1 : index
    %c0_109 = arith.constant 0 : index
    %c0_110 = arith.constant 0 : index
    %344 = vector.load %arg10[%c1_108, %c0_109, %c0_110] : memref<2x128x32xbf16, #tpu.memory_space<vmem>>, vector<1x128x32xbf16>
    %345 = vector.shape_cast %344 : vector<1x128x32xbf16> to vector<128x32xbf16>
    %cst_111 = arith.constant dense<0.000000e+00> : vector<16x32xf32>
    %346 = tpu.matmul %343, %345, %cst_111 {dimension_numbers = #tpu.dot_dimension_numbers<[1], [0], [0], [1], [0, 0, 1, 1], [], []>} : vector<16x128xbf16>, vector<128x32xbf16>, vector<16x32xf32> -> vector<16x32xf32>
    %347 = vector.extract_strided_slice %209 {offsets = [3, 0], sizes = [1, 32], strides = [1, 1]} : vector<6x32xf32> to vector<1x32xf32>
    %348 = vector.broadcast %347 : vector<1x32xf32> to vector<16x32xf32>
    %349 = arith.addf %346, %348 : vector<16x32xf32>
    %350 = arith.addf %321, %349 : vector<16x32xf32>
    %351 = vector.extract_strided_slice %209 {offsets = [4, 0], sizes = [1, 32], strides = [1, 1]} : vector<6x32xf32> to vector<1x32xf32>
    %352 = vector.extract_strided_slice %209 {offsets = [5, 0], sizes = [1, 32], strides = [1, 1]} : vector<6x32xf32> to vector<1x32xf32>
    %cst_112 = arith.constant dense<0.000000e+00> : vector<16xf32>
    %353 = vector.multi_reduction <add>, %350, %cst_112 [1] : vector<16x32xf32> to vector<16xf32>
    %354 = vector.shape_cast %353 : vector<16xf32> to vector<16x1xf32>
    %cst_113 = arith.constant 3.200000e+01 : f32
    %355 = vector.broadcast %cst_113 : f32 to vector<16x1xf32>
    %356 = arith.divf %354, %355 : vector<16x1xf32>
    %357 = vector.broadcast %356 : vector<16x1xf32> to vector<16x32xf32>
    %358 = arith.subf %350, %357 : vector<16x32xf32>
    %359 = vector.broadcast %356 : vector<16x1xf32> to vector<16x32xf32>
    %360 = arith.subf %350, %359 : vector<16x32xf32>
    %361 = arith.mulf %358, %360 : vector<16x32xf32>
    %cst_114 = arith.constant dense<0.000000e+00> : vector<16xf32>
    %362 = vector.multi_reduction <add>, %361, %cst_114 [1] : vector<16x32xf32> to vector<16xf32>
    %363 = vector.shape_cast %362 : vector<16xf32> to vector<16x1xf32>
    %cst_115 = arith.constant 3.200000e+01 : f32
    %364 = vector.broadcast %cst_115 : f32 to vector<16x1xf32>
    %365 = arith.divf %363, %364 : vector<16x1xf32>
    %366 = vector.broadcast %356 : vector<16x1xf32> to vector<16x32xf32>
    %367 = arith.subf %350, %366 : vector<16x32xf32>
    %cst_116 = arith.constant 9.99999996E-13 : f32
    %368 = vector.broadcast %cst_116 : f32 to vector<16x1xf32>
    %369 = arith.addf %365, %368 : vector<16x1xf32>
    %370 = math.rsqrt %369 : vector<16x1xf32>
    %371 = vector.broadcast %370 : vector<16x1xf32> to vector<16x32xf32>
    %372 = arith.mulf %367, %371 : vector<16x32xf32>
    %373 = vector.broadcast %351 : vector<1x32xf32> to vector<16x32xf32>
    %374 = arith.mulf %372, %373 : vector<16x32xf32>
    %375 = vector.broadcast %352 : vector<1x32xf32> to vector<16x32xf32>
    %376 = arith.addf %374, %375 : vector<16x32xf32>
    %377 = vector.shape_cast %376 : vector<16x32xf32> to vector<2x8x32xf32>
    %c0_117 = arith.constant 0 : index
    %c0_118 = arith.constant 0 : index
    %c0_119 = arith.constant 0 : index
    %378 = vector.load %arg11[%c0_117, %c0_118, %c0_119] : memref<2x8x32xf32, #tpu.memory_space<vmem>>, vector<2x8x32xf32>
    tpu.vector_store %arg11[%c0_117, %c0_118, %c0_119], %377 {strides = array<i32>} : memref<2x8x32xf32, #tpu.memory_space<vmem>>, vector<2x8x32xf32>,
    return
  }
}

</mosaic_0001>

<llo_original>
// kernel: conditioner_forward.1
$region0: #{conditioner_forward.1}
  #allocation0 [shape = 'u32[]', space=smem, size = 0x4, offset = 0x4, fixed_abs, tag = 'smem constant byte address 0x4 - core index']
  #allocation1 [shape = 'u32[144,128]{1,0:T(1,128)}', space=vmem, size = 0x12000, scoped, tag = 'internal scratch']
  %s0 = inlined_call_operand.vmem [shape: s32[16,1], index: 0, kind: input, shape index: {}]
  %s1 = inlined_call_operand.vmem [shape: bf16[64,32], index: 1, kind: input, shape index: {}]
  %s2 = inlined_call_operand.vmem [shape: f32[16,32], index: 2, kind: input, shape index: {}]
  %s3 = inlined_call_operand.vmem [shape: f32[2,32], index: 3, kind: input, shape index: {}]
  %s4 = inlined_call_operand.vmem [shape: bf16[2,3,4,32,8], index: 4, kind: input, shape index: {}]
  %s5 = inlined_call_operand.vmem [shape: f32[2,3,4,1,8], index: 5, kind: input, shape index: {}]
  %s6 = inlined_call_operand.vmem [shape: bf16[2,4,8,32], index: 6, kind: input, shape index: {}]
  %s7 = inlined_call_operand.vmem [shape: f32[2,6,32], index: 7, kind: input, shape index: {}]
  %s8 = inlined_call_operand.vmem [shape: bf16[2,32,128], index: 8, kind: input, shape index: {}]
  %s9 = inlined_call_operand.vmem [shape: f32[2,1,128], index: 9, kind: input, shape index: {}]
  %s10 = inlined_call_operand.vmem [shape: bf16[2,128,32], index: 10, kind: input, shape index: {}]
  %s11 = inlined_call_operand.hbm [shape: f32[2,8,32], index: 11, kind: output, shape index: {}]
  %s12 = sld [smem:[#allocation0]]
  $region54: #{conditioner_forward.1} parent=0
    _
  %s14 = ssub.s32 1, %s12
  %s15 = scalar_select 0, %s14, %s12
  $region1: #{conditioner_forward.1} parent=0
    #allocation2 [shape = 'u8[8192]{0}', space=vmem, size = 0x2000, scoped, tag = 'output window, operand 0, single buffered']
    #allocation3 [shape = 's32[1]{0}', space=sflag, size = 0x4, scoped, tag = 'scoped memory for conditioner_forward.1']
    %16 = vsyncpa [#allocation3], 0
    // Predicated region
    $region2: #{conditioner_forward.1} parent=1 // pred_check
      _
    $region3: #{conditioner_forward.1} parent=1 // pred_check_branch
      %18 = sbr.rel (0) target = $region5
    $region4: #{conditioner_forward.1} parent=1 // pred_region
      _
    $region5: #{conditioner_forward.1} parent=1 // pred_fallthru
      _
    // Predicated region
    $region6: #{conditioner_forward.1} parent=1 // pred_check
      _
    $region7: #{conditioner_forward.1} parent=1 // pred_check_branch
      %20 = sbr.rel (0) target = $region9
    $region8: #{conditioner_forward.1} parent=1 // pred_region
      _
    $region9: #{conditioner_forward.1} parent=1 // pred_fallthru
      _
    // Predicated region
    $region10: #{conditioner_forward.1} parent=1 // pred_check
      _
    $region11: #{conditioner_forward.1} parent=1 // pred_check_branch
      %22 = sbr.rel (0) target = $region13
    $region12: #{conditioner_forward.1} parent=1 // pred_region
      _
    $region13: #{conditioner_forward.1} parent=1 // pred_fallthru
      _
    // Predicated region
    $region14: #{conditioner_forward.1} parent=1 // pred_check
      _
    $region15: #{conditioner_forward.1} parent=1 // pred_check_branch
      %24 = sbr.rel (0) target = $region17
    $region16: #{conditioner_forward.1} parent=1 // pred_region
      _
    $region17: #{conditioner_forward.1} parent=1 // pred_fallthru
      _
    // Predicated region
    $region18: #{conditioner_forward.1} parent=1 // pred_check
      _
    $region19: #{conditioner_forward.1} parent=1 // pred_check_branch
      %26 = sbr.rel (0) target = $region21
    $region20: #{conditioner_forward.1} parent=1 // pred_region
      _
    $region21: #{conditioner_forward.1} parent=1 // pred_fallthru
      _
    // Predicated region
    $region22: #{conditioner_forward.1} parent=1 // pred_check
      _
    $region23: #{conditioner_forward.1} parent=1 // pred_check_branch
      %28 = sbr.rel (0) target = $region25
    $region24: #{conditioner_forward.1} parent=1 // pred_region
      _
    $region25: #{conditioner_forward.1} parent=1 // pred_fallthru
      _
    // Predicated region
    $region26: #{conditioner_forward.1} parent=1 // pred_check
      _
    $region27: #{conditioner_forward.1} parent=1 // pred_check_branch
      %30 = sbr.rel (0) target = $region29
    $region28: #{conditioner_forward.1} parent=1 // pred_region
      _
    $region29: #{conditioner_forward.1} parent=1 // pred_fallthru
      _
    // Predicated region
    $region30: #{conditioner_forward.1} parent=1 // pred_check
      _
    $region31: #{conditioner_forward.1} parent=1 // pred_check_branch
      %32 = sbr.rel (0) target = $region33
    $region32: #{conditioner_forward.1} parent=1 // pred_region
      _
    $region33: #{conditioner_forward.1} parent=1 // pred_fallthru
      _
    // Predicated region
    $region34: #{conditioner_forward.1} parent=1 // pred_check
      _
    $region35: #{conditioner_forward.1} parent=1 // pred_check_branch
      %34 = sbr.rel (0) target = $region37
    $region36: #{conditioner_forward.1} parent=1 // pred_region
      _
    $region37: #{conditioner_forward.1} parent=1 // pred_fallthru
      _
    // Predicated region
    $region38: #{conditioner_forward.1} parent=1 // pred_check
      _
    $region39: #{conditioner_forward.1} parent=1 // pred_check_branch
      %36 = sbr.rel (0) target = $region41
    $region40: #{conditioner_forward.1} parent=1 // pred_region
      _
    $region41: #{conditioner_forward.1} parent=1 // pred_fallthru
      _
    // Predicated region
    $region42: #{conditioner_forward.1} parent=1 // pred_check
      _
    $region43: #{conditioner_forward.1} parent=1 // pred_check_branch
      %38 = sbr.rel (0) target = $region45
    $region44: #{conditioner_forward.1} parent=1 // pred_region
      _
    $region45: #{conditioner_forward.1} parent=1 // pred_fallthru
      _
    %v40 = vld [vmem:[%s0] sm:$0xff]
    %v41 = vld [vmem:[%s0 + $0x8] sm:$0xff]
    %v42 = vlaneseq
    %v43 = vand.u32 %v42, 127
    %44 = vset.pattern.permute.xlu0 0
    %45 = vperm.xlu0 %44, %v40
    %v46 = vpop.permute.xlu0 %45
    %47 = vset.pattern.permute.xlu0 0
    %48 = vperm.xlu0 %47, %v41
    %v49 = vpop.permute.xlu0 %48
    %vm50 = vcmp.eq.s32.totalorder %v46, %v43
    %vm51 = vcmp.eq.s32.totalorder %v49, %v43
    %v52 = vsel %vm50, 1.0, 0.0
    %v53 = vsel %vm51, 1.0, 0.0
    %v54 = vpack.c.bf16 %v53, %v52
    %v55 = vld [vmem:[%s1] sm:$0xf]
    %v56 = vld [vmem:[%s1 + $0x4] sm:$0xf]
    %v57 = vld [vmem:[%s1 + $0x8] sm:$0xf]
    %v58 = vld [vmem:[%s1 + $0xc] sm:$0xf]
    %v59 = vld [vmem:[%s1 + $0x10] sm:$0xf]
    %v60 = vld [vmem:[%s1 + $0x14] sm:$0xf]
    %v61 = vld [vmem:[%s1 + $0x18] sm:$0xf]
    %v62 = vld [vmem:[%s1 + $0x1c] sm:$0xf]
    %v63 = vld [vmem:[%s2] sm:$0xff]
    %v64 = vld [vmem:[%s2 + $0x8] sm:$0xff]
    %v73 = vunpack.c.l.b16 %v55
    %v74 = vunpack.c.l.b16 %v56
    %v75 = vunpack.c.l.b16 %v57
    %v76 = vunpack.c.l.b16 %v58
    %v77 = vunpack.c.l.b16 %v59
    %v78 = vunpack.c.l.b16 %v60
    %v79 = vunpack.c.l.b16 %v61
    %v80 = vunpack.c.l.b16 %v62
    %v81 = vpack.c.b16 %v74, %v73
    %v82 = vpack.c.b16 %v76, %v75
    %v83 = vpack.c.b16 %v78, %v77
    %v84 = vpack.c.b16 %v80, %v79
    %vm89 = vcmask 523264
    %v91 = vsel %vm89, %v54, 0
    %93 = vmatprep.subr.bf16.mxu0 0
    %94 = vmatpush1.bf16.msra.mxu0 %v81
    %95 = vmatprep.subr.bf16.mxu0 0
    %96 = vmatpush1.bf16.msra.mxu0 %v82
    %97 = vmatprep.subr.bf16.mxu0 0
    %98 = vmatpush1.bf16.msra.mxu0 %v83
    %99 = vmatprep.subr.bf16.mxu0 0
    %100 = vmatpush1.bf16.msra.mxu0 %v84
    %101 = vmatprep.subr.bf16.mxu0 0
    %102 = vmatpush1.bf16.msra.mxu0 0
    %103 = vmatprep.subr.bf16.mxu0 0
    %104 = vmatpush1.bf16.msra.mxu0 0
    %105 = vmatprep.subr.bf16.mxu0 0
    %106 = vmatpush1.bf16.msra.mxu0 0
    %107 = vmatprep.subr.bf16.mxu0 0
    %108 = vmatpush1.bf16.msra.mxu0 0
    %109 = vmatprep.subr.bf16.mxu0 0
    %110 = vmatpush1.bf16.msra.mxu0 0
    %111 = vmatprep.subr.bf16.mxu0 0
    %112 = vmatpush1.bf16.msra.mxu0 0
    %113 = vmatprep.subr.bf16.mxu0 0
    %114 = vmatpush1.bf16.msra.mxu0 0
    %115 = vmatprep.subr.bf16.mxu0 0
    %116 = vmatpush1.bf16.msra.mxu0 0
    %117 = vmatprep.subr.bf16.mxu0 0
    %118 = vmatpush1.bf16.msra.mxu0 0
    %119 = vmatprep.subr.bf16.mxu0 0
    %120 = vmatpush1.bf16.msra.mxu0 0
    %121 = vmatprep.subr.bf16.mxu0 0
    %122 = vmatpush1.bf16.msra.mxu0 0
    %123 = vmatprep.subr.bf16.mxu0 0
    %124 = vmatpush1.bf16.msra.mxu0 0
    %125 = vmatprep.mubr.bf16.mxu0 0
    %126 = vmatmul.mubr.bf16.gmra.mrb[0].mxu0 %v91
    %v127 = vpop.f32.mrb[0].mxu0
    %v128 = vadd.f32 %v63, %v127
    %v129 = vpop.f32.mrb[0].mxu0
    %v130 = vpop.f32.mrb[0].mxu0
    %v131 = vadd.f32 %v64, %v130
    %v132 = vpop.f32.mrb[0].mxu0
    %133 = vdwg.mxu0
    %v134 = vld [vmem:[%s3] sm:$0x3]
    %vm135 = vcmask 261120
    %v136 = vsel %vm135, %v128, 0.0
    %137 = vadd.xlane.f32.xlu0 %v136
    %v138 = vpop.xlane.xlu0 %137
    %v139 = vsel %vm135, %v131, 0.0
    %140 = vadd.xlane.f32.xlu0 %v139
    %v141 = vpop.xlane.xlu0 %140
    %v142 = vrcp.pop 32.0
    %v143 = vmul.f32 %v138, %v142
    %v144 = vmul.f32 %v141, %v142
    %v145 = vsub.f32 %v128, %v143
    %v146 = vsub.f32 %v131, %v144
    %v147 = vmul.f32 %v145, %v145
    %v148 = vmul.f32 %v146, %v146
    %v149 = vsel %vm135, %v147, 0.0
    %150 = vadd.xlane.f32.xlu0 %v149
    %v151 = vpop.xlane.xlu0 %150
    %v152 = vsel %vm135, %v148, 0.0
    %153 = vadd.xlane.f32.xlu0 %v152
    %v154 = vpop.xlane.xlu0 %153
    %v155 = vmul.f32 %v151, %v142
    %v156 = vmul.f32 %v154, %v142
    %v157 = vadd.f32 %v155, 1e-12
    %v158 = vadd.f32 %v156, 1e-12
    %v159 = vrsqrt.pop %v157
    %v160 = vrsqrt.pop %v158
    %v161 = vmul.f32 %v145, %v159
    %v162 = vmul.f32 %v146, %v160
    %v163 = vlaneseq
    %v164 = vshrl.u32 %v163, 7
    %v165 = vsub.s32 0, %v164
    %v166 = vrot.slane %v134, %v165
    %v167 = vmul.f32 %v161, %v166
    %v168 = vmul.f32 %v162, %v166
    %v169 = vlaneseq
    %v170 = vshrl.u32 %v169, 7
    %v171 = vsub.s32 1, %v170
    %v172 = vrot.slane %v134, %v171
    %v173 = vadd.f32 %v167, %v172
    %v174 = vadd.f32 %v168, %v172
    %v175 = vld [vmem:[%s7] sm:$0x3f]
    %v176 = vld [vmem:[%s4] sm:$0xf]
    %v177 = vld [vmem:[%s4 + $0x4] sm:$0xf]
    %v178 = vld [vmem:[%s4 + $0x8] sm:$0xf]
    %v179 = vld [vmem:[%s4 + $0xc] sm:$0xf]
    %v180 = vld [vmem:[%s4 + $0x10] sm:$0xf]
    %v181 = vld [vmem:[%s4 + $0x14] sm:$0xf]
    %v182 = vld [vmem:[%s4 + $0x18] sm:$0xf]
    %v183 = vld [vmem:[%s4 + $0x1c] sm:$0xf]
    %v184 = vld [vmem:[%s4 + $0x20] sm:$0xf]
    %v185 = vld [vmem:[%s4 + $0x24] sm:$0xf]
    %v186 = vld [vmem:[%s4 + $0x28] sm:$0xf]
    %v187 = vld [vmem:[%s4 + $0x2c] sm:$0xf]
    %v188 = vld [vmem:[%s4 + $0x30] sm:$0xf]
    %v189 = vld [vmem:[%s4 + $0x34] sm:$0xf]
    %v190 = vld [vmem:[%s4 + $0x38] sm:$0xf]
    %v191 = vld [vmem:[%s4 + $0x3c] sm:$0xf]
    %v192 = vld [vmem:[%s4 + $0x40] sm:$0xf]
    %v193 = vld [vmem:[%s4 + $0x44] sm:$0xf]
    %v194 = vld [vmem:[%s4 + $0x48] sm:$0xf]
    %v195 = vld [vmem:[%s4 + $0x4c] sm:$0xf]
    %v196 = vld [vmem:[%s4 + $0x50] sm:$0xf]
    %v197 = vld [vmem:[%s4 + $0x54] sm:$0xf]
    %v198 = vld [vmem:[%s4 + $0x58] sm:$0xf]
    %v199 = vld [vmem:[%s4 + $0x5c] sm:$0xf]
    %v200 = vld [vmem:[%s4 + $0x60] sm:$0xf]
    %v201 = vld [vmem:[%s4 + $0x64] sm:$0xf]
    %v202 = vld [vmem:[%s4 + $0x68] sm:$0xf]
    %v203 = vld [vmem:[%s4 + $0x6c] sm:$0xf]
    %v204 = vld [vmem:[%s4 + $0x70] sm:$0xf]
    %v205 = vld [vmem:[%s4 + $0x74] sm:$0xf]
    %v206 = vld [vmem:[%s4 + $0x78] sm:$0xf]
    %v207 = vld [vmem:[%s4 + $0x7c] sm:$0xf]
    %v208 = vld [vmem:[%s4 + $0x80] sm:$0xf]
    %v209 = vld [vmem:[%s4 + $0x84] sm:$0xf]
    %v210 = vld [vmem:[%s4 + $0x88] sm:$0xf]
    %v211 = vld [vmem:[%s4 + $0x8c] sm:$0xf]
    %v212 = vld [vmem:[%s4 + $0x90] sm:$0xf]
    %v213 = vld [vmem:[%s4 + $0x94] sm:$0xf]
    %v214 = vld [vmem:[%s4 + $0x98] sm:$0xf]
    %v215 = vld [vmem:[%s4 + $0x9c] sm:$0xf]
    %v216 = vld [vmem:[%s4 + $0xa0] sm:$0xf]
    %v217 = vld [vmem:[%s4 + $0xa4] sm:$0xf]
    %v218 = vld [vmem:[%s4 + $0xa8] sm:$0xf]
    %v219 = vld [vmem:[%s4 + $0xac] sm:$0xf]
    %v220 = vld [vmem:[%s4 + $0xb0] sm:$0xf]
    %v221 = vld [vmem:[%s4 + $0xb4] sm:$0xf]
    %v222 = vld [vmem:[%s4 + $0xb8] sm:$0xf]
    %v223 = vld [vmem:[%s4 + $0xbc] sm:$0xf]
    %v224 = vld [vmem:[%s5] sm:$0x1]
    %v225 = vld [vmem:[%s5 + $0x1] sm:$0x1]
    %v226 = vld [vmem:[%s5 + $0x2] sm:$0x1]
    %v227 = vld [vmem:[%s5 + $0x3] sm:$0x1]
    %v228 = vld [vmem:[%s5 + $0x4] sm:$0x1]
    %v229 = vld [vmem:[%s5 + $0x5] sm:$0x1]
    %v230 = vld [vmem:[%s5 + $0x6] sm:$0x1]
    %v231 = vld [vmem:[%s5 + $0x7] sm:$0x1]
    %v232 = vld [vmem:[%s5 + $0x8] sm:$0x1]
    %v233 = vld [vmem:[%s5 + $0x9] sm:$0x1]
    %v234 = vld [vmem:[%s5 + $0xa] sm:$0x1]
    %v235 = vld [vmem:[%s5 + $0xb] sm:$0x1]
    %v236 = vpack.c.bf16 %v174, %v173
    %v238 = vunpack.c.l.b16 %v236
    %v239 = vunpack.c.h.b16 %v236
    %v240 = vpack.c.b16 %v238, %v238
    %v241 = vpack.c.b16 %v239, %v239
    %v246 = vlaneseq
    %v247 = vshrl.u32 %v246, 7
    %v248 = vsub.s32 0, %v247
    %v249 = vrot.slane %v224, %v248
    %v250 = vlaneseq
    %v251 = vshrl.u32 %v250, 7
    %v252 = vsub.s32 0, %v251
    %v253 = vrot.slane %v225, %v252
    %v254 = vlaneseq
    %v255 = vshrl.u32 %v254, 7
    %v256 = vsub.s32 0, %v255
    %v257 = vrot.slane %v226, %v256
    %v258 = vlaneseq
    %v259 = vshrl.u32 %v258, 7
    %v260 = vsub.s32 0, %v259
    %v261 = vrot.slane %v227, %v260
    %v270 = vunpack.c.l.b16 %v176
    %v271 = vunpack.c.l.b16 %v177
    %v272 = vunpack.c.l.b16 %v178
    %v273 = vunpack.c.l.b16 %v179
    %v274 = vpack.c.b16 %v271, %v270
    %v275 = vpack.c.b16 %v273, %v272
    %v279 = vsel %vm135, %v240, 0
    %281 = vmatprep.subr.bf16.mxu0 0
    %282 = vmatpush1.bf16.msra.mxu0 %v274
    %283 = vmatprep.subr.bf16.mxu0 0
    %284 = vmatpush1.bf16.msra.mxu0 %v275
    %285 = vmatprep.subr.bf16.mxu0 0
    %286 = vmatpush1.bf16.msra.mxu0 0
    %287 = vmatprep.subr.bf16.mxu0 0
    %288 = vmatpush1.bf16.msra.mxu0 0
    %289 = vmatprep.subr.bf16.mxu0 0
    %290 = vmatpush1.bf16.msra.mxu0 0
    %291 = vmatprep.subr.bf16.mxu0 0
    %292 = vmatpush1.bf16.msra.mxu0 0
    %293 = vmatprep.subr.bf16.mxu0 0
    %294 = vmatpush1.bf16.msra.mxu0 0
    %295 = vmatprep.subr.bf16.mxu0 0
    %296 = vmatpush1.bf16.msra.mxu0 0
    %297 = vmatprep.subr.bf16.mxu0 0
    %298 = vmatpush1.bf16.msra.mxu0 0
    %299 = vmatprep.subr.bf16.mxu0 0
    %300 = vmatpush1.bf16.msra.mxu0 0
    %301 = vmatprep.subr.bf16.mxu0 0
    %302 = vmatpush1.bf16.msra.mxu0 0
    %303 = vmatprep.subr.bf16.mxu0 0
    %304 = vmatpush1.bf16.msra.mxu0 0
    %305 = vmatprep.subr.bf16.mxu0 0
    %306 = vmatpush1.bf16.msra.mxu0 0
    %307 = vmatprep.subr.bf16.mxu0 0
    %308 = vmatpush1.bf16.msra.mxu0 0
    %309 = vmatprep.subr.bf16.mxu0 0
    %310 = vmatpush1.bf16.msra.mxu0 0
    %311 = vmatprep.subr.bf16.mxu0 0
    %312 = vmatpush1.bf16.msra.mxu0 0
    %313 = vmatprep.mubr.bf16.mxu0 0
    %314 = vmatmul.mubr.bf16.gmra.mrb[0].mxu0 %v279
    %v315 = vpop.f32.mrb[0].mxu0
    %v316 = vadd.f32 %v249, %v315
    %v317 = vpop.f32.mrb[0].mxu0
    %v318 = vpop.f32.mrb[0].mxu0
    %v319 = vpop.f32.mrb[0].mxu0
    %320 = vdwg.mxu0
    %v325 = vunpack.c.l.b16 %v180
    %v326 = vunpack.c.l.b16 %v181
    %v327 = vunpack.c.l.b16 %v182
    %v328 = vunpack.c.l.b16 %v183
    %v329 = vpack.c.b16 %v326, %v325
    %v330 = vpack.c.b16 %v328, %v327
    %333 = vmatprep.subr.bf16.mxu0 0
    %334 = vmatpush1.bf16.msra.mxu0 %v329
    %335 = vmatprep.subr.bf16.mxu0 0
    %336 = vmatpush1.bf16.msra.mxu0 %v330
    %337 = vmatprep.subr.bf16.mxu0 0
    %338 = vmatpush1.bf16.msra.mxu0 0
    %339 = vmatprep.subr.bf16.mxu0 0
    %340 = vmatpush1.bf16.msra.mxu0 0
    %341 = vmatprep.subr.bf16.mxu0 0
    %342 = vmatpush1.bf16.msra.mxu0 0
    %343 = vmatprep.subr.bf16.mxu0 0
    %344 = vmatpush1.bf16.msra.mxu0 0
    %345 = vmatprep.subr.bf16.mxu0 0
    %346 = vmatpush1.bf16.msra.mxu0 0
    %347 = vmatprep.subr.bf16.mxu0 0
    %348 = vmatpush1.bf16.msra.mxu0 0
    %349 = vmatprep.subr.bf16.mxu0 0
    %350 = vmatpush1.bf16.msra.mxu0 0
    %351 = vmatprep.subr.bf16.mxu0 0
    %352 = vmatpush1.bf16.msra.mxu0 0
    %353 = vmatprep.subr.bf16.mxu0 0
    %354 = vmatpush1.bf16.msra.mxu0 0
    %355 = vmatprep.subr.bf16.mxu0 0
    %356 = vmatpush1.bf16.msra.mxu0 0
    %357 = vmatprep.subr.bf16.mxu0 0
    %358 = vmatpush1.bf16.msra.mxu0 0
    %359 = vmatprep.subr.bf16.mxu0 0
    %360 = vmatpush1.bf16.msra.mxu0 0
    %361 = vmatprep.subr.bf16.mxu0 0
    %362 = vmatpush1.bf16.msra.mxu0 0
    %363 = vmatprep.subr.bf16.mxu0 0
    %364 = vmatpush1.bf16.msra.mxu0 0
    %365 = vmatprep.mubr.bf16.mxu0 0
    %366 = vmatmul.mubr.bf16.gmra.mrb[0].mxu0 %v279
    %v367 = vpop.f32.mrb[0].mxu0
    %v368 = vadd.f32 %v253, %v367
    %v369 = vpop.f32.mrb[0].mxu0
    %v370 = vpop.f32.mrb[0].mxu0
    %v371 = vpop.f32.mrb[0].mxu0
    %372 = vdwg.mxu0
    %v377 = vunpack.c.l.b16 %v184
    %v378 = vunpack.c.l.b16 %v185
    %v379 = vunpack.c.l.b16 %v186
    %v380 = vunpack.c.l.b16 %v187
    %v381 = vpack.c.b16 %v378, %v377
    %v382 = vpack.c.b16 %v380, %v379
    %385 = vmatprep.subr.bf16.mxu0 0
    %386 = vmatpush1.bf16.msra.mxu0 %v381
    %387 = vmatprep.subr.bf16.mxu0 0
    %388 = vmatpush1.bf16.msra.mxu0 %v382
    %389 = vmatprep.subr.bf16.mxu0 0
    %390 = vmatpush1.bf16.msra.mxu0 0
    %391 = vmatprep.subr.bf16.mxu0 0
    %392 = vmatpush1.bf16.msra.mxu0 0
    %393 = vmatprep.subr.bf16.mxu0 0
    %394 = vmatpush1.bf16.msra.mxu0 0
    %395 = vmatprep.subr.bf16.mxu0 0
    %396 = vmatpush1.bf16.msra.mxu0 0
    %397 = vmatprep.subr.bf16.mxu0 0
    %398 = vmatpush1.bf16.msra.mxu0 0
    %399 = vmatprep.subr.bf16.mxu0 0
    %400 = vmatpush1.bf16.msra.mxu0 0
    %401 = vmatprep.subr.bf16.mxu0 0
    %402 = vmatpush1.bf16.msra.mxu0 0
    %403 = vmatprep.subr.bf16.mxu0 0
    %404 = vmatpush1.bf16.msra.mxu0 0
    %405 = vmatprep.subr.bf16.mxu0 0
    %406 = vmatpush1.bf16.msra.mxu0 0
    %407 = vmatprep.subr.bf16.mxu0 0
    %408 = vmatpush1.bf16.msra.mxu0 0
    %409 = vmatprep.subr.bf16.mxu0 0
    %410 = vmatpush1.bf16.msra.mxu0 0
    %411 = vmatprep.subr.bf16.mxu0 0
    %412 = vmatpush1.bf16.msra.mxu0 0
    %413 = vmatprep.subr.bf16.mxu0 0
    %414 = vmatpush1.bf16.msra.mxu0 0
    %415 = vmatprep.subr.bf16.mxu0 0
    %416 = vmatpush1.bf16.msra.mxu0 0
    %417 = vmatprep.mubr.bf16.mxu0 0
    %418 = vmatmul.mubr.bf16.gmra.mrb[0].mxu0 %v279
    %v419 = vpop.f32.mrb[0].mxu0
    %v420 = vadd.f32 %v257, %v419
    %v421 = vpop.f32.mrb[0].mxu0
    %v422 = vpop.f32.mrb[0].mxu0
    %v423 = vpop.f32.mrb[0].mxu0
    %424 = vdwg.mxu0
    %v429 = vunpack.c.l.b16 %v188
    %v430 = vunpack.c.l.b16 %v189
    %v431 = vunpack.c.l.b16 %v190
    %v432 = vunpack.c.l.b16 %v191
    %v433 = vpack.c.b16 %v430, %v429
    %v434 = vpack.c.b16 %v432, %v431
    %437 = vmatprep.subr.bf16.mxu0 0
    %438 = vmatpush1.bf16.msra.mxu0 %v433
    %439 = vmatprep.subr.bf16.mxu0 0
    %440 = vmatpush1.bf16.msra.mxu0 %v434
    %441 = vmatprep.subr.bf16.mxu0 0
    %442 = vmatpush1.bf16.msra.mxu0 0
    %443 = vmatprep.subr.bf16.mxu0 0
    %444 = vmatpush1.bf16.msra.mxu0 0
    %445 = vmatprep.subr.bf16.mxu0 0
    %446 = vmatpush1.bf16.msra.mxu0 0
    %447 = vmatprep.subr.bf16.mxu0 0
    %448 = vmatpush1.bf16.msra.mxu0 0
    %449 = vmatprep.subr.bf16.mxu0 0
    %450 = vmatpush1.bf16.msra.mxu0 0
    %451 = vmatprep.subr.bf16.mxu0 0
    %452 = vmatpush1.bf16.msra.mxu0 0
    %453 = vmatprep.subr.bf16.mxu0 0
    %454 = vmatpush1.bf16.msra.mxu0 0
    %455 = vmatprep.subr.bf16.mxu0 0
    %456 = vmatpush1.bf16.msra.mxu0 0
    %457 = vmatprep.subr.bf16.mxu0 0
    %458 = vmatpush1.bf16.msra.mxu0 0
    %459 = vmatprep.subr.bf16.mxu0 0
    %460 = vmatpush1.bf16.msra.mxu0 0
    %461 = vmatprep.subr.bf16.mxu0 0
    %462 = vmatpush1.bf16.msra.mxu0 0
    %463 = vmatprep.subr.bf16.mxu0 0
    %464 = vmatpush1.bf16.msra.mxu0 0
    %465 = vmatprep.subr.bf16.mxu0 0
    %466 = vmatpush1.bf16.msra.mxu0 0
    %467 = vmatprep.subr.bf16.mxu0 0
    %468 = vmatpush1.bf16.msra.mxu0 0
    %469 = vmatprep.mubr.bf16.mxu0 0
    %470 = vmatmul.mubr.bf16.gmra.mrb[0].mxu0 %v279
    %v471 = vpop.f32.mrb[0].mxu0
    %v472 = vadd.f32 %v261, %v471
    %v473 = vpop.f32.mrb[0].mxu0
    %v474 = vpop.f32.mrb[0].mxu0
    %v475 = vpop.f32.mrb[0].mxu0
    %476 = vdwg.mxu0
    %v478 = vsel %vm135, %v241, 0
    %480 = vmatprep.subr.bf16.mxu0 0
    %481 = vmatpush1.bf16.msra.mxu0 %v274
    %482 = vmatprep.subr.bf16.mxu0 0
    %483 = vmatpush1.bf16.msra.mxu0 %v275
    %484 = vmatprep.subr.bf16.mxu0 0
    %485 = vmatpush1.bf16.msra.mxu0 0
    %486 = vmatprep.subr.bf16.mxu0 0
    %487 = vmatpush1.bf16.msra.mxu0 0
    %488 = vmatprep.subr.bf16.mxu0 0
    %489 = vmatpush1.bf16.msra.mxu0 0
    %490 = vmatprep.subr.bf16.mxu0 0
    %491 = vmatpush1.bf16.msra.mxu0 0
    %492 = vmatprep.subr.bf16.mxu0 0
    %493 = vmatpush1.bf16.msra.mxu0 0
    %494 = vmatprep.subr.bf16.mxu0 0
    %495 = vmatpush1.bf16.msra.mxu0 0
    %496 = vmatprep.subr.bf16.mxu0 0
    %497 = vmatpush1.bf16.msra.mxu0 0
    %498 = vmatprep.subr.bf16.mxu0 0
    %499 = vmatpush1.bf16.msra.mxu0 0
    %500 = vmatprep.subr.bf16.mxu0 0
    %501 = vmatpush1.bf16.msra.mxu0 0
    %502 = vmatprep.subr.bf16.mxu0 0
    %503 = vmatpush1.bf16.msra.mxu0 0
    %504 = vmatprep.subr.bf16.mxu0 0
    %505 = vmatpush1.bf16.msra.mxu0 0
    %506 = vmatprep.subr.bf16.mxu0 0
    %507 = vmatpush1.bf16.msra.mxu0 0
    %508 = vmatprep.subr.bf16.mxu0 0
    %509 = vmatpush1.bf16.msra.mxu0 0
    %510 = vmatprep.subr.bf16.mxu0 0
    %511 = vmatpush1.bf16.msra.mxu0 0
    %512 = vmatprep.mubr.bf16.mxu0 0
    %513 = vmatmul.mubr.bf16.gmra.mrb[0].mxu0 %v478
    %v514 = vpop.f32.mrb[0].mxu0
    %v515 = vadd.f32 %v249, %v514
    %v516 = vpop.f32.mrb[0].mxu0
    %v517 = vpop.f32.mrb[0].mxu0
    %v518 = vpop.f32.mrb[0].mxu0
    %519 = vdwg.mxu0
    %520 = vmatprep.subr.bf16.mxu0 0
    %521 = vmatpush1.bf16.msra.mxu0 %v329
    %522 = vmatprep.subr.bf16.mxu0 0
    %523 = vmatpush1.bf16.msra.mxu0 %v330
    %524 = vmatprep.subr.bf16.mxu0 0
    %525 = vmatpush1.bf16.msra.mxu0 0
    %526 = vmatprep.subr.bf16.mxu0 0
    %527 = vmatpush1.bf16.msra.mxu0 0
    %528 = vmatprep.subr.bf16.mxu0 0
    %529 = vmatpush1.bf16.msra.mxu0 0
    %530 = vmatprep.subr.bf16.mxu0 0
    %531 = vmatpush1.bf16.msra.mxu0 0
    %532 = vmatprep.subr.bf16.mxu0 0
    %533 = vmatpush1.bf16.msra.mxu0 0
    %534 = vmatprep.subr.bf16.mxu0 0
    %535 = vmatpush1.bf16.msra.mxu0 0
    %536 = vmatprep.subr.bf16.mxu0 0
    %537 = vmatpush1.bf16.msra.mxu0 0
    %538 = vmatprep.subr.bf16.mxu0 0
    %539 = vmatpush1.bf16.msra.mxu0 0
    %540 = vmatprep.subr.bf16.mxu0 0
    %541 = vmatpush1.bf16.msra.mxu0 0
    %542 = vmatprep.subr.bf16.mxu0 0
    %543 = vmatpush1.bf16.msra.mxu0 0
    %544 = vmatprep.subr.bf16.mxu0 0
    %545 = vmatpush1.bf16.msra.mxu0 0
    %546 = vmatprep.subr.bf16.mxu0 0
    %547 = vmatpush1.bf16.msra.mxu0 0
    %548 = vmatprep.subr.bf16.mxu0 0
    %549 = vmatpush1.bf16.msra.mxu0 0
    %550 = vmatprep.subr.bf16.mxu0 0
    %551 = vmatpush1.bf16.msra.mxu0 0
    %552 = vmatprep.mubr.bf16.mxu0 0
    %553 = vmatmul.mubr.bf16.gmra.mrb[0].mxu0 %v478
    %v554 = vpop.f32.mrb[0].mxu0
    %v555 = vadd.f32 %v253, %v554
    %v556 = vpop.f32.mrb[0].mxu0
    %v557 = vpop.f32.mrb[0].mxu0
    %v558 = vpop.f32.mrb[0].mxu0
    %559 = vdwg.mxu0
    %560 = vmatprep.subr.bf16.mxu0 0
    %561 = vmatpush1.bf16.msra.mxu0 %v381
    %562 = vmatprep.subr.bf16.mxu0 0
    %563 = vmatpush1.bf16.msra.mxu0 %v382
    %564 = vmatprep.subr.bf16.mxu0 0
    %565 = vmatpush1.bf16.msra.mxu0 0
    %566 = vmatprep.subr.bf16.mxu0 0
    %567 = vmatpush1.bf16.msra.mxu0 0
    %568 = vmatprep.subr.bf16.mxu0 0
    %569 = vmatpush1.bf16.msra.mxu0 0
    %570 = vmatprep.subr.bf16.mxu0 0
    %571 = vmatpush1.bf16.msra.mxu0 0
    %572 = vmatprep.subr.bf16.mxu0 0
    %573 = vmatpush1.bf16.msra.mxu0 0
    %574 = vmatprep.subr.bf16.mxu0 0
    %575 = vmatpush1.bf16.msra.mxu0 0
    %576 = vmatprep.subr.bf16.mxu0 0
    %577 = vmatpush1.bf16.msra.mxu0 0
    %578 = vmatprep.subr.bf16.mxu0 0
    %579 = vmatpush1.bf16.msra.mxu0 0
    %580 = vmatprep.subr.bf16.mxu0 0
    %581 = vmatpush1.bf16.msra.mxu0 0
    %582 = vmatprep.subr.bf16.mxu0 0
    %583 = vmatpush1.bf16.msra.mxu0 0
    %584 = vmatprep.subr.bf16.mxu0 0
    %585 = vmatpush1.bf16.msra.mxu0 0
    %586 = vmatprep.subr.bf16.mxu0 0
    %587 = vmatpush1.bf16.msra.mxu0 0
    %588 = vmatprep.subr.bf16.mxu0 0
    %589 = vmatpush1.bf16.msra.mxu0 0
    %590 = vmatprep.subr.bf16.mxu0 0
    %591 = vmatpush1.bf16.msra.mxu0 0
    %592 = vmatprep.mubr.bf16.mxu0 0
    %593 = vmatmul.mubr.bf16.gmra.mrb[0].mxu0 %v478
    %v594 = vpop.f32.mrb[0].mxu0
    %v595 = vadd.f32 %v257, %v594
    %v596 = vpop.f32.mrb[0].mxu0
    %v597 = vpop.f32.mrb[0].mxu0
    %v598 = vpop.f32.mrb[0].mxu0
    %599 = vdwg.mxu0
    %600 = vmatprep.subr.bf16.mxu0 0
    %601 = vmatpush1.bf16.msra.mxu0 %v433
    %602 = vmatprep.subr.bf16.mxu0 0
    %603 = vmatpush1.bf16.msra.mxu0 %v434
    %604 = vmatprep.subr.bf16.mxu0 0
    %605 = vmatpush1.bf16.msra.mxu0 0
    %606 = vmatprep.subr.bf16.mxu0 0
    %607 = vmatpush1.bf16.msra.mxu0 0
    %608 = vmatprep.subr.bf16.mxu0 0
    %609 = vmatpush1.bf16.msra.mxu0 0
    %610 = vmatprep.subr.bf16.mxu0 0
    %611 = vmatpush1.bf16.msra.mxu0 0
    %612 = vmatprep.subr.bf16.mxu0 0
    %613 = vmatpush1.bf16.msra.mxu0 0
    %614 = vmatprep.subr.bf16.mxu0 0
    %615 = vmatpush1.bf16.msra.mxu0 0
    %616 = vmatprep.subr.bf16.mxu0 0
    %617 = vmatpush1.bf16.msra.mxu0 0
    %618 = vmatprep.subr.bf16.mxu0 0
    %619 = vmatpush1.bf16.msra.mxu0 0
    %620 = vmatprep.subr.bf16.mxu0 0
    %621 = vmatpush1.bf16.msra.mxu0 0
    %622 = vmatprep.subr.bf16.mxu0 0
    %623 = vmatpush1.bf16.msra.mxu0 0
    %624 = vmatprep.subr.bf16.mxu0 0
    %625 = vmatpush1.bf16.msra.mxu0 0
    %626 = vmatprep.subr.bf16.mxu0 0
    %627 = vmatpush1.bf16.msra.mxu0 0
    %628 = vmatprep.subr.bf16.mxu0 0
    %629 = vmatpush1.bf16.msra.mxu0 0
    %630 = vmatprep.subr.bf16.mxu0 0
    %631 = vmatpush1.bf16.msra.mxu0 0
    %632 = vmatprep.mubr.bf16.mxu0 0
    %633 = vmatmul.mubr.bf16.gmra.mrb[0].mxu0 %v478
    %v634 = vpop.f32.mrb[0].mxu0
    %v635 = vadd.f32 %v261, %v634
    %v636 = vpop.f32.mrb[0].mxu0
    %v637 = vpop.f32.mrb[0].mxu0
    %v638 = vpop.f32.mrb[0].mxu0
    %639 = vdwg.mxu0
    %v644 = vlaneseq
    %v645 = vshrl.u32 %v644, 7
    %v646 = vsub.s32 0, %v645
    %v647 = vrot.slane %v228, %v646
    %v648 = vlaneseq
    %v649 = vshrl.u32 %v648, 7
    %v650 = vsub.s32 0, %v649
    %v651 = vrot.slane %v229, %v650
    %v652 = vlaneseq
    %v653 = vshrl.u32 %v652, 7
    %v654 = vsub.s32 0, %v653
    %v655 = vrot.slane %v230, %v654
    %v656 = vlaneseq
    %v657 = vshrl.u32 %v656, 7
    %v658 = vsub.s32 0, %v657
    %v659 = vrot.slane %v231, %v658
    %v668 = vunpack.c.l.b16 %v192
    %v669 = vunpack.c.l.b16 %v193
    %v670 = vunpack.c.l.b16 %v194
    %v671 = vunpack.c.l.b16 %v195
    %v672 = vpack.c.b16 %v669, %v668
    %v673 = vpack.c.b16 %v671, %v670
    %676 = vmatprep.subr.bf16.mxu0 0
    %677 = vmatpush1.bf16.msra.mxu0 %v672
    %678 = vmatprep.subr.bf16.mxu0 0
    %679 = vmatpush1.bf16.msra.mxu0 %v673
    %680 = vmatprep.subr.bf16.mxu0 0
    %681 = vmatpush1.bf16.msra.mxu0 0
    %682 = vmatprep.subr.bf16.mxu0 0
    %683 = vmatpush1.bf16.msra.mxu0 0
    %684 = vmatprep.subr.bf16.mxu0 0
    %685 = vmatpush1.bf16.msra.mxu0 0
    %686 = vmatprep.subr.bf16.mxu0 0
    %687 = vmatpush1.bf16.msra.mxu0 0
    %688 = vmatprep.subr.bf16.mxu0 0
    %689 = vmatpush1.bf16.msra.mxu0 0
    %690 = vmatprep.subr.bf16.mxu0 0
    %691 = vmatpush1.bf16.msra.mxu0 0
    %692 = vmatprep.subr.bf16.mxu0 0
    %693 = vmatpush1.bf16.msra.mxu0 0
    %694 = vmatprep.subr.bf16.mxu0 0
    %695 = vmatpush1.bf16.msra.mxu0 0
    %696 = vmatprep.subr.bf16.mxu0 0
    %697 = vmatpush1.bf16.msra.mxu0 0
    %698 = vmatprep.subr.bf16.mxu0 0
    %699 = vmatpush1.bf16.msra.mxu0 0
    %700 = vmatprep.subr.bf16.mxu0 0
    %701 = vmatpush1.bf16.msra.mxu0 0
    %702 = vmatprep.subr.bf16.mxu0 0
    %703 = vmatpush1.bf16.msra.mxu0 0
    %704 = vmatprep.subr.bf16.mxu0 0
    %705 = vmatpush1.bf16.msra.mxu0 0
    %706 = vmatprep.subr.bf16.mxu0 0
    %707 = vmatpush1.bf16.msra.mxu0 0
    %708 = vmatprep.mubr.bf16.mxu0 0
    %709 = vmatmul.mubr.bf16.gmra.mrb[0].mxu0 %v279
    %v710 = vpop.f32.mrb[0].mxu0
    %v711 = vadd.f32 %v647, %v710
    %v712 = vpop.f32.mrb[0].mxu0
    %v713 = vpop.f32.mrb[0].mxu0
    %v714 = vpop.f32.mrb[0].mxu0
    %715 = vdwg.mxu0
    %v720 = vunpack.c.l.b16 %v196
    %v721 = vunpack.c.l.b16 %v197
    %v722 = vunpack.c.l.b16 %v198
    %v723 = vunpack.c.l.b16 %v199
    %v724 = vpack.c.b16 %v721, %v720
    %v725 = vpack.c.b16 %v723, %v722
    %728 = vmatprep.subr.bf16.mxu0 0
    %729 = vmatpush1.bf16.msra.mxu0 %v724
    %730 = vmatprep.subr.bf16.mxu0 0
    %731 = vmatpush1.bf16.msra.mxu0 %v725
    %732 = vmatprep.subr.bf16.mxu0 0
    %733 = vmatpush1.bf16.msra.mxu0 0
    %734 = vmatprep.subr.bf16.mxu0 0
    %735 = vmatpush1.bf16.msra.mxu0 0
    %736 = vmatprep.subr.bf16.mxu0 0
    %737 = vmatpush1.bf16.msra.mxu0 0
    %738 = vmatprep.subr.bf16.mxu0 0
    %739 = vmatpush1.bf16.msra.mxu0 0
    %740 = vmatprep.subr.bf16.mxu0 0
    %741 = vmatpush1.bf16.msra.mxu0 0
    %742 = vmatprep.subr.bf16.mxu0 0
    %743 = vmatpush1.bf16.msra.mxu0 0
    %744 = vmatprep.subr.bf16.mxu0 0
    %745 = vmatpush1.bf16.msra.mxu0 0
    %746 = vmatprep.subr.bf16.mxu0 0
    %747 = vmatpush1.bf16.msra.mxu0 0
    %748 = vmatprep.subr.bf16.mxu0 0
    %749 = vmatpush1.bf16.msra.mxu0 0
    %750 = vmatprep.subr.bf16.mxu0 0
    %751 = vmatpush1.bf16.msra.mxu0 0
    %752 = vmatprep.subr.bf16.mxu0 0
    %753 = vmatpush1.bf16.msra.mxu0 0
    %754 = vmatprep.subr.bf16.mxu0 0
    %755 = vmatpush1.bf16.msra.mxu0 0
    %756 = vmatprep.subr.bf16.mxu0 0
    %757 = vmatpush1.bf16.msra.mxu0 0
    %758 = vmatprep.subr.bf16.mxu0 0
    %759 = vmatpush1.bf16.msra.mxu0 0
    %760 = vmatprep.mubr.bf16.mxu0 0
    %761 = vmatmul.mubr.bf16.gmra.mrb[0].mxu0 %v279
    %v762 = vpop.f32.mrb[0].mxu0
    %v763 = vadd.f32 %v651, %v762
    %v764 = vpop.f32.mrb[0].mxu0
    %v765 = vpop.f32.mrb[0].mxu0
    %v766 = vpop.f32.mrb[0].mxu0
    %767 = vdwg.mxu0
    %v772 = vunpack.c.l.b16 %v200
    %v773 = vunpack.c.l.b16 %v201
    %v774 = vunpack.c.l.b16 %v202
    %v775 = vunpack.c.l.b16 %v203
    %v776 = vpack.c.b16 %v773, %v772
    %v777 = vpack.c.b16 %v775, %v774
    %780 = vmatprep.subr.bf16.mxu0 0
    %781 = vmatpush1.bf16.msra.mxu0 %v776
    %782 = vmatprep.subr.bf16.mxu0 0
    %783 = vmatpush1.bf16.msra.mxu0 %v777
    %784 = vmatprep.subr.bf16.mxu0 0
    %785 = vmatpush1.bf16.msra.mxu0 0
    %786 = vmatprep.subr.bf16.mxu0 0
    %787 = vmatpush1.bf16.msra.mxu0 0
    %788 = vmatprep.subr.bf16.mxu0 0
    %789 = vmatpush1.bf16.msra.mxu0 0
    %790 = vmatprep.subr.bf16.mxu0 0
    %791 = vmatpush1.bf16.msra.mxu0 0
    %792 = vmatprep.subr.bf16.mxu0 0
    %793 = vmatpush1.bf16.msra.mxu0 0
    %794 = vmatprep.subr.bf16.mxu0 0
    %795 = vmatpush1.bf16.msra.mxu0 0
    %796 = vmatprep.subr.bf16.mxu0 0
    %797 = vmatpush1.bf16.msra.mxu0 0
    %798 = vmatprep.subr.bf16.mxu0 0
    %799 = vmatpush1.bf16.msra.mxu0 0
    %800 = vmatprep.subr.bf16.mxu0 0
    %801 = vmatpush1.bf16.msra.mxu0 0
    %802 = vmatprep.subr.bf16.mxu0 0
    %803 = vmatpush1.bf16.msra.mxu0 0
    %804 = vmatprep.subr.bf16.mxu0 0
    %805 = vmatpush1.bf16.msra.mxu0 0
    %806 = vmatprep.subr.bf16.mxu0 0
    %807 = vmatpush1.bf16.msra.mxu0 0
    %808 = vmatprep.subr.bf16.mxu0 0
    %809 = vmatpush1.bf16.msra.mxu0 0
    %810 = vmatprep.subr.bf16.mxu0 0
    %811 = vmatpush1.bf16.msra.mxu0 0
    %812 = vmatprep.mubr.bf16.mxu0 0
    %813 = vmatmul.mubr.bf16.gmra.mrb[0].mxu0 %v279
    %v814 = vpop.f32.mrb[0].mxu0
    %v815 = vadd.f32 %v655, %v814
    %v816 = vpop.f32.mrb[0].mxu0
    %v817 = vpop.f32.mrb[0].mxu0
    %v818 = vpop.f32.mrb[0].mxu0
    %819 = vdwg.mxu0
    %v824 = vunpack.c.l.b16 %v204
    %v825 = vunpack.c.l.b16 %v205
    %v826 = vunpack.c.l.b16 %v206
    %v827 = vunpack.c.l.b16 %v207
    %v828 = vpack.c.b16 %v825, %v824
    %v829 = vpack.c.b16 %v827, %v826
    %832 = vmatprep.subr.bf16.mxu0 0
    %833 = vmatpush1.bf16.msra.mxu0 %v828
    %834 = vmatprep.subr.bf16.mxu0 0
    %835 = vmatpush1.bf16.msra.mxu0 %v829
    %836 = vmatprep.subr.bf16.mxu0 0
    %837 = vmatpush1.bf16.msra.mxu0 0
    %838 = vmatprep.subr.bf16.mxu0 0
    %839 = vmatpush1.bf16.msra.mxu0 0
    %840 = vmatprep.subr.bf16.mxu0 0
    %841 = vmatpush1.bf16.msra.mxu0 0
    %842 = vmatprep.subr.bf16.mxu0 0
    %843 = vmatpush1.bf16.msra.mxu0 0
    %844 = vmatprep.subr.bf16.mxu0 0
    %845 = vmatpush1.bf16.msra.mxu0 0
    %846 = vmatprep.subr.bf16.mxu0 0
    %847 = vmatpush1.bf16.msra.mxu0 0
    %848 = vmatprep.subr.bf16.mxu0 0
    %849 = vmatpush1.bf16.msra.mxu0 0
    %850 = vmatprep.subr.bf16.mxu0 0
    %851 = vmatpush1.bf16.msra.mxu0 0
    %852 = vmatprep.subr.bf16.mxu0 0
    %853 = vmatpush1.bf16.msra.mxu0 0
    %854 = vmatprep.subr.bf16.mxu0 0
    %855 = vmatpush1.bf16.msra.mxu0 0
    %856 = vmatprep.subr.bf16.mxu0 0
    %857 = vmatpush1.bf16.msra.mxu0 0
    %858 = vmatprep.subr.bf16.mxu0 0
    %859 = vmatpush1.bf16.msra.mxu0 0
    %860 = vmatprep.subr.bf16.mxu0 0
    %861 = vmatpush1.bf16.msra.mxu0 0
    %862 = vmatprep.subr.bf16.mxu0 0
    %863 = vmatpush1.bf16.msra.mxu0 0
    %864 = vmatprep.mubr.bf16.mxu0 0
    %865 = vmatmul.mubr.bf16.gmra.mrb[0].mxu0 %v279
    %v866 = vpop.f32.mrb[0].mxu0
    %v867 = vadd.f32 %v659, %v866
    %v868 = vpop.f32.mrb[0].mxu0
    %v869 = vpop.f32.mrb[0].mxu0
    %v870 = vpop.f32.mrb[0].mxu0
    %871 = vdwg.mxu0
    %872 = vmatprep.subr.bf16.mxu0 0
    %873 = vmatpush1.bf16.msra.mxu0 %v672
    %874 = vmatprep.subr.bf16.mxu0 0
    %875 = vmatpush1.bf16.msra.mxu0 %v673
    %876 = vmatprep.subr.bf16.mxu0 0
    %877 = vmatpush1.bf16.msra.mxu0 0
    %878 = vmatprep.subr.bf16.mxu0 0
    %879 = vmatpush1.bf16.msra.mxu0 0
    %880 = vmatprep.subr.bf16.mxu0 0
    %881 = vmatpush1.bf16.msra.mxu0 0
    %882 = vmatprep.subr.bf16.mxu0 0
    %883 = vmatpush1.bf16.msra.mxu0 0
    %884 = vmatprep.subr.bf16.mxu0 0
    %885 = vmatpush1.bf16.msra.mxu0 0
    %886 = vmatprep.subr.bf16.mxu0 0
    %887 = vmatpush1.bf16.msra.mxu0 0
    %888 = vmatprep.subr.bf16.mxu0 0
    %889 = vmatpush1.bf16.msra.mxu0 0
    %890 = vmatprep.subr.bf16.mxu0 0
    %891 = vmatpush1.bf16.msra.mxu0 0
    %892 = vmatprep.subr.bf16.mxu0 0
    %893 = vmatpush1.bf16.msra.mxu0 0
    %894 = vmatprep.subr.bf16.mxu0 0
    %895 = vmatpush1.bf16.msra.mxu0 0
    %896 = vmatprep.subr.bf16.mxu0 0
    %897 = vmatpush1.bf16.msra.mxu0 0
    %898 = vmatprep.subr.bf16.mxu0 0
    %899 = vmatpush1.bf16.msra.mxu0 0
    %900 = vmatprep.subr.bf16.mxu0 0
    %901 = vmatpush1.bf16.msra.mxu0 0
    %902 = vmatprep.subr.bf16.mxu0 0
    %903 = vmatpush1.bf16.msra.mxu0 0
    %904 = vmatprep.mubr.bf16.mxu0 0
    %905 = vmatmul.mubr.bf16.gmra.mrb[0].mxu0 %v478
    %v906 = vpop.f32.mrb[0].mxu0
    %v907 = vadd.f32 %v647, %v906
    %v908 = vpop.f32.mrb[0].mxu0
    %v909 = vpop.f32.mrb[0].mxu0
    %v910 = vpop.f32.mrb[0].mxu0
    %911 = vdwg.mxu0
    %912 = vmatprep.subr.bf16.mxu0 0
    %913 = vmatpush1.bf16.msra.mxu0 %v724
    %914 = vmatprep.subr.bf16.mxu0 0
    %915 = vmatpush1.bf16.msra.mxu0 %v725
    %916 = vmatprep.subr.bf16.mxu0 0
    %917 = vmatpush1.bf16.msra.mxu0 0
    %918 = vmatprep.subr.bf16.mxu0 0
    %919 = vmatpush1.bf16.msra.mxu0 0
    %920 = vmatprep.subr.bf16.mxu0 0
    %921 = vmatpush1.bf16.msra.mxu0 0
    %922 = vmatprep.subr.bf16.mxu0 0
    %923 = vmatpush1.bf16.msra.mxu0 0
    %924 = vmatprep.subr.bf16.mxu0 0
    %925 = vmatpush1.bf16.msra.mxu0 0
    %926 = vmatprep.subr.bf16.mxu0 0
    %927 = vmatpush1.bf16.msra.mxu0 0
    %928 = vmatprep.subr.bf16.mxu0 0
    %929 = vmatpush1.bf16.msra.mxu0 0
    %930 = vmatprep.subr.bf16.mxu0 0
    %931 = vmatpush1.bf16.msra.mxu0 0
    %932 = vmatprep.subr.bf16.mxu0 0
    %933 = vmatpush1.bf16.msra.mxu0 0
    %934 = vmatprep.subr.bf16.mxu0 0
    %935 = vmatpush1.bf16.msra.mxu0 0
    %936 = vmatprep.subr.bf16.mxu0 0
    %937 = vmatpush1.bf16.msra.mxu0 0
    %938 = vmatprep.subr.bf16.mxu0 0
    %939 = vmatpush1.bf16.msra.mxu0 0
    %940 = vmatprep.subr.bf16.mxu0 0
    %941 = vmatpush1.bf16.msra.mxu0 0
    %942 = vmatprep.subr.bf16.mxu0 0
    %943 = vmatpush1.bf16.msra.mxu0 0
    %944 = vmatprep.mubr.bf16.mxu0 0
    %945 = vmatmul.mubr.bf16.gmra.mrb[0].mxu0 %v478
    %v946 = vpop.f32.mrb[0].mxu0
    %v947 = vadd.f32 %v651, %v946
    %v948 = vpop.f32.mrb[0].mxu0
    %v949 = vpop.f32.mrb[0].mxu0
    %v950 = vpop.f32.mrb[0].mxu0
    %951 = vdwg.mxu0
    %952 = vmatprep.subr.bf16.mxu0 0
    %953 = vmatpush1.bf16.msra.mxu0 %v776
    %954 = vmatprep.subr.bf16.mxu0 0
    %955 = vmatpush1.bf16.msra.mxu0 %v777
    %956 = vmatprep.subr.bf16.mxu0 0
    %957 = vmatpush1.bf16.msra.mxu0 0
    %958 = vmatprep.subr.bf16.mxu0 0
    %959 = vmatpush1.bf16.msra.mxu0 0
    %960 = vmatprep.subr.bf16.mxu0 0
    %961 = vmatpush1.bf16.msra.mxu0 0
    %962 = vmatprep.subr.bf16.mxu0 0
    %963 = vmatpush1.bf16.msra.mxu0 0
    %964 = vmatprep.subr.bf16.mxu0 0
    %965 = vmatpush1.bf16.msra.mxu0 0
    %966 = vmatprep.subr.bf16.mxu0 0
    %967 = vmatpush1.bf16.msra.mxu0 0
    %968 = vmatprep.subr.bf16.mxu0 0
    %969 = vmatpush1.bf16.msra.mxu0 0
    %970 = vmatprep.subr.bf16.mxu0 0
    %971 = vmatpush1.bf16.msra.mxu0 0
    %972 = vmatprep.subr.bf16.mxu0 0
    %973 = vmatpush1.bf16.msra.mxu0 0
    %974 = vmatprep.subr.bf16.mxu0 0
    %975 = vmatpush1.bf16.msra.mxu0 0
    %976 = vmatprep.subr.bf16.mxu0 0
    %977 = vmatpush1.bf16.msra.mxu0 0
    %978 = vmatprep.subr.bf16.mxu0 0
    %979 = vmatpush1.bf16.msra.mxu0 0
    %980 = vmatprep.subr.bf16.mxu0 0
    %981 = vmatpush1.bf16.msra.mxu0 0
    %982 = vmatprep.subr.bf16.mxu0 0
    %983 = vmatpush1.bf16.msra.mxu0 0
    %984 = vmatprep.mubr.bf16.mxu0 0
    %985 = vmatmul.mubr.bf16.gmra.mrb[0].mxu0 %v478
    %v986 = vpop.f32.mrb[0].mxu0
    %v987 = vadd.f32 %v655, %v986
    %v988 = vpop.f32.mrb[0].mxu0
    %v989 = vpop.f32.mrb[0].mxu0
    %v990 = vpop.f32.mrb[0].mxu0
    %991 = vdwg.mxu0
    %992 = vmatprep.subr.bf16.mxu0 0
    %993 = vmatpush1.bf16.msra.mxu0 %v828
    %994 = vmatprep.subr.bf16.mxu0 0
    %995 = vmatpush1.bf16.msra.mxu0 %v829
    %996 = vmatprep.subr.bf16.mxu0 0
    %997 = vmatpush1.bf16.msra.mxu0 0
    %998 = vmatprep.subr.bf16.mxu0 0
    %999 = vmatpush1.bf16.msra.mxu0 0
    %1000 = vmatprep.subr.bf16.mxu0 0
    %1001 = vmatpush1.bf16.msra.mxu0 0
    %1002 = vmatprep.subr.bf16.mxu0 0
    %1003 = vmatpush1.bf16.msra.mxu0 0
    %1004 = vmatprep.subr.bf16.mxu0 0
    %1005 = vmatpush1.bf16.msra.mxu0 0
    %1006 = vmatprep.subr.bf16.mxu0 0
    %1007 = vmatpush1.bf16.msra.mxu0 0
    %1008 = vmatprep.subr.bf16.mxu0 0
    %1009 = vmatpush1.bf16.msra.mxu0 0
    %1010 = vmatprep.subr.bf16.mxu0 0
    %1011 = vmatpush1.bf16.msra.mxu0 0
    %1012 = vmatprep.subr.bf16.mxu0 0
    %1013 = vmatpush1.bf16.msra.mxu0 0
    %1014 = vmatprep.subr.bf16.mxu0 0
    %1015 = vmatpush1.bf16.msra.mxu0 0
    %1016 = vmatprep.subr.bf16.mxu0 0
    %1017 = vmatpush1.bf16.msra.mxu0 0
    %1018 = vmatprep.subr.bf16.mxu0 0
    %1019 = vmatpush1.bf16.msra.mxu0 0
    %1020 = vmatprep.subr.bf16.mxu0 0
    %1021 = vmatpush1.bf16.msra.mxu0 0
    %1022 = vmatprep.subr.bf16.mxu0 0
    %1023 = vmatpush1.bf16.msra.mxu0 0
    %1024 = vmatprep.mubr.bf16.mxu0 0
    %1025 = vmatmul.mubr.bf16.gmra.mrb[0].mxu0 %v478
    %v1026 = vpop.f32.mrb[0].mxu0
    %v1027 = vadd.f32 %v659, %v1026
    %v1028 = vpop.f32.mrb[0].mxu0
    %v1029 = vpop.f32.mrb[0].mxu0
    %v1030 = vpop.f32.mrb[0].mxu0
    %1031 = vdwg.mxu0
    %v1036 = vlaneseq
    %v1037 = vshrl.u32 %v1036, 7
    %v1038 = vsub.s32 0, %v1037
    %v1039 = vrot.slane %v232, %v1038
    %v1040 = vlaneseq
    %v1041 = vshrl.u32 %v1040, 7
    %v1042 = vsub.s32 0, %v1041
    %v1043 = vrot.slane %v233, %v1042
    %v1044 = vlaneseq
    %v1045 = vshrl.u32 %v1044, 7
    %v1046 = vsub.s32 0, %v1045
    %v1047 = vrot.slane %v234, %v1046
    %v1048 = vlaneseq
    %v1049 = vshrl.u32 %v1048, 7
    %v1050 = vsub.s32 0, %v1049
    %v1051 = vrot.slane %v235, %v1050
    %v1060 = vunpack.c.l.b16 %v208
    %v1061 = vunpack.c.l.b16 %v209
    %v1062 = vunpack.c.l.b16 %v210
    %v1063 = vunpack.c.l.b16 %v211
    %v1064 = vpack.c.b16 %v1061, %v1060
    %v1065 = vpack.c.b16 %v1063, %v1062
    %1068 = vmatprep.subr.bf16.mxu0 0
    %1069 = vmatpush1.bf16.msra.mxu0 %v1064
    %1070 = vmatprep.subr.bf16.mxu0 0
    %1071 = vmatpush1.bf16.msra.mxu0 %v1065
    %1072 = vmatprep.subr.bf16.mxu0 0
    %1073 = vmatpush1.bf16.msra.mxu0 0
    %1074 = vmatprep.subr.bf16.mxu0 0
    %1075 = vmatpush1.bf16.msra.mxu0 0
    %1076 = vmatprep.subr.bf16.mxu0 0
    %1077 = vmatpush1.bf16.msra.mxu0 0
    %1078 = vmatprep.subr.bf16.mxu0 0
    %1079 = vmatpush1.bf16.msra.mxu0 0
    %1080 = vmatprep.subr.bf16.mxu0 0
    %1081 = vmatpush1.bf16.msra.mxu0 0
    %1082 = vmatprep.subr.bf16.mxu0 0
    %1083 = vmatpush1.bf16.msra.mxu0 0
    %1084 = vmatprep.subr.bf16.mxu0 0
    %1085 = vmatpush1.bf16.msra.mxu0 0
    %1086 = vmatprep.subr.bf16.mxu0 0
    %1087 = vmatpush1.bf16.msra.mxu0 0
    %1088 = vmatprep.subr.bf16.mxu0 0
    %1089 = vmatpush1.bf16.msra.mxu0 0
    %1090 = vmatprep.subr.bf16.mxu0 0
    %1091 = vmatpush1.bf16.msra.mxu0 0
    %1092 = vmatprep.subr.bf16.mxu0 0
    %1093 = vmatpush1.bf16.msra.mxu0 0
    %1094 = vmatprep.subr.bf16.mxu0 0
    %1095 = vmatpush1.bf16.msra.mxu0 0
    %1096 = vmatprep.subr.bf16.mxu0 0
    %1097 = vmatpush1.bf16.msra.mxu0 0
    %1098 = vmatprep.subr.bf16.mxu0 0
    %1099 = vmatpush1.bf16.msra.mxu0 0
    %1100 = vmatprep.mubr.bf16.mxu0 0
    %1101 = vmatmul.mubr.bf16.gmra.mrb[0].mxu0 %v279
    %v1102 = vpop.f32.mrb[0].mxu0
    %v1103 = vadd.f32 %v1039, %v1102
    %v1104 = vpop.f32.mrb[0].mxu0
    %v1105 = vpop.f32.mrb[0].mxu0
    %v1106 = vpop.f32.mrb[0].mxu0
    %1107 = vdwg.mxu0
    %v1112 = vunpack.c.l.b16 %v212
    %v1113 = vunpack.c.l.b16 %v213
    %v1114 = vunpack.c.l.b16 %v214
    %v1115 = vunpack.c.l.b16 %v215
    %v1116 = vpack.c.b16 %v1113, %v1112
    %v1117 = vpack.c.b16 %v1115, %v1114
    %1120 = vmatprep.subr.bf16.mxu0 0
    %1121 = vmatpush1.bf16.msra.mxu0 %v1116
    %1122 = vmatprep.subr.bf16.mxu0 0
    %1123 = vmatpush1.bf16.msra.mxu0 %v1117
    %1124 = vmatprep.subr.bf16.mxu0 0
    %1125 = vmatpush1.bf16.msra.mxu0 0
    %1126 = vmatprep.subr.bf16.mxu0 0
    %1127 = vmatpush1.bf16.msra.mxu0 0
    %1128 = vmatprep.subr.bf16.mxu0 0
    %1129 = vmatpush1.bf16.msra.mxu0 0
    %1130 = vmatprep.subr.bf16.mxu0 0
    %1131 = vmatpush1.bf16.msra.mxu0 0
    %1132 = vmatprep.subr.bf16.mxu0 0
    %1133 = vmatpush1.bf16.msra.mxu0 0
    %1134 = vmatprep.subr.bf16.mxu0 0
    %1135 = vmatpush1.bf16.msra.mxu0 0
    %1136 = vmatprep.subr.bf16.mxu0 0
    %1137 = vmatpush1.bf16.msra.mxu0 0
    %1138 = vmatprep.subr.bf16.mxu0 0
    %1139 = vmatpush1.bf16.msra.mxu0 0
    %1140 = vmatprep.subr.bf16.mxu0 0
    %1141 = vmatpush1.bf16.msra.mxu0 0
    %1142 = vmatprep.subr.bf16.mxu0 0
    %1143 = vmatpush1.bf16.msra.mxu0 0
    %1144 = vmatprep.subr.bf16.mxu0 0
    %1145 = vmatpush1.bf16.msra.mxu0 0
    %1146 = vmatprep.subr.bf16.mxu0 0
    %1147 = vmatpush1.bf16.msra.mxu0 0
    %1148 = vmatprep.subr.bf16.mxu0 0
    %1149 = vmatpush1.bf16.msra.mxu0 0
    %1150 = vmatprep.subr.bf16.mxu0 0
    %1151 = vmatpush1.bf16.msra.mxu0 0
    %1152 = vmatprep.mubr.bf16.mxu0 0
    %1153 = vmatmul.mubr.bf16.gmra.mrb[0].mxu0 %v279
    %v1154 = vpop.f32.mrb[0].mxu0
    %v1155 = vadd.f32 %v1043, %v1154
    %v1156 = vpop.f32.mrb[0].mxu0
    %v1157 = vpop.f32.mrb[0].mxu0
    %v1158 = vpop.f32.mrb[0].mxu0
    %1159 = vdwg.mxu0
    %v1164 = vunpack.c.l.b16 %v216
    %v1165 = vunpack.c.l.b16 %v217
    %v1166 = vunpack.c.l.b16 %v218
    %v1167 = vunpack.c.l.b16 %v219
    %v1168 = vpack.c.b16 %v1165, %v1164
    %v1169 = vpack.c.b16 %v1167, %v1166
    %1172 = vmatprep.subr.bf16.mxu0 0
    %1173 = vmatpush1.bf16.msra.mxu0 %v1168
    %1174 = vmatprep.subr.bf16.mxu0 0
    %1175 = vmatpush1.bf16.msra.mxu0 %v1169
    %1176 = vmatprep.subr.bf16.mxu0 0
    %1177 = vmatpush1.bf16.msra.mxu0 0
    %1178 = vmatprep.subr.bf16.mxu0 0
    %1179 = vmatpush1.bf16.msra.mxu0 0
    %1180 = vmatprep.subr.bf16.mxu0 0
    %1181 = vmatpush1.bf16.msra.mxu0 0
    %1182 = vmatprep.subr.bf16.mxu0 0
    %1183 = vmatpush1.bf16.msra.mxu0 0
    %1184 = vmatprep.subr.bf16.mxu0 0
    %1185 = vmatpush1.bf16.msra.mxu0 0
    %1186 = vmatprep.subr.bf16.mxu0 0
    %1187 = vmatpush1.bf16.msra.mxu0 0
    %1188 = vmatprep.subr.bf16.mxu0 0
    %1189 = vmatpush1.bf16.msra.mxu0 0
    %1190 = vmatprep.subr.bf16.mxu0 0
    %1191 = vmatpush1.bf16.msra.mxu0 0
    %1192 = vmatprep.subr.bf16.mxu0 0
    %1193 = vmatpush1.bf16.msra.mxu0 0
    %1194 = vmatprep.subr.bf16.mxu0 0
    %1195 = vmatpush1.bf16.msra.mxu0 0
    %1196 = vmatprep.subr.bf16.mxu0 0
    %1197 = vmatpush1.bf16.msra.mxu0 0
    %1198 = vmatprep.subr.bf16.mxu0 0
    %1199 = vmatpush1.bf16.msra.mxu0 0
    %1200 = vmatprep.subr.bf16.mxu0 0
    %1201 = vmatpush1.bf16.msra.mxu0 0
    %1202 = vmatprep.subr.bf16.mxu0 0
    %1203 = vmatpush1.bf16.msra.mxu0 0
    %1204 = vmatprep.mubr.bf16.mxu0 0
    %1205 = vmatmul.mubr.bf16.gmra.mrb[0].mxu0 %v279
    %v1206 = vpop.f32.mrb[0].mxu0
    %v1207 = vadd.f32 %v1047, %v1206
    %v1208 = vpop.f32.mrb[0].mxu0
    %v1209 = vpop.f32.mrb[0].mxu0
    %v1210 = vpop.f32.mrb[0].mxu0
    %1211 = vdwg.mxu0
    %v1216 = vunpack.c.l.b16 %v220
    %v1217 = vunpack.c.l.b16 %v221
    %v1218 = vunpack.c.l.b16 %v222
    %v1219 = vunpack.c.l.b16 %v223
    %v1220 = vpack.c.b16 %v1217, %v1216
    %v1221 = vpack.c.b16 %v1219, %v1218
    %1224 = vmatprep.subr.bf16.mxu0 0
    %1225 = vmatpush1.bf16.msra.mxu0 %v1220
    %1226 = vmatprep.subr.bf16.mxu0 0
    %1227 = vmatpush1.bf16.msra.mxu0 %v1221
    %1228 = vmatprep.subr.bf16.mxu0 0
    %1229 = vmatpush1.bf16.msra.mxu0 0
    %1230 = vmatprep.subr.bf16.mxu0 0
    %1231 = vmatpush1.bf16.msra.mxu0 0
    %1232 = vmatprep.subr.bf16.mxu0 0
    %1233 = vmatpush1.bf16.msra.mxu0 0
    %1234 = vmatprep.subr.bf16.mxu0 0
    %1235 = vmatpush1.bf16.msra.mxu0 0
    %1236 = vmatprep.subr.bf16.mxu0 0
    %1237 = vmatpush1.bf16.msra.mxu0 0
    %1238 = vmatprep.subr.bf16.mxu0 0
    %1239 = vmatpush1.bf16.msra.mxu0 0
    %1240 = vmatprep.subr.bf16.mxu0 0
    %1241 = vmatpush1.bf16.msra.mxu0 0
    %1242 = vmatprep.subr.bf16.mxu0 0
    %1243 = vmatpush1.bf16.msra.mxu0 0
    %1244 = vmatprep.subr.bf16.mxu0 0
    %1245 = vmatpush1.bf16.msra.mxu0 0
    %1246 = vmatprep.subr.bf16.mxu0 0
    %1247 = vmatpush1.bf16.msra.mxu0 0
    %1248 = vmatprep.subr.bf16.mxu0 0
    %1249 = vmatpush1.bf16.msra.mxu0 0
    %1250 = vmatprep.subr.bf16.mxu0 0
    %1251 = vmatpush1.bf16.msra.mxu0 0
    %1252 = vmatprep.subr.bf16.mxu0 0
    %1253 = vmatpush1.bf16.msra.mxu0 0
    %1254 = vmatprep.subr.bf16.mxu0 0
    %1255 = vmatpush1.bf16.msra.mxu0 0
    %1256 = vmatprep.mubr.bf16.mxu0 0
    %1257 = vmatmul.mubr.bf16.gmra.mrb[0].mxu0 %v279
    %v1258 = vpop.f32.mrb[0].mxu0
    %v1259 = vadd.f32 %v1051, %v1258
    %v1260 = vpop.f32.mrb[0].mxu0
    %v1261 = vpop.f32.mrb[0].mxu0
    %v1262 = vpop.f32.mrb[0].mxu0
    %1263 = vdwg.mxu0
    %1264 = vmatprep.subr.bf16.mxu0 0
    %1265 = vmatpush1.bf16.msra.mxu0 %v1064
    %1266 = vmatprep.subr.bf16.mxu0 0
    %1267 = vmatpush1.bf16.msra.mxu0 %v1065
    %1268 = vmatprep.subr.bf16.mxu0 0
    %1269 = vmatpush1.bf16.msra.mxu0 0
    %1270 = vmatprep.subr.bf16.mxu0 0
    %1271 = vmatpush1.bf16.msra.mxu0 0
    %1272 = vmatprep.subr.bf16.mxu0 0
    %1273 = vmatpush1.bf16.msra.mxu0 0
    %1274 = vmatprep.subr.bf16.mxu0 0
    %1275 = vmatpush1.bf16.msra.mxu0 0
    %1276 = vmatprep.subr.bf16.mxu0 0
    %1277 = vmatpush1.bf16.msra.mxu0 0
    %1278 = vmatprep.subr.bf16.mxu0 0
    %1279 = vmatpush1.bf16.msra.mxu0 0
    %1280 = vmatprep.subr.bf16.mxu0 0
    %1281 = vmatpush1.bf16.msra.mxu0 0
    %1282 = vmatprep.subr.bf16.mxu0 0
    %1283 = vmatpush1.bf16.msra.mxu0 0
    %1284 = vmatprep.subr.bf16.mxu0 0
    %1285 = vmatpush1.bf16.msra.mxu0 0
    %1286 = vmatprep.subr.bf16.mxu0 0
    %1287 = vmatpush1.bf16.msra.mxu0 0
    %1288 = vmatprep.subr.bf16.mxu0 0
    %1289 = vmatpush1.bf16.msra.mxu0 0
    %1290 = vmatprep.subr.bf16.mxu0 0
    %1291 = vmatpush1.bf16.msra.mxu0 0
    %1292 = vmatprep.subr.bf16.mxu0 0
    %1293 = vmatpush1.bf16.msra.mxu0 0
    %1294 = vmatprep.subr.bf16.mxu0 0
    %1295 = vmatpush1.bf16.msra.mxu0 0
    %1296 = vmatprep.mubr.bf16.mxu0 0
    %1297 = vmatmul.mubr.bf16.gmra.mrb[0].mxu0 %v478
    %v1298 = vpop.f32.mrb[0].mxu0
    %v1299 = vadd.f32 %v1039, %v1298
    %v1300 = vpop.f32.mrb[0].mxu0
    %v1301 = vpop.f32.mrb[0].mxu0
    %v1302 = vpop.f32.mrb[0].mxu0
    %1303 = vdwg.mxu0
    %1304 = vmatprep.subr.bf16.mxu0 0
    %1305 = vmatpush1.bf16.msra.mxu0 %v1116
    %1306 = vmatprep.subr.bf16.mxu0 0
    %1307 = vmatpush1.bf16.msra.mxu0 %v1117
    %1308 = vmatprep.subr.bf16.mxu0 0
    %1309 = vmatpush1.bf16.msra.mxu0 0
    %1310 = vmatprep.subr.bf16.mxu0 0
    %1311 = vmatpush1.bf16.msra.mxu0 0
    %1312 = vmatprep.subr.bf16.mxu0 0
    %1313 = vmatpush1.bf16.msra.mxu0 0
    %1314 = vmatprep.subr.bf16.mxu0 0
    %1315 = vmatpush1.bf16.msra.mxu0 0
    %1316 = vmatprep.subr.bf16.mxu0 0
    %1317 = vmatpush1.bf16.msra.mxu0 0
    %1318 = vmatprep.subr.bf16.mxu0 0
    %1319 = vmatpush1.bf16.msra.mxu0 0
    %1320 = vmatprep.subr.bf16.mxu0 0
    %1321 = vmatpush1.bf16.msra.mxu0 0
    %1322 = vmatprep.subr.bf16.mxu0 0
    %1323 = vmatpush1.bf16.msra.mxu0 0
    %1324 = vmatprep.subr.bf16.mxu0 0
    %1325 = vmatpush1.bf16.msra.mxu0 0
    %1326 = vmatprep.subr.bf16.mxu0 0
    %1327 = vmatpush1.bf16.msra.mxu0 0
    %1328 = vmatprep.subr.bf16.mxu0 0
    %1329 = vmatpush1.bf16.msra.mxu0 0
    %1330 = vmatprep.subr.bf16.mxu0 0
    %1331 = vmatpush1.bf16.msra.mxu0 0
    %1332 = vmatprep.subr.bf16.mxu0 0
    %1333 = vmatpush1.bf16.msra.mxu0 0
    %1334 = vmatprep.subr.bf16.mxu0 0
    %1335 = vmatpush1.bf16.msra.mxu0 0
    %1336 = vmatprep.mubr.bf16.mxu0 0
    %1337 = vmatmul.mubr.bf16.gmra.mrb[0].mxu0 %v478
    %v1338 = vpop.f32.mrb[0].mxu0
    %v1339 = vadd.f32 %v1043, %v1338
    %v1340 = vpop.f32.mrb[0].mxu0
    %v1341 = vpop.f32.mrb[0].mxu0
    %v1342 = vpop.f32.mrb[0].mxu0
    %1343 = vdwg.mxu0
    %1344 = vmatprep.subr.bf16.mxu0 0
    %1345 = vmatpush1.bf16.msra.mxu0 %v1168
    %1346 = vmatprep.subr.bf16.mxu0 0
    %1347 = vmatpush1.bf16.msra.mxu0 %v1169
    %1348 = vmatprep.subr.bf16.mxu0 0
    %1349 = vmatpush1.bf16.msra.mxu0 0
    %1350 = vmatprep.subr.bf16.mxu0 0
    %1351 = vmatpush1.bf16.msra.mxu0 0
    %1352 = vmatprep.subr.bf16.mxu0 0
    %1353 = vmatpush1.bf16.msra.mxu0 0
    %1354 = vmatprep.subr.bf16.mxu0 0
    %1355 = vmatpush1.bf16.msra.mxu0 0
    %1356 = vmatprep.subr.bf16.mxu0 0
    %1357 = vmatpush1.bf16.msra.mxu0 0
    %1358 = vmatprep.subr.bf16.mxu0 0
    %1359 = vmatpush1.bf16.msra.mxu0 0
    %1360 = vmatprep.subr.bf16.mxu0 0
    %1361 = vmatpush1.bf16.msra.mxu0 0
    %1362 = vmatprep.subr.bf16.mxu0 0
    %1363 = vmatpush1.bf16.msra.mxu0 0
    %1364 = vmatprep.subr.bf16.mxu0 0
    %1365 = vmatpush1.bf16.msra.mxu0 0
    %1366 = vmatprep.subr.bf16.mxu0 0
    %1367 = vmatpush1.bf16.msra.mxu0 0
    %1368 = vmatprep.subr.bf16.mxu0 0
    %1369 = vmatpush1.bf16.msra.mxu0 0
    %1370 = vmatprep.subr.bf16.mxu0 0
    %1371 = vmatpush1.bf16.msra.mxu0 0
    %1372 = vmatprep.subr.bf16.mxu0 0
    %1373 = vmatpush1.bf16.msra.mxu0 0
    %1374 = vmatprep.subr.bf16.mxu0 0
    %1375 = vmatpush1.bf16.msra.mxu0 0
    %1376 = vmatprep.mubr.bf16.mxu0 0
    %1377 = vmatmul.mubr.bf16.gmra.mrb[0].mxu0 %v478
    %v1378 = vpop.f32.mrb[0].mxu0
    %v1379 = vadd.f32 %v1047, %v1378
    %v1380 = vpop.f32.mrb[0].mxu0
    %v1381 = vpop.f32.mrb[0].mxu0
    %v1382 = vpop.f32.mrb[0].mxu0
    %1383 = vdwg.mxu0
    %1384 = vmatprep.subr.bf16.mxu0 0
    %1385 = vmatpush1.bf16.msra.mxu0 %v1220
    %1386 = vmatprep.subr.bf16.mxu0 0
    %1387 = vmatpush1.bf16.msra.mxu0 %v1221
    %1388 = vmatprep.subr.bf16.mxu0 0
    %1389 = vmatpush1.bf16.msra.mxu0 0
    %1390 = vmatprep.subr.bf16.mxu0 0
    %1391 = vmatpush1.bf16.msra.mxu0 0
    %1392 = vmatprep.subr.bf16.mxu0 0
    %1393 = vmatpush1.bf16.msra.mxu0 0
    %1394 = vmatprep.subr.bf16.mxu0 0
    %1395 = vmatpush1.bf16.msra.mxu0 0
    %1396 = vmatprep.subr.bf16.mxu0 0
    %1397 = vmatpush1.bf16.msra.mxu0 0
    %1398 = vmatprep.subr.bf16.mxu0 0
    %1399 = vmatpush1.bf16.msra.mxu0 0
    %1400 = vmatprep.subr.bf16.mxu0 0
    %1401 = vmatpush1.bf16.msra.mxu0 0
    %1402 = vmatprep.subr.bf16.mxu0 0
    %1403 = vmatpush1.bf16.msra.mxu0 0
    %1404 = vmatprep.subr.bf16.mxu0 0
    %1405 = vmatpush1.bf16.msra.mxu0 0
    %1406 = vmatprep.subr.bf16.mxu0 0
    %1407 = vmatpush1.bf16.msra.mxu0 0
    %1408 = vmatprep.subr.bf16.mxu0 0
    %1409 = vmatpush1.bf16.msra.mxu0 0
    %1410 = vmatprep.subr.bf16.mxu0 0
    %1411 = vmatpush1.bf16.msra.mxu0 0
    %1412 = vmatprep.subr.bf16.mxu0 0
    %1413 = vmatpush1.bf16.msra.mxu0 0
    %1414 = vmatprep.subr.bf16.mxu0 0
    %1415 = vmatpush1.bf16.msra.mxu0 0
    %1416 = vmatprep.mubr.bf16.mxu0 0
    %1417 = vmatmul.mubr.bf16.gmra.mrb[0].mxu0 %v478
    %v1418 = vpop.f32.mrb[0].mxu0
    %v1419 = vadd.f32 %v1051, %v1418
    %v1420 = vpop.f32.mrb[0].mxu0
    %v1421 = vpop.f32.mrb[0].mxu0
    %v1422 = vpop.f32.mrb[0].mxu0
    %1423 = vdwg.mxu0
    %v1424 = vpack.c.bf16 %v316, %v316
    %v1425 = vpack.c.bf16 %v368, %v368
    %v1426 = vpack.c.bf16 %v420, %v420
    %v1427 = vpack.c.bf16 %v472, %v472
    %v1428 = vpack.c.bf16 %v515, %v515
    %v1429 = vpack.c.bf16 %v555, %v555
    %v1430 = vpack.c.bf16 %v595, %v595
    %v1431 = vpack.c.bf16 %v635, %v635
    %v1432 = vpack.c.bf16 %v711, %v711
    %v1433 = vpack.c.bf16 %v763, %v763
    %v1434 = vpack.c.bf16 %v815, %v815
    %v1435 = vpack.c.bf16 %v867, %v867
    %v1436 = vpack.c.bf16 %v907, %v907
    %v1437 = vpack.c.bf16 %v947, %v947
    %v1438 = vpack.c.bf16 %v987, %v987
    %v1439 = vpack.c.bf16 %v1027, %v1027
    %vm1440 = vcmask 64512
    %v1442 = vsel %vm1440, %v1424, 0
    %v1445 = vsel %vm1440, %v1432, 0
    %1447 = vmatprep.subr.bf16.mxu0 0
    %1448 = vmatpush1.bf16.xpose.msra.mxu0 %v1445
    %1449 = vmatprep.subr.bf16.mxu0 0
    %1450 = vmatpush1.bf16.xpose.msra.mxu0 0
    %1451 = vmatprep.subr.bf16.mxu0 0
    %1452 = vmatpush1.bf16.xpose.msra.mxu0 0
    %1453 = vmatprep.subr.bf16.mxu0 0
    %1454 = vmatpush1.bf16.xpose.msra.mxu0 0
    %1455 = vmatprep.subr.bf16.mxu0 0
    %1456 = vmatpush1.bf16.xpose.msra.mxu0 0
    %1457 = vmatprep.subr.bf16.mxu0 0
    %1458 = vmatpush1.bf16.xpose.msra.mxu0 0
    %1459 = vmatprep.subr.bf16.mxu0 0
    %1460 = vmatpush1.bf16.xpose.msra.mxu0 0
    %1461 = vmatprep.subr.bf16.mxu0 0
    %1462 = vmatpush1.bf16.xpose.msra.mxu0 0
    %1463 = vmatprep.subr.bf16.mxu0 0
    %1464 = vmatpush1.bf16.xpose.msra.mxu0 0
    %1465 = vmatprep.subr.bf16.mxu0 0
    %1466 = vmatpush1.bf16.xpose.msra.mxu0 0
    %1467 = vmatprep.subr.bf16.mxu0 0
    %1468 = vmatpush1.bf16.xpose.msra.mxu0 0
    %1469 = vmatprep.subr.bf16.mxu0 0
    %1470 = vmatpush1.bf16.xpose.msra.mxu0 0
    %1471 = vmatprep.subr.bf16.mxu0 0
    %1472 = vmatpush1.bf16.xpose.msra.mxu0 0
    %1473 = vmatprep.subr.bf16.mxu0 0
    %1474 = vmatpush1.bf16.xpose.msra.mxu0 0
    %1475 = vmatprep.subr.bf16.mxu0 0
    %1476 = vmatpush1.bf16.xpose.msra.mxu0 0
    %1477 = vmatprep.subr.bf16.mxu0 0
    %1478 = vmatpush1.bf16.xpose.msra.mxu0 0
    %1479 = vmatprep.mubr.bf16.mxu0 0
    %1480 = vmatmul.mubr.bf16.gmra.mrb[0].mxu0 %v1442
    %v1481 = vpop.f32.mrb[0].mxu0
    %v1482 = vadd.f32 0.0, %v1481
    %v1483 = vpop.f32.mrb[0].mxu0
    %v1484 = vpop.f32.mrb[0].mxu0
    %v1485 = vpop.f32.mrb[0].mxu0
    %1486 = vdwg.mxu0
    %v1488 = vsel %vm1440, %v1425, 0
    %v1491 = vsel %vm1440, %v1433, 0
    %1493 = vmatprep.subr.bf16.mxu0 0
    %1494 = vmatpush1.bf16.xpose.msra.mxu0 %v1491
    %1495 = vmatprep.subr.bf16.mxu0 0
    %1496 = vmatpush1.bf16.xpose.msra.mxu0 0
    %1497 = vmatprep.subr.bf16.mxu0 0
    %1498 = vmatpush1.bf16.xpose.msra.mxu0 0
    %1499 = vmatprep.subr.bf16.mxu0 0
    %1500 = vmatpush1.bf16.xpose.msra.mxu0 0
    %1501 = vmatprep.subr.bf16.mxu0 0
    %1502 = vmatpush1.bf16.xpose.msra.mxu0 0
    %1503 = vmatprep.subr.bf16.mxu0 0
    %1504 = vmatpush1.bf16.xpose.msra.mxu0 0
    %1505 = vmatprep.subr.bf16.mxu0 0
    %1506 = vmatpush1.bf16.xpose.msra.mxu0 0
    %1507 = vmatprep.subr.bf16.mxu0 0
    %1508 = vmatpush1.bf16.xpose.msra.mxu0 0
    %1509 = vmatprep.subr.bf16.mxu0 0
    %1510 = vmatpush1.bf16.xpose.msra.mxu0 0
    %1511 = vmatprep.subr.bf16.mxu0 0
    %1512 = vmatpush1.bf16.xpose.msra.mxu0 0
    %1513 = vmatprep.subr.bf16.mxu0 0
    %1514 = vmatpush1.bf16.xpose.msra.mxu0 0
    %1515 = vmatprep.subr.bf16.mxu0 0
    %1516 = vmatpush1.bf16.xpose.msra.mxu0 0
    %1517 = vmatprep.subr.bf16.mxu0 0
    %1518 = vmatpush1.bf16.xpose.msra.mxu0 0
    %1519 = vmatprep.subr.bf16.mxu0 0
    %1520 = vmatpush1.bf16.xpose.msra.mxu0 0
    %1521 = vmatprep.subr.bf16.mxu0 0
    %1522 = vmatpush1.bf16.xpose.msra.mxu0 0
    %1523 = vmatprep.subr.bf16.mxu0 0
    %1524 = vmatpush1.bf16.xpose.msra.mxu0 0
    %1525 = vmatprep.mubr.bf16.mxu0 0
    %1526 = vmatmul.mubr.bf16.gmra.mrb[0].mxu0 %v1488
    %v1527 = vpop.f32.mrb[0].mxu0
    %v1528 = vadd.f32 0.0, %v1527
    %v1529 = vpop.f32.mrb[0].mxu0
    %v1530 = vpop.f32.mrb[0].mxu0
    %v1531 = vpop.f32.mrb[0].mxu0
    %1532 = vdwg.mxu0
    %v1534 = vsel %vm1440, %v1426, 0
    %v1537 = vsel %vm1440, %v1434, 0
    %1539 = vmatprep.subr.bf16.mxu0 0
    %1540 = vmatpush1.bf16.xpose.msra.mxu0 %v1537
    %1541 = vmatprep.subr.bf16.mxu0 0
    %1542 = vmatpush1.bf16.xpose.msra.mxu0 0
    %1543 = vmatprep.subr.bf16.mxu0 0
    %1544 = vmatpush1.bf16.xpose.msra.mxu0 0
    %1545 = vmatprep.subr.bf16.mxu0 0
    %1546 = vmatpush1.bf16.xpose.msra.mxu0 0
    %1547 = vmatprep.subr.bf16.mxu0 0
    %1548 = vmatpush1.bf16.xpose.msra.mxu0 0
    %1549 = vmatprep.subr.bf16.mxu0 0
    %1550 = vmatpush1.bf16.xpose.msra.mxu0 0
    %1551 = vmatprep.subr.bf16.mxu0 0
    %1552 = vmatpush1.bf16.xpose.msra.mxu0 0
    %1553 = vmatprep.subr.bf16.mxu0 0
    %1554 = vmatpush1.bf16.xpose.msra.mxu0 0
    %1555 = vmatprep.subr.bf16.mxu0 0
    %1556 = vmatpush1.bf16.xpose.msra.mxu0 0
    %1557 = vmatprep.subr.bf16.mxu0 0
    %1558 = vmatpush1.bf16.xpose.msra.mxu0 0
    %1559 = vmatprep.subr.bf16.mxu0 0
    %1560 = vmatpush1.bf16.xpose.msra.mxu0 0
    %1561 = vmatprep.subr.bf16.mxu0 0
    %1562 = vmatpush1.bf16.xpose.msra.mxu0 0
    %1563 = vmatprep.subr.bf16.mxu0 0
    %1564 = vmatpush1.bf16.xpose.msra.mxu0 0
    %1565 = vmatprep.subr.bf16.mxu0 0
    %1566 = vmatpush1.bf16.xpose.msra.mxu0 0
    %1567 = vmatprep.subr.bf16.mxu0 0
    %1568 = vmatpush1.bf16.xpose.msra.mxu0 0
    %1569 = vmatprep.subr.bf16.mxu0 0
    %1570 = vmatpush1.bf16.xpose.msra.mxu0 0
    %1571 = vmatprep.mubr.bf16.mxu0 0
    %1572 = vmatmul.mubr.bf16.gmra.mrb[0].mxu0 %v1534
    %v1573 = vpop.f32.mrb[0].mxu0
    %v1574 = vadd.f32 0.0, %v1573
    %v1575 = vpop.f32.mrb[0].mxu0
    %v1576 = vpop.f32.mrb[0].mxu0
    %v1577 = vpop.f32.mrb[0].mxu0
    %1578 = vdwg.mxu0
    %v1580 = vsel %vm1440, %v1427, 0
    %v1583 = vsel %vm1440, %v1435, 0
    %1585 = vmatprep.subr.bf16.mxu0 0
    %1586 = vmatpush1.bf16.xpose.msra.mxu0 %v1583
    %1587 = vmatprep.subr.bf16.mxu0 0
    %1588 = vmatpush1.bf16.xpose.msra.mxu0 0
    %1589 = vmatprep.subr.bf16.mxu0 0
    %1590 = vmatpush1.bf16.xpose.msra.mxu0 0
    %1591 = vmatprep.subr.bf16.mxu0 0
    %1592 = vmatpush1.bf16.xpose.msra.mxu0 0
    %1593 = vmatprep.subr.bf16.mxu0 0
    %1594 = vmatpush1.bf16.xpose.msra.mxu0 0
    %1595 = vmatprep.subr.bf16.mxu0 0
    %1596 = vmatpush1.bf16.xpose.msra.mxu0 0
    %1597 = vmatprep.subr.bf16.mxu0 0
    %1598 = vmatpush1.bf16.xpose.msra.mxu0 0
    %1599 = vmatprep.subr.bf16.mxu0 0
    %1600 = vmatpush1.bf16.xpose.msra.mxu0 0
    %1601 = vmatprep.subr.bf16.mxu0 0
    %1602 = vmatpush1.bf16.xpose.msra.mxu0 0
    %1603 = vmatprep.subr.bf16.mxu0 0
    %1604 = vmatpush1.bf16.xpose.msra.mxu0 0
    %1605 = vmatprep.subr.bf16.mxu0 0
    %1606 = vmatpush1.bf16.xpose.msra.mxu0 0
    %1607 = vmatprep.subr.bf16.mxu0 0
    %1608 = vmatpush1.bf16.xpose.msra.mxu0 0
    %1609 = vmatprep.subr.bf16.mxu0 0
    %1610 = vmatpush1.bf16.xpose.msra.mxu0 0
    %1611 = vmatprep.subr.bf16.mxu0 0
    %1612 = vmatpush1.bf16.xpose.msra.mxu0 0
    %1613 = vmatprep.subr.bf16.mxu0 0
    %1614 = vmatpush1.bf16.xpose.msra.mxu0 0
    %1615 = vmatprep.subr.bf16.mxu0 0
    %1616 = vmatpush1.bf16.xpose.msra.mxu0 0
    %1617 = vmatprep.mubr.bf16.mxu0 0
    %1618 = vmatmul.mubr.bf16.gmra.mrb[0].mxu0 %v1580
    %v1619 = vpop.f32.mrb[0].mxu0
    %v1620 = vadd.f32 0.0, %v1619
    %v1621 = vpop.f32.mrb[0].mxu0
    %v1622 = vpop.f32.mrb[0].mxu0
    %v1623 = vpop.f32.mrb[0].mxu0
    %1624 = vdwg.mxu0
    %v1626 = vsel %vm1440, %v1428, 0
    %v1629 = vsel %vm1440, %v1436, 0
    %1631 = vmatprep.subr.bf16.mxu0 0
    %1632 = vmatpush1.bf16.xpose.msra.mxu0 %v1629
    %1633 = vmatprep.subr.bf16.mxu0 0
    %1634 = vmatpush1.bf16.xpose.msra.mxu0 0
    %1635 = vmatprep.subr.bf16.mxu0 0
    %1636 = vmatpush1.bf16.xpose.msra.mxu0 0
    %1637 = vmatprep.subr.bf16.mxu0 0
    %1638 = vmatpush1.bf16.xpose.msra.mxu0 0
    %1639 = vmatprep.subr.bf16.mxu0 0
    %1640 = vmatpush1.bf16.xpose.msra.mxu0 0
    %1641 = vmatprep.subr.bf16.mxu0 0
    %1642 = vmatpush1.bf16.xpose.msra.mxu0 0
    %1643 = vmatprep.subr.bf16.mxu0 0
    %1644 = vmatpush1.bf16.xpose.msra.mxu0 0
    %1645 = vmatprep.subr.bf16.mxu0 0
    %1646 = vmatpush1.bf16.xpose.msra.mxu0 0
    %1647 = vmatprep.subr.bf16.mxu0 0
    %1648 = vmatpush1.bf16.xpose.msra.mxu0 0
    %1649 = vmatprep.subr.bf16.mxu0 0
    %1650 = vmatpush1.bf16.xpose.msra.mxu0 0
    %1651 = vmatprep.subr.bf16.mxu0 0
    %1652 = vmatpush1.bf16.xpose.msra.mxu0 0
    %1653 = vmatprep.subr.bf16.mxu0 0
    %1654 = vmatpush1.bf16.xpose.msra.mxu0 0
    %1655 = vmatprep.subr.bf16.mxu0 0
    %1656 = vmatpush1.bf16.xpose.msra.mxu0 0
    %1657 = vmatprep.subr.bf16.mxu0 0
    %1658 = vmatpush1.bf16.xpose.msra.mxu0 0
    %1659 = vmatprep.subr.bf16.mxu0 0
    %1660 = vmatpush1.bf16.xpose.msra.mxu0 0
    %1661 = vmatprep.subr.bf16.mxu0 0
    %1662 = vmatpush1.bf16.xpose.msra.mxu0 0
    %1663 = vmatprep.mubr.bf16.mxu0 0
    %1664 = vmatmul.mubr.bf16.gmra.mrb[0].mxu0 %v1626
    %v1665 = vpop.f32.mrb[0].mxu0
    %v1666 = vadd.f32 0.0, %v1665
    %v1667 = vpop.f32.mrb[0].mxu0
    %v1668 = vpop.f32.mrb[0].mxu0
    %v1669 = vpop.f32.mrb[0].mxu0
    %1670 = vdwg.mxu0
    %v1672 = vsel %vm1440, %v1429, 0
    %v1675 = vsel %vm1440, %v1437, 0
    %1677 = vmatprep.subr.bf16.mxu0 0
    %1678 = vmatpush1.bf16.xpose.msra.mxu0 %v1675
    %1679 = vmatprep.subr.bf16.mxu0 0
    %1680 = vmatpush1.bf16.xpose.msra.mxu0 0
    %1681 = vmatprep.subr.bf16.mxu0 0
    %1682 = vmatpush1.bf16.xpose.msra.mxu0 0
    %1683 = vmatprep.subr.bf16.mxu0 0
    %1684 = vmatpush1.bf16.xpose.msra.mxu0 0
    %1685 = vmatprep.subr.bf16.mxu0 0
    %1686 = vmatpush1.bf16.xpose.msra.mxu0 0
    %1687 = vmatprep.subr.bf16.mxu0 0
    %1688 = vmatpush1.bf16.xpose.msra.mxu0 0
    %1689 = vmatprep.subr.bf16.mxu0 0
    %1690 = vmatpush1.bf16.xpose.msra.mxu0 0
    %1691 = vmatprep.subr.bf16.mxu0 0
    %1692 = vmatpush1.bf16.xpose.msra.mxu0 0
    %1693 = vmatprep.subr.bf16.mxu0 0
    %1694 = vmatpush1.bf16.xpose.msra.mxu0 0
    %1695 = vmatprep.subr.bf16.mxu0 0
    %1696 = vmatpush1.bf16.xpose.msra.mxu0 0
    %1697 = vmatprep.subr.bf16.mxu0 0
    %1698 = vmatpush1.bf16.xpose.msra.mxu0 0
    %1699 = vmatprep.subr.bf16.mxu0 0
    %1700 = vmatpush1.bf16.xpose.msra.mxu0 0
    %1701 = vmatprep.subr.bf16.mxu0 0
    %1702 = vmatpush1.bf16.xpose.msra.mxu0 0
    %1703 = vmatprep.subr.bf16.mxu0 0
    %1704 = vmatpush1.bf16.xpose.msra.mxu0 0
    %1705 = vmatprep.subr.bf16.mxu0 0
    %1706 = vmatpush1.bf16.xpose.msra.mxu0 0
    %1707 = vmatprep.subr.bf16.mxu0 0
    %1708 = vmatpush1.bf16.xpose.msra.mxu0 0
    %1709 = vmatprep.mubr.bf16.mxu0 0
    %1710 = vmatmul.mubr.bf16.gmra.mrb[0].mxu0 %v1672
    %v1711 = vpop.f32.mrb[0].mxu0
    %v1712 = vadd.f32 0.0, %v1711
    %v1713 = vpop.f32.mrb[0].mxu0
    %v1714 = vpop.f32.mrb[0].mxu0
    %v1715 = vpop.f32.mrb[0].mxu0
    %1716 = vdwg.mxu0
    %v1718 = vsel %vm1440, %v1430, 0
    %v1721 = vsel %vm1440, %v1438, 0
    %1723 = vmatprep.subr.bf16.mxu0 0
    %1724 = vmatpush1.bf16.xpose.msra.mxu0 %v1721
    %1725 = vmatprep.subr.bf16.mxu0 0
    %1726 = vmatpush1.bf16.xpose.msra.mxu0 0
    %1727 = vmatprep.subr.bf16.mxu0 0
    %1728 = vmatpush1.bf16.xpose.msra.mxu0 0
    %1729 = vmatprep.subr.bf16.mxu0 0
    %1730 = vmatpush1.bf16.xpose.msra.mxu0 0
    %1731 = vmatprep.subr.bf16.mxu0 0
    %1732 = vmatpush1.bf16.xpose.msra.mxu0 0
    %1733 = vmatprep.subr.bf16.mxu0 0
    %1734 = vmatpush1.bf16.xpose.msra.mxu0 0
    %1735 = vmatprep.subr.bf16.mxu0 0
    %1736 = vmatpush1.bf16.xpose.msra.mxu0 0
    %1737 = vmatprep.subr.bf16.mxu0 0
    %1738 = vmatpush1.bf16.xpose.msra.mxu0 0
    %1739 = vmatprep.subr.bf16.mxu0 0
    %1740 = vmatpush1.bf16.xpose.msra.mxu0 0
    %1741 = vmatprep.subr.bf16.mxu0 0
    %1742 = vmatpush1.bf16.xpose.msra.mxu0 0
    %1743 = vmatprep.subr.bf16.mxu0 0
    %1744 = vmatpush1.bf16.xpose.msra.mxu0 0
    %1745 = vmatprep.subr.bf16.mxu0 0
    %1746 = vmatpush1.bf16.xpose.msra.mxu0 0
    %1747 = vmatprep.subr.bf16.mxu0 0
    %1748 = vmatpush1.bf16.xpose.msra.mxu0 0
    %1749 = vmatprep.subr.bf16.mxu0 0
    %1750 = vmatpush1.bf16.xpose.msra.mxu0 0
    %1751 = vmatprep.subr.bf16.mxu0 0
    %1752 = vmatpush1.bf16.xpose.msra.mxu0 0
    %1753 = vmatprep.subr.bf16.mxu0 0
    %1754 = vmatpush1.bf16.xpose.msra.mxu0 0
    %1755 = vmatprep.mubr.bf16.mxu0 0
    %1756 = vmatmul.mubr.bf16.gmra.mrb[0].mxu0 %v1718
    %v1757 = vpop.f32.mrb[0].mxu0
    %v1758 = vadd.f32 0.0, %v1757
    %v1759 = vpop.f32.mrb[0].mxu0
    %v1760 = vpop.f32.mrb[0].mxu0
    %v1761 = vpop.f32.mrb[0].mxu0
    %1762 = vdwg.mxu0
    %v1764 = vsel %vm1440, %v1431, 0
    %v1767 = vsel %vm1440, %v1439, 0
    %1769 = vmatprep.subr.bf16.mxu0 0
    %1770 = vmatpush1.bf16.xpose.msra.mxu0 %v1767
    %1771 = vmatprep.subr.bf16.mxu0 0
    %1772 = vmatpush1.bf16.xpose.msra.mxu0 0
    %1773 = vmatprep.subr.bf16.mxu0 0
    %1774 = vmatpush1.bf16.xpose.msra.mxu0 0
    %1775 = vmatprep.subr.bf16.mxu0 0
    %1776 = vmatpush1.bf16.xpose.msra.mxu0 0
    %1777 = vmatprep.subr.bf16.mxu0 0
    %1778 = vmatpush1.bf16.xpose.msra.mxu0 0
    %1779 = vmatprep.subr.bf16.mxu0 0
    %1780 = vmatpush1.bf16.xpose.msra.mxu0 0
    %1781 = vmatprep.subr.bf16.mxu0 0
    %1782 = vmatpush1.bf16.xpose.msra.mxu0 0
    %1783 = vmatprep.subr.bf16.mxu0 0
    %1784 = vmatpush1.bf16.xpose.msra.mxu0 0
    %1785 = vmatprep.subr.bf16.mxu0 0
    %1786 = vmatpush1.bf16.xpose.msra.mxu0 0
    %1787 = vmatprep.subr.bf16.mxu0 0
    %1788 = vmatpush1.bf16.xpose.msra.mxu0 0
    %1789 = vmatprep.subr.bf16.mxu0 0
    %1790 = vmatpush1.bf16.xpose.msra.mxu0 0
    %1791 = vmatprep.subr.bf16.mxu0 0
    %1792 = vmatpush1.bf16.xpose.msra.mxu0 0
    %1793 = vmatprep.subr.bf16.mxu0 0
    %1794 = vmatpush1.bf16.xpose.msra.mxu0 0
    %1795 = vmatprep.subr.bf16.mxu0 0
    %1796 = vmatpush1.bf16.xpose.msra.mxu0 0
    %1797 = vmatprep.subr.bf16.mxu0 0
    %1798 = vmatpush1.bf16.xpose.msra.mxu0 0
    %1799 = vmatprep.subr.bf16.mxu0 0
    %1800 = vmatpush1.bf16.xpose.msra.mxu0 0
    %1801 = vmatprep.mubr.bf16.mxu0 0
    %1802 = vmatmul.mubr.bf16.gmra.mrb[0].mxu0 %v1764
    %v1803 = vpop.f32.mrb[0].mxu0
    %v1804 = vadd.f32 0.0, %v1803
    %v1805 = vpop.f32.mrb[0].mxu0
    %v1806 = vpop.f32.mrb[0].mxu0
    %v1807 = vpop.f32.mrb[0].mxu0
    %1808 = vdwg.mxu0
    %v1809 = vmul.f32 %v1482, 0.35355338
    %v1810 = vmul.f32 %v1528, 0.35355338
    %v1811 = vmul.f32 %v1574, 0.35355338
    %v1812 = vmul.f32 %v1620, 0.35355338
    %v1813 = vmul.f32 %v1666, 0.35355338
    %v1814 = vmul.f32 %v1712, 0.35355338
    %v1815 = vmul.f32 %v1758, 0.35355338
    %v1816 = vmul.f32 %v1804, 0.35355338
    %v1817 = vsel %vm1440, %v1809, -inf
    %1818 = vmax.xlane.f32.xlu0 %v1817
    %v1819 = vpop.xlane.xlu0 %1818
    %v1820 = vsel %vm1440, %v1810, -inf
    %1821 = vmax.xlane.f32.xlu0 %v1820
    %v1822 = vpop.xlane.xlu0 %1821
    %v1823 = vsel %vm1440, %v1811, -inf
    %1824 = vmax.xlane.f32.xlu0 %v1823
    %v1825 = vpop.xlane.xlu0 %1824
    %v1826 = vsel %vm1440, %v1812, -inf
    %1827 = vmax.xlane.f32.xlu0 %v1826
    %v1828 = vpop.xlane.xlu0 %1827
    %v1829 = vsel %vm1440, %v1813, -inf
    %1830 = vmax.xlane.f32.xlu0 %v1829
    %v1831 = vpop.xlane.xlu0 %1830
    %v1832 = vsel %vm1440, %v1814, -inf
    %1833 = vmax.xlane.f32.xlu0 %v1832
    %v1834 = vpop.xlane.xlu0 %1833
    %v1835 = vsel %vm1440, %v1815, -inf
    %1836 = vmax.xlane.f32.xlu0 %v1835
    %v1837 = vpop.xlane.xlu0 %1836
    %v1838 = vsel %vm1440, %v1816, -inf
    %1839 = vmax.xlane.f32.xlu0 %v1838
    %v1840 = vpop.xlane.xlu0 %1839
    %v1841 = vsub.f32 %v1809, %v1819
    %v1842 = vsub.f32 %v1810, %v1822
    %v1843 = vsub.f32 %v1811, %v1825
    %v1844 = vsub.f32 %v1812, %v1828
    %v1845 = vsub.f32 %v1813, %v1831
    %v1846 = vsub.f32 %v1814, %v1834
    %v1847 = vsub.f32 %v1815, %v1837
    %v1848 = vsub.f32 %v1816, %v1840
    %v1849 = vmul.f32 %v1841, 1.442695
    %v1850 = vpow.pop %v1849
    %v1851 = vmul.f32 %v1842, 1.442695
    %v1852 = vpow.pop %v1851
    %v1853 = vmul.f32 %v1843, 1.442695
    %v1854 = vpow.pop %v1853
    %v1855 = vmul.f32 %v1844, 1.442695
    %v1856 = vpow.pop %v1855
    %v1857 = vmul.f32 %v1845, 1.442695
    %v1858 = vpow.pop %v1857
    %v1859 = vmul.f32 %v1846, 1.442695
    %v1860 = vpow.pop %v1859
    %v1861 = vmul.f32 %v1847, 1.442695
    %v1862 = vpow.pop %v1861
    %v1863 = vmul.f32 %v1848, 1.442695
    %v1864 = vpow.pop %v1863
    %v1865 = vsel %vm1440, %v1850, 0.0
    %1866 = vadd.xlane.f32.xlu0 %v1865
    %v1867 = vpop.xlane.xlu0 %1866
    %v1868 = vsel %vm1440, %v1852, 0.0
    %1869 = vadd.xlane.f32.xlu0 %v1868
    %v1870 = vpop.xlane.xlu0 %1869
    %v1871 = vsel %vm1440, %v1854, 0.0
    %1872 = vadd.xlane.f32.xlu0 %v1871
    %v1873 = vpop.xlane.xlu0 %1872
    %v1874 = vsel %vm1440, %v1856, 0.0
    %1875 = vadd.xlane.f32.xlu0 %v1874
    %v1876 = vpop.xlane.xlu0 %1875
    %v1877 = vsel %vm1440, %v1858, 0.0
    %1878 = vadd.xlane.f32.xlu0 %v1877
    %v1879 = vpop.xlane.xlu0 %1878
    %v1880 = vsel %vm1440, %v1860, 0.0
    %1881 = vadd.xlane.f32.xlu0 %v1880
    %v1882 = vpop.xlane.xlu0 %1881
    %v1883 = vsel %vm1440, %v1862, 0.0
    %1884 = vadd.xlane.f32.xlu0 %v1883
    %v1885 = vpop.xlane.xlu0 %1884
    %v1886 = vsel %vm1440, %v1864, 0.0
    %1887 = vadd.xlane.f32.xlu0 %v1886
    %v1888 = vpop.xlane.xlu0 %1887
    %v1889 = vrcp.pop %v1867
    %v1890 = vmul.f32 %v1850, %v1889
    %v1891 = vrcp.pop %v1870
    %v1892 = vmul.f32 %v1852, %v1891
    %v1893 = vrcp.pop %v1873
    %v1894 = vmul.f32 %v1854, %v1893
    %v1895 = vrcp.pop %v1876
    %v1896 = vmul.f32 %v1856, %v1895
    %v1897 = vrcp.pop %v1879
    %v1898 = vmul.f32 %v1858, %v1897
    %v1899 = vrcp.pop %v1882
    %v1900 = vmul.f32 %v1860, %v1899
    %v1901 = vrcp.pop %v1885
    %v1902 = vmul.f32 %v1862, %v1901
    %v1903 = vrcp.pop %v1888
    %v1904 = vmul.f32 %v1864, %v1903
    %v1905 = vpack.c.bf16 %v1890, %v1890
    %v1906 = vpack.c.bf16 %v1892, %v1892
    %v1907 = vpack.c.bf16 %v1894, %v1894
    %v1908 = vpack.c.bf16 %v1896, %v1896
    %v1909 = vpack.c.bf16 %v1898, %v1898
    %v1910 = vpack.c.bf16 %v1900, %v1900
    %v1911 = vpack.c.bf16 %v1902, %v1902
    %v1912 = vpack.c.bf16 %v1904, %v1904
    %v1913 = vpack.c.bf16 %v1103, %v1103
    %v1914 = vpack.c.bf16 %v1155, %v1155
    %v1915 = vpack.c.bf16 %v1207, %v1207
    %v1916 = vpack.c.bf16 %v1259, %v1259
    %v1917 = vpack.c.bf16 %v1299, %v1299
    %v1918 = vpack.c.bf16 %v1339, %v1339
    %v1919 = vpack.c.bf16 %v1379, %v1379
    %v1920 = vpack.c.bf16 %v1419, %v1419
    %v1922 = vsel %vm1440, %v1905, 0
    %vm1924 = vcmask 1043456
    %v1926 = vsel %vm1924, %v1913, 0
    %1928 = vmatprep.subr.bf16.mxu0 0
    %1929 = vmatpush1.bf16.msra.mxu0 %v1926
    %1930 = vmatprep.subr.bf16.mxu0 0
    %1931 = vmatpush1.bf16.msra.mxu0 0
    %1932 = vmatprep.subr.bf16.mxu0 0
    %1933 = vmatpush1.bf16.msra.mxu0 0
    %1934 = vmatprep.subr.bf16.mxu0 0
    %1935 = vmatpush1.bf16.msra.mxu0 0
    %1936 = vmatprep.subr.bf16.mxu0 0
    %1937 = vmatpush1.bf16.msra.mxu0 0
    %1938 = vmatprep.subr.bf16.mxu0 0
    %1939 = vmatpush1.bf16.msra.mxu0 0
    %1940 = vmatprep.subr.bf16.mxu0 0
    %1941 = vmatpush1.bf16.msra.mxu0 0
    %1942 = vmatprep.subr.bf16.mxu0 0
    %1943 = vmatpush1.bf16.msra.mxu0 0
    %1944 = vmatprep.subr.bf16.mxu0 0
    %1945 = vmatpush1.bf16.msra.mxu0 0
    %1946 = vmatprep.subr.bf16.mxu0 0
    %1947 = vmatpush1.bf16.msra.mxu0 0
    %1948 = vmatprep.subr.bf16.mxu0 0
    %1949 = vmatpush1.bf16.msra.mxu0 0
    %1950 = vmatprep.subr.bf16.mxu0 0
    %1951 = vmatpush1.bf16.msra.mxu0 0
    %1952 = vmatprep.subr.bf16.mxu0 0
    %1953 = vmatpush1.bf16.msra.mxu0 0
    %1954 = vmatprep.subr.bf16.mxu0 0
    %1955 = vmatpush1.bf16.msra.mxu0 0
    %1956 = vmatprep.subr.bf16.mxu0 0
    %1957 = vmatpush1.bf16.msra.mxu0 0
    %1958 = vmatprep.subr.bf16.mxu0 0
    %1959 = vmatpush1.bf16.msra.mxu0 0
    %1960 = vmatprep.mubr.bf16.mxu0 0
    %1961 = vmatmul.mubr.bf16.gmra.mrb[0].mxu0 %v1922
    %v1962 = vpop.f32.mrb[0].mxu0
    %v1963 = vadd.f32 0.0, %v1962
    %v1964 = vpop.f32.mrb[0].mxu0
    %v1965 = vpop.f32.mrb[0].mxu0
    %v1966 = vpop.f32.mrb[0].mxu0
    %1967 = vdwg.mxu0
    %v1969 = vsel %vm1440, %v1906, 0
    %v1972 = vsel %vm1924, %v1914, 0
    %1974 = vmatprep.subr.bf16.mxu0 0
    %1975 = vmatpush1.bf16.msra.mxu0 %v1972
    %1976 = vmatprep.subr.bf16.mxu0 0
    %1977 = vmatpush1.bf16.msra.mxu0 0
    %1978 = vmatprep.subr.bf16.mxu0 0
    %1979 = vmatpush1.bf16.msra.mxu0 0
    %1980 = vmatprep.subr.bf16.mxu0 0
    %1981 = vmatpush1.bf16.msra.mxu0 0
    %1982 = vmatprep.subr.bf16.mxu0 0
    %1983 = vmatpush1.bf16.msra.mxu0 0
    %1984 = vmatprep.subr.bf16.mxu0 0
    %1985 = vmatpush1.bf16.msra.mxu0 0
    %1986 = vmatprep.subr.bf16.mxu0 0
    %1987 = vmatpush1.bf16.msra.mxu0 0
    %1988 = vmatprep.subr.bf16.mxu0 0
    %1989 = vmatpush1.bf16.msra.mxu0 0
    %1990 = vmatprep.subr.bf16.mxu0 0
    %1991 = vmatpush1.bf16.msra.mxu0 0
    %1992 = vmatprep.subr.bf16.mxu0 0
    %1993 = vmatpush1.bf16.msra.mxu0 0
    %1994 = vmatprep.subr.bf16.mxu0 0
    %1995 = vmatpush1.bf16.msra.mxu0 0
    %1996 = vmatprep.subr.bf16.mxu0 0
    %1997 = vmatpush1.bf16.msra.mxu0 0
    %1998 = vmatprep.subr.bf16.mxu0 0
    %1999 = vmatpush1.bf16.msra.mxu0 0
    %2000 = vmatprep.subr.bf16.mxu0 0
    %2001 = vmatpush1.bf16.msra.mxu0 0
    %2002 = vmatprep.subr.bf16.mxu0 0
    %2003 = vmatpush1.bf16.msra.mxu0 0
    %2004 = vmatprep.subr.bf16.mxu0 0
    %2005 = vmatpush1.bf16.msra.mxu0 0
    %2006 = vmatprep.mubr.bf16.mxu0 0
    %2007 = vmatmul.mubr.bf16.gmra.mrb[0].mxu0 %v1969
    %v2008 = vpop.f32.mrb[0].mxu0
    %v2009 = vadd.f32 0.0, %v2008
    %v2010 = vpop.f32.mrb[0].mxu0
    %v2011 = vpop.f32.mrb[0].mxu0
    %v2012 = vpop.f32.mrb[0].mxu0
    %2013 = vdwg.mxu0
    %v2015 = vsel %vm1440, %v1907, 0
    %v2018 = vsel %vm1924, %v1915, 0
    %2020 = vmatprep.subr.bf16.mxu0 0
    %2021 = vmatpush1.bf16.msra.mxu0 %v2018
    %2022 = vmatprep.subr.bf16.mxu0 0
    %2023 = vmatpush1.bf16.msra.mxu0 0
    %2024 = vmatprep.subr.bf16.mxu0 0
    %2025 = vmatpush1.bf16.msra.mxu0 0
    %2026 = vmatprep.subr.bf16.mxu0 0
    %2027 = vmatpush1.bf16.msra.mxu0 0
    %2028 = vmatprep.subr.bf16.mxu0 0
    %2029 = vmatpush1.bf16.msra.mxu0 0
    %2030 = vmatprep.subr.bf16.mxu0 0
    %2031 = vmatpush1.bf16.msra.mxu0 0
    %2032 = vmatprep.subr.bf16.mxu0 0
    %2033 = vmatpush1.bf16.msra.mxu0 0
    %2034 = vmatprep.subr.bf16.mxu0 0
    %2035 = vmatpush1.bf16.msra.mxu0 0
    %2036 = vmatprep.subr.bf16.mxu0 0
    %2037 = vmatpush1.bf16.msra.mxu0 0
    %2038 = vmatprep.subr.bf16.mxu0 0
    %2039 = vmatpush1.bf16.msra.mxu0 0
    %2040 = vmatprep.subr.bf16.mxu0 0
    %2041 = vmatpush1.bf16.msra.mxu0 0
    %2042 = vmatprep.subr.bf16.mxu0 0
    %2043 = vmatpush1.bf16.msra.mxu0 0
    %2044 = vmatprep.subr.bf16.mxu0 0
    %2045 = vmatpush1.bf16.msra.mxu0 0
    %2046 = vmatprep.subr.bf16.mxu0 0
    %2047 = vmatpush1.bf16.msra.mxu0 0
    %2048 = vmatprep.subr.bf16.mxu0 0
    %2049 = vmatpush1.bf16.msra.mxu0 0
    %2050 = vmatprep.subr.bf16.mxu0 0
    %2051 = vmatpush1.bf16.msra.mxu0 0
    %2052 = vmatprep.mubr.bf16.mxu0 0
    %2053 = vmatmul.mubr.bf16.gmra.mrb[0].mxu0 %v2015
    %v2054 = vpop.f32.mrb[0].mxu0
    %v2055 = vadd.f32 0.0, %v2054
    %v2056 = vpop.f32.mrb[0].mxu0
    %v2057 = vpop.f32.mrb[0].mxu0
    %v2058 = vpop.f32.mrb[0].mxu0
    %2059 = vdwg.mxu0
    %v2061 = vsel %vm1440, %v1908, 0
    %v2064 = vsel %vm1924, %v1916, 0
    %2066 = vmatprep.subr.bf16.mxu0 0
    %2067 = vmatpush1.bf16.msra.mxu0 %v2064
    %2068 = vmatprep.subr.bf16.mxu0 0
    %2069 = vmatpush1.bf16.msra.mxu0 0
    %2070 = vmatprep.subr.bf16.mxu0 0
    %2071 = vmatpush1.bf16.msra.mxu0 0
    %2072 = vmatprep.subr.bf16.mxu0 0
    %2073 = vmatpush1.bf16.msra.mxu0 0
    %2074 = vmatprep.subr.bf16.mxu0 0
    %2075 = vmatpush1.bf16.msra.mxu0 0
    %2076 = vmatprep.subr.bf16.mxu0 0
    %2077 = vmatpush1.bf16.msra.mxu0 0
    %2078 = vmatprep.subr.bf16.mxu0 0
    %2079 = vmatpush1.bf16.msra.mxu0 0
    %2080 = vmatprep.subr.bf16.mxu0 0
    %2081 = vmatpush1.bf16.msra.mxu0 0
    %2082 = vmatprep.subr.bf16.mxu0 0
    %2083 = vmatpush1.bf16.msra.mxu0 0
    %2084 = vmatprep.subr.bf16.mxu0 0
    %2085 = vmatpush1.bf16.msra.mxu0 0
    %2086 = vmatprep.subr.bf16.mxu0 0
    %2087 = vmatpush1.bf16.msra.mxu0 0
    %2088 = vmatprep.subr.bf16.mxu0 0
    %2089 = vmatpush1.bf16.msra.mxu0 0
    %2090 = vmatprep.subr.bf16.mxu0 0
    %2091 = vmatpush1.bf16.msra.mxu0 0
    %2092 = vmatprep.subr.bf16.mxu0 0
    %2093 = vmatpush1.bf16.msra.mxu0 0
    %2094 = vmatprep.subr.bf16.mxu0 0
    %2095 = vmatpush1.bf16.msra.mxu0 0
    %2096 = vmatprep.subr.bf16.mxu0 0
    %2097 = vmatpush1.bf16.msra.mxu0 0
    %2098 = vmatprep.mubr.bf16.mxu0 0
    %2099 = vmatmul.mubr.bf16.gmra.mrb[0].mxu0 %v2061
    %v2100 = vpop.f32.mrb[0].mxu0
    %v2101 = vadd.f32 0.0, %v2100
    %v2102 = vpop.f32.mrb[0].mxu0
    %v2103 = vpop.f32.mrb[0].mxu0
    %v2104 = vpop.f32.mrb[0].mxu0
    %2105 = vdwg.mxu0
    %v2107 = vsel %vm1440, %v1909, 0
    %v2110 = vsel %vm1924, %v1917, 0
    %2112 = vmatprep.subr.bf16.mxu0 0
    %2113 = vmatpush1.bf16.msra.mxu0 %v2110
    %2114 = vmatprep.subr.bf16.mxu0 0
    %2115 = vmatpush1.bf16.msra.mxu0 0
    %2116 = vmatprep.subr.bf16.mxu0 0
    %2117 = vmatpush1.bf16.msra.mxu0 0
    %2118 = vmatprep.subr.bf16.mxu0 0
    %2119 = vmatpush1.bf16.msra.mxu0 0
    %2120 = vmatprep.subr.bf16.mxu0 0
    %2121 = vmatpush1.bf16.msra.mxu0 0
    %2122 = vmatprep.subr.bf16.mxu0 0
    %2123 = vmatpush1.bf16.msra.mxu0 0
    %2124 = vmatprep.subr.bf16.mxu0 0
    %2125 = vmatpush1.bf16.msra.mxu0 0
    %2126 = vmatprep.subr.bf16.mxu0 0
    %2127 = vmatpush1.bf16.msra.mxu0 0
    %2128 = vmatprep.subr.bf16.mxu0 0
    %2129 = vmatpush1.bf16.msra.mxu0 0
    %2130 = vmatprep.subr.bf16.mxu0 0
    %2131 = vmatpush1.bf16.msra.mxu0 0
    %2132 = vmatprep.subr.bf16.mxu0 0
    %2133 = vmatpush1.bf16.msra.mxu0 0
    %2134 = vmatprep.subr.bf16.mxu0 0
    %2135 = vmatpush1.bf16.msra.mxu0 0
    %2136 = vmatprep.subr.bf16.mxu0 0
    %2137 = vmatpush1.bf16.msra.mxu0 0
    %2138 = vmatprep.subr.bf16.mxu0 0
    %2139 = vmatpush1.bf16.msra.mxu0 0
    %2140 = vmatprep.subr.bf16.mxu0 0
    %2141 = vmatpush1.bf16.msra.mxu0 0
    %2142 = vmatprep.subr.bf16.mxu0 0
    %2143 = vmatpush1.bf16.msra.mxu0 0
    %2144 = vmatprep.mubr.bf16.mxu0 0
    %2145 = vmatmul.mubr.bf16.gmra.mrb[0].mxu0 %v2107
    %v2146 = vpop.f32.mrb[0].mxu0
    %v2147 = vadd.f32 0.0, %v2146
    %v2148 = vpop.f32.mrb[0].mxu0
    %v2149 = vpop.f32.mrb[0].mxu0
    %v2150 = vpop.f32.mrb[0].mxu0
    %2151 = vdwg.mxu0
    %v2153 = vsel %vm1440, %v1910, 0
    %v2156 = vsel %vm1924, %v1918, 0
    %2158 = vmatprep.subr.bf16.mxu0 0
    %2159 = vmatpush1.bf16.msra.mxu0 %v2156
    %2160 = vmatprep.subr.bf16.mxu0 0
    %2161 = vmatpush1.bf16.msra.mxu0 0
    %2162 = vmatprep.subr.bf16.mxu0 0
    %2163 = vmatpush1.bf16.msra.mxu0 0
    %2164 = vmatprep.subr.bf16.mxu0 0
    %2165 = vmatpush1.bf16.msra.mxu0 0
    %2166 = vmatprep.subr.bf16.mxu0 0
    %2167 = vmatpush1.bf16.msra.mxu0 0
    %2168 = vmatprep.subr.bf16.mxu0 0
    %2169 = vmatpush1.bf16.msra.mxu0 0
    %2170 = vmatprep.subr.bf16.mxu0 0
    %2171 = vmatpush1.bf16.msra.mxu0 0
    %2172 = vmatprep.subr.bf16.mxu0 0
    %2173 = vmatpush1.bf16.msra.mxu0 0
    %2174 = vmatprep.subr.bf16.mxu0 0
    %2175 = vmatpush1.bf16.msra.mxu0 0
    %2176 = vmatprep.subr.bf16.mxu0 0
    %2177 = vmatpush1.bf16.msra.mxu0 0
    %2178 = vmatprep.subr.bf16.mxu0 0
    %2179 = vmatpush1.bf16.msra.mxu0 0
    %2180 = vmatprep.subr.bf16.mxu0 0
    %2181 = vmatpush1.bf16.msra.mxu0 0
    %2182 = vmatprep.subr.bf16.mxu0 0
    %2183 = vmatpush1.bf16.msra.mxu0 0
    %2184 = vmatprep.subr.bf16.mxu0 0
    %2185 = vmatpush1.bf16.msra.mxu0 0
    %2186 = vmatprep.subr.bf16.mxu0 0
    %2187 = vmatpush1.bf16.msra.mxu0 0
    %2188 = vmatprep.subr.bf16.mxu0 0
    %2189 = vmatpush1.bf16.msra.mxu0 0
    %2190 = vmatprep.mubr.bf16.mxu0 0
    %2191 = vmatmul.mubr.bf16.gmra.mrb[0].mxu0 %v2153
    %v2192 = vpop.f32.mrb[0].mxu0
    %v2193 = vadd.f32 0.0, %v2192
    %v2194 = vpop.f32.mrb[0].mxu0
    %v2195 = vpop.f32.mrb[0].mxu0
    %v2196 = vpop.f32.mrb[0].mxu0
    %2197 = vdwg.mxu0
    %v2199 = vsel %vm1440, %v1911, 0
    %v2202 = vsel %vm1924, %v1919, 0
    %2204 = vmatprep.subr.bf16.mxu0 0
    %2205 = vmatpush1.bf16.msra.mxu0 %v2202
    %2206 = vmatprep.subr.bf16.mxu0 0
    %2207 = vmatpush1.bf16.msra.mxu0 0
    %2208 = vmatprep.subr.bf16.mxu0 0
    %2209 = vmatpush1.bf16.msra.mxu0 0
    %2210 = vmatprep.subr.bf16.mxu0 0
    %2211 = vmatpush1.bf16.msra.mxu0 0
    %2212 = vmatprep.subr.bf16.mxu0 0
    %2213 = vmatpush1.bf16.msra.mxu0 0
    %2214 = vmatprep.subr.bf16.mxu0 0
    %2215 = vmatpush1.bf16.msra.mxu0 0
    %2216 = vmatprep.subr.bf16.mxu0 0
    %2217 = vmatpush1.bf16.msra.mxu0 0
    %2218 = vmatprep.subr.bf16.mxu0 0
    %2219 = vmatpush1.bf16.msra.mxu0 0
    %2220 = vmatprep.subr.bf16.mxu0 0
    %2221 = vmatpush1.bf16.msra.mxu0 0
    %2222 = vmatprep.subr.bf16.mxu0 0
    %2223 = vmatpush1.bf16.msra.mxu0 0
    %2224 = vmatprep.subr.bf16.mxu0 0
    %2225 = vmatpush1.bf16.msra.mxu0 0
    %2226 = vmatprep.subr.bf16.mxu0 0
    %2227 = vmatpush1.bf16.msra.mxu0 0
    %2228 = vmatprep.subr.bf16.mxu0 0
    %2229 = vmatpush1.bf16.msra.mxu0 0
    %2230 = vmatprep.subr.bf16.mxu0 0
    %2231 = vmatpush1.bf16.msra.mxu0 0
    %2232 = vmatprep.subr.bf16.mxu0 0
    %2233 = vmatpush1.bf16.msra.mxu0 0
    %2234 = vmatprep.subr.bf16.mxu0 0
    %2235 = vmatpush1.bf16.msra.mxu0 0
    %2236 = vmatprep.mubr.bf16.mxu0 0
    %2237 = vmatmul.mubr.bf16.gmra.mrb[0].mxu0 %v2199
    %v2238 = vpop.f32.mrb[0].mxu0
    %v2239 = vadd.f32 0.0, %v2238
    %v2240 = vpop.f32.mrb[0].mxu0
    %v2241 = vpop.f32.mrb[0].mxu0
    %v2242 = vpop.f32.mrb[0].mxu0
    %2243 = vdwg.mxu0
    %v2245 = vsel %vm1440, %v1912, 0
    %v2248 = vsel %vm1924, %v1920, 0
    %2250 = vmatprep.subr.bf16.mxu0 0
    %2251 = vmatpush1.bf16.msra.mxu0 %v2248
    %2252 = vmatprep.subr.bf16.mxu0 0
    %2253 = vmatpush1.bf16.msra.mxu0 0
    %2254 = vmatprep.subr.bf16.mxu0 0
    %2255 = vmatpush1.bf16.msra.mxu0 0
    %2256 = vmatprep.subr.bf16.mxu0 0
    %2257 = vmatpush1.bf16.msra.mxu0 0
    %2258 = vmatprep.subr.bf16.mxu0 0
    %2259 = vmatpush1.bf16.msra.mxu0 0
    %2260 = vmatprep.subr.bf16.mxu0 0
    %2261 = vmatpush1.bf16.msra.mxu0 0
    %2262 = vmatprep.subr.bf16.mxu0 0
    %2263 = vmatpush1.bf16.msra.mxu0 0
    %2264 = vmatprep.subr.bf16.mxu0 0
    %2265 = vmatpush1.bf16.msra.mxu0 0
    %2266 = vmatprep.subr.bf16.mxu0 0
    %2267 = vmatpush1.bf16.msra.mxu0 0
    %2268 = vmatprep.subr.bf16.mxu0 0
    %2269 = vmatpush1.bf16.msra.mxu0 0
    %2270 = vmatprep.subr.bf16.mxu0 0
    %2271 = vmatpush1.bf16.msra.mxu0 0
    %2272 = vmatprep.subr.bf16.mxu0 0
    %2273 = vmatpush1.bf16.msra.mxu0 0
    %2274 = vmatprep.subr.bf16.mxu0 0
    %2275 = vmatpush1.bf16.msra.mxu0 0
    %2276 = vmatprep.subr.bf16.mxu0 0
    %2277 = vmatpush1.bf16.msra.mxu0 0
    %2278 = vmatprep.subr.bf16.mxu0 0
    %2279 = vmatpush1.bf16.msra.mxu0 0
    %2280 = vmatprep.subr.bf16.mxu0 0
    %2281 = vmatpush1.bf16.msra.mxu0 0
    %2282 = vmatprep.mubr.bf16.mxu0 0
    %2283 = vmatmul.mubr.bf16.gmra.mrb[0].mxu0 %v2245
    %v2284 = vpop.f32.mrb[0].mxu0
    %v2285 = vadd.f32 0.0, %v2284
    %v2286 = vpop.f32.mrb[0].mxu0
    %v2287 = vpop.f32.mrb[0].mxu0
    %v2288 = vpop.f32.mrb[0].mxu0
    %2289 = vdwg.mxu0
    %v2290 = vld [vmem:[%s6] sm:$0xf]
    %v2291 = vld [vmem:[%s6 + $0x4] sm:$0xf]
    %v2292 = vld [vmem:[%s6 + $0x8] sm:$0xf]
    %v2293 = vld [vmem:[%s6 + $0xc] sm:$0xf]
    %v2294 = vpack.c.bf16 %v1963, %v1963
    %v2295 = vpack.c.bf16 %v2009, %v2009
    %v2296 = vpack.c.bf16 %v2055, %v2055
    %v2297 = vpack.c.bf16 %v2101, %v2101
    %v2298 = vpack.c.bf16 %v2147, %v2147
    %v2299 = vpack.c.bf16 %v2193, %v2193
    %v2300 = vpack.c.bf16 %v2239, %v2239
    %v2301 = vpack.c.bf16 %v2285, %v2285
    %v2303 = vsel %vm1440, %v2294, 0
    %v2306 = vsel %vm1924, %v2290, 0
    %2308 = vmatprep.subr.bf16.mxu0 0
    %2309 = vmatpush1.bf16.msra.mxu0 %v2306
    %2310 = vmatprep.subr.bf16.mxu0 0
    %2311 = vmatpush1.bf16.msra.mxu0 0
    %2312 = vmatprep.subr.bf16.mxu0 0
    %2313 = vmatpush1.bf16.msra.mxu0 0
    %2314 = vmatprep.subr.bf16.mxu0 0
    %2315 = vmatpush1.bf16.msra.mxu0 0
    %2316 = vmatprep.subr.bf16.mxu0 0
    %2317 = vmatpush1.bf16.msra.mxu0 0
    %2318 = vmatprep.subr.bf16.mxu0 0
    %2319 = vmatpush1.bf16.msra.mxu0 0
    %2320 = vmatprep.subr.bf16.mxu0 0
    %2321 = vmatpush1.bf16.msra.mxu0 0
    %2322 = vmatprep.subr.bf16.mxu0 0
    %2323 = vmatpush1.bf16.msra.mxu0 0
    %2324 = vmatprep.subr.bf16.mxu0 0
    %2325 = vmatpush1.bf16.msra.mxu0 0
    %2326 = vmatprep.subr.bf16.mxu0 0
    %2327 = vmatpush1.bf16.msra.mxu0 0
    %2328 = vmatprep.subr.bf16.mxu0 0
    %2329 = vmatpush1.bf16.msra.mxu0 0
    %2330 = vmatprep.subr.bf16.mxu0 0
    %2331 = vmatpush1.bf16.msra.mxu0 0
    %2332 = vmatprep.subr.bf16.mxu0 0
    %2333 = vmatpush1.bf16.msra.mxu0 0
    %2334 = vmatprep.subr.bf16.mxu0 0
    %2335 = vmatpush1.bf16.msra.mxu0 0
    %2336 = vmatprep.subr.bf16.mxu0 0
    %2337 = vmatpush1.bf16.msra.mxu0 0
    %2338 = vmatprep.subr.bf16.mxu0 0
    %2339 = vmatpush1.bf16.msra.mxu0 0
    %2340 = vmatprep.mubr.bf16.mxu0 0
    %2341 = vmatmul.mubr.bf16.gmra.mrb[0].mxu0 %v2303
    %v2342 = vpop.f32.mrb[0].mxu0
    %v2343 = vadd.f32 0.0, %v2342
    %v2344 = vpop.f32.mrb[0].mxu0
    %v2345 = vpop.f32.mrb[0].mxu0
    %v2346 = vpop.f32.mrb[0].mxu0
    %2347 = vdwg.mxu0
    %v2349 = vsel %vm1440, %v2295, 0
    %v2352 = vsel %vm1924, %v2291, 0
    %2354 = vmatprep.subr.bf16.mxu0 0
    %2355 = vmatpush1.bf16.msra.mxu0 %v2352
    %2356 = vmatprep.subr.bf16.mxu0 0
    %2357 = vmatpush1.bf16.msra.mxu0 0
    %2358 = vmatprep.subr.bf16.mxu0 0
    %2359 = vmatpush1.bf16.msra.mxu0 0
    %2360 = vmatprep.subr.bf16.mxu0 0
    %2361 = vmatpush1.bf16.msra.mxu0 0
    %2362 = vmatprep.subr.bf16.mxu0 0
    %2363 = vmatpush1.bf16.msra.mxu0 0
    %2364 = vmatprep.subr.bf16.mxu0 0
    %2365 = vmatpush1.bf16.msra.mxu0 0
    %2366 = vmatprep.subr.bf16.mxu0 0
    %2367 = vmatpush1.bf16.msra.mxu0 0
    %2368 = vmatprep.subr.bf16.mxu0 0
    %2369 = vmatpush1.bf16.msra.mxu0 0
    %2370 = vmatprep.subr.bf16.mxu0 0
    %2371 = vmatpush1.bf16.msra.mxu0 0
    %2372 = vmatprep.subr.bf16.mxu0 0
    %2373 = vmatpush1.bf16.msra.mxu0 0
    %2374 = vmatprep.subr.bf16.mxu0 0
    %2375 = vmatpush1.bf16.msra.mxu0 0
    %2376 = vmatprep.subr.bf16.mxu0 0
    %2377 = vmatpush1.bf16.msra.mxu0 0
    %2378 = vmatprep.subr.bf16.mxu0 0
    %2379 = vmatpush1.bf16.msra.mxu0 0
    %2380 = vmatprep.subr.bf16.mxu0 0
    %2381 = vmatpush1.bf16.msra.mxu0 0
    %2382 = vmatprep.subr.bf16.mxu0 0
    %2383 = vmatpush1.bf16.msra.mxu0 0
    %2384 = vmatprep.subr.bf16.mxu0 0
    %2385 = vmatpush1.bf16.msra.mxu0 0
    %2386 = vmatprep.mubr.bf16.mxu0 0
    %2387 = vmatmul.mubr.bf16.gmra.mrb[0].mxu0 %v2349
    %v2388 = vpop.f32.mrb[0].mxu0
    %v2389 = vadd.f32 0.0, %v2388
    %v2390 = vpop.f32.mrb[0].mxu0
    %v2391 = vpop.f32.mrb[0].mxu0
    %v2392 = vpop.f32.mrb[0].mxu0
    %2393 = vdwg.mxu0
    %v2395 = vsel %vm1440, %v2296, 0
    %v2398 = vsel %vm1924, %v2292, 0
    %2400 = vmatprep.subr.bf16.mxu0 0
    %2401 = vmatpush1.bf16.msra.mxu0 %v2398
    %2402 = vmatprep.subr.bf16.mxu0 0
    %2403 = vmatpush1.bf16.msra.mxu0 0
    %2404 = vmatprep.subr.bf16.mxu0 0
    %2405 = vmatpush1.bf16.msra.mxu0 0
    %2406 = vmatprep.subr.bf16.mxu0 0
    %2407 = vmatpush1.bf16.msra.mxu0 0
    %2408 = vmatprep.subr.bf16.mxu0 0
    %2409 = vmatpush1.bf16.msra.mxu0 0
    %2410 = vmatprep.subr.bf16.mxu0 0
    %2411 = vmatpush1.bf16.msra.mxu0 0
    %2412 = vmatprep.subr.bf16.mxu0 0
    %2413 = vmatpush1.bf16.msra.mxu0 0
    %2414 = vmatprep.subr.bf16.mxu0 0
    %2415 = vmatpush1.bf16.msra.mxu0 0
    %2416 = vmatprep.subr.bf16.mxu0 0
    %2417 = vmatpush1.bf16.msra.mxu0 0
    %2418 = vmatprep.subr.bf16.mxu0 0
    %2419 = vmatpush1.bf16.msra.mxu0 0
    %2420 = vmatprep.subr.bf16.mxu0 0
    %2421 = vmatpush1.bf16.msra.mxu0 0
    %2422 = vmatprep.subr.bf16.mxu0 0
    %2423 = vmatpush1.bf16.msra.mxu0 0
    %2424 = vmatprep.subr.bf16.mxu0 0
    %2425 = vmatpush1.bf16.msra.mxu0 0
    %2426 = vmatprep.subr.bf16.mxu0 0
    %2427 = vmatpush1.bf16.msra.mxu0 0
    %2428 = vmatprep.subr.bf16.mxu0 0
    %2429 = vmatpush1.bf16.msra.mxu0 0
    %2430 = vmatprep.subr.bf16.mxu0 0
    %2431 = vmatpush1.bf16.msra.mxu0 0
    %2432 = vmatprep.mubr.bf16.mxu0 0
    %2433 = vmatmul.mubr.bf16.gmra.mrb[0].mxu0 %v2395
    %v2434 = vpop.f32.mrb[0].mxu0
    %v2435 = vadd.f32 0.0, %v2434
    %v2436 = vpop.f32.mrb[0].mxu0
    %v2437 = vpop.f32.mrb[0].mxu0
    %v2438 = vpop.f32.mrb[0].mxu0
    %2439 = vdwg.mxu0
    %v2441 = vsel %vm1440, %v2297, 0
    %v2444 = vsel %vm1924, %v2293, 0
    %2446 = vmatprep.subr.bf16.mxu0 0
    %2447 = vmatpush1.bf16.msra.mxu0 %v2444
    %2448 = vmatprep.subr.bf16.mxu0 0
    %2449 = vmatpush1.bf16.msra.mxu0 0
    %2450 = vmatprep.subr.bf16.mxu0 0
    %2451 = vmatpush1.bf16.msra.mxu0 0
    %2452 = vmatprep.subr.bf16.mxu0 0
    %2453 = vmatpush1.bf16.msra.mxu0 0
    %2454 = vmatprep.subr.bf16.mxu0 0
    %2455 = vmatpush1.bf16.msra.mxu0 0
    %2456 = vmatprep.subr.bf16.mxu0 0
    %2457 = vmatpush1.bf16.msra.mxu0 0
    %2458 = vmatprep.subr.bf16.mxu0 0
    %2459 = vmatpush1.bf16.msra.mxu0 0
    %2460 = vmatprep.subr.bf16.mxu0 0
    %2461 = vmatpush1.bf16.msra.mxu0 0
    %2462 = vmatprep.subr.bf16.mxu0 0
    %2463 = vmatpush1.bf16.msra.mxu0 0
    %2464 = vmatprep.subr.bf16.mxu0 0
    %2465 = vmatpush1.bf16.msra.mxu0 0
    %2466 = vmatprep.subr.bf16.mxu0 0
    %2467 = vmatpush1.bf16.msra.mxu0 0
    %2468 = vmatprep.subr.bf16.mxu0 0
    %2469 = vmatpush1.bf16.msra.mxu0 0
    %2470 = vmatprep.subr.bf16.mxu0 0
    %2471 = vmatpush1.bf16.msra.mxu0 0
    %2472 = vmatprep.subr.bf16.mxu0 0
    %2473 = vmatpush1.bf16.msra.mxu0 0
    %2474 = vmatprep.subr.bf16.mxu0 0
    %2475 = vmatpush1.bf16.msra.mxu0 0
    %2476 = vmatprep.subr.bf16.mxu0 0
    %2477 = vmatpush1.bf16.msra.mxu0 0
    %2478 = vmatprep.mubr.bf16.mxu0 0
    %2479 = vmatmul.mubr.bf16.gmra.mrb[0].mxu0 %v2441
    %v2480 = vpop.f32.mrb[0].mxu0
    %v2481 = vadd.f32 0.0, %v2480
    %v2482 = vpop.f32.mrb[0].mxu0
    %v2483 = vpop.f32.mrb[0].mxu0
    %v2484 = vpop.f32.mrb[0].mxu0
    %2485 = vdwg.mxu0
    %v2487 = vsel %vm1440, %v2298, 0
    %2489 = vmatprep.subr.bf16.mxu0 0
    %2490 = vmatpush1.bf16.msra.mxu0 %v2306
    %2491 = vmatprep.subr.bf16.mxu0 0
    %2492 = vmatpush1.bf16.msra.mxu0 0
    %2493 = vmatprep.subr.bf16.mxu0 0
    %2494 = vmatpush1.bf16.msra.mxu0 0
    %2495 = vmatprep.subr.bf16.mxu0 0
    %2496 = vmatpush1.bf16.msra.mxu0 0
    %2497 = vmatprep.subr.bf16.mxu0 0
    %2498 = vmatpush1.bf16.msra.mxu0 0
    %2499 = vmatprep.subr.bf16.mxu0 0
    %2500 = vmatpush1.bf16.msra.mxu0 0
    %2501 = vmatprep.subr.bf16.mxu0 0
    %2502 = vmatpush1.bf16.msra.mxu0 0
    %2503 = vmatprep.subr.bf16.mxu0 0
    %2504 = vmatpush1.bf16.msra.mxu0 0
    %2505 = vmatprep.subr.bf16.mxu0 0
    %2506 = vmatpush1.bf16.msra.mxu0 0
    %2507 = vmatprep.subr.bf16.mxu0 0
    %2508 = vmatpush1.bf16.msra.mxu0 0
    %2509 = vmatprep.subr.bf16.mxu0 0
    %2510 = vmatpush1.bf16.msra.mxu0 0
    %2511 = vmatprep.subr.bf16.mxu0 0
    %2512 = vmatpush1.bf16.msra.mxu0 0
    %2513 = vmatprep.subr.bf16.mxu0 0
    %2514 = vmatpush1.bf16.msra.mxu0 0
    %2515 = vmatprep.subr.bf16.mxu0 0
    %2516 = vmatpush1.bf16.msra.mxu0 0
    %2517 = vmatprep.subr.bf16.mxu0 0
    %2518 = vmatpush1.bf16.msra.mxu0 0
    %2519 = vmatprep.subr.bf16.mxu0 0
    %2520 = vmatpush1.bf16.msra.mxu0 0
    %2521 = vmatprep.mubr.bf16.mxu0 0
    %2522 = vmatmul.mubr.bf16.gmra.mrb[0].mxu0 %v2487
    %v2523 = vpop.f32.mrb[0].mxu0
    %v2524 = vadd.f32 0.0, %v2523
    %v2525 = vpop.f32.mrb[0].mxu0
    %v2526 = vpop.f32.mrb[0].mxu0
    %v2527 = vpop.f32.mrb[0].mxu0
    %2528 = vdwg.mxu0
    %v2530 = vsel %vm1440, %v2299, 0
    %2532 = vmatprep.subr.bf16.mxu0 0
    %2533 = vmatpush1.bf16.msra.mxu0 %v2352
    %2534 = vmatprep.subr.bf16.mxu0 0
    %2535 = vmatpush1.bf16.msra.mxu0 0
    %2536 = vmatprep.subr.bf16.mxu0 0
    %2537 = vmatpush1.bf16.msra.mxu0 0
    %2538 = vmatprep.subr.bf16.mxu0 0
    %2539 = vmatpush1.bf16.msra.mxu0 0
    %2540 = vmatprep.subr.bf16.mxu0 0
    %2541 = vmatpush1.bf16.msra.mxu0 0
    %2542 = vmatprep.subr.bf16.mxu0 0
    %2543 = vmatpush1.bf16.msra.mxu0 0
    %2544 = vmatprep.subr.bf16.mxu0 0
    %2545 = vmatpush1.bf16.msra.mxu0 0
    %2546 = vmatprep.subr.bf16.mxu0 0
    %2547 = vmatpush1.bf16.msra.mxu0 0
    %2548 = vmatprep.subr.bf16.mxu0 0
    %2549 = vmatpush1.bf16.msra.mxu0 0
    %2550 = vmatprep.subr.bf16.mxu0 0
    %2551 = vmatpush1.bf16.msra.mxu0 0
    %2552 = vmatprep.subr.bf16.mxu0 0
    %2553 = vmatpush1.bf16.msra.mxu0 0
    %2554 = vmatprep.subr.bf16.mxu0 0
    %2555 = vmatpush1.bf16.msra.mxu0 0
    %2556 = vmatprep.subr.bf16.mxu0 0
    %2557 = vmatpush1.bf16.msra.mxu0 0
    %2558 = vmatprep.subr.bf16.mxu0 0
    %2559 = vmatpush1.bf16.msra.mxu0 0
    %2560 = vmatprep.subr.bf16.mxu0 0
    %2561 = vmatpush1.bf16.msra.mxu0 0
    %2562 = vmatprep.subr.bf16.mxu0 0
    %2563 = vmatpush1.bf16.msra.mxu0 0
    %2564 = vmatprep.mubr.bf16.mxu0 0
    %2565 = vmatmul.mubr.bf16.gmra.mrb[0].mxu0 %v2530
    %v2566 = vpop.f32.mrb[0].mxu0
    %v2567 = vadd.f32 0.0, %v2566
    %v2568 = vpop.f32.mrb[0].mxu0
    %v2569 = vpop.f32.mrb[0].mxu0
    %v2570 = vpop.f32.mrb[0].mxu0
    %2571 = vdwg.mxu0
    %v2573 = vsel %vm1440, %v2300, 0
    %2575 = vmatprep.subr.bf16.mxu0 0
    %2576 = vmatpush1.bf16.msra.mxu0 %v2398
    %2577 = vmatprep.subr.bf16.mxu0 0
    %2578 = vmatpush1.bf16.msra.mxu0 0
    %2579 = vmatprep.subr.bf16.mxu0 0
    %2580 = vmatpush1.bf16.msra.mxu0 0
    %2581 = vmatprep.subr.bf16.mxu0 0
    %2582 = vmatpush1.bf16.msra.mxu0 0
    %2583 = vmatprep.subr.bf16.mxu0 0
    %2584 = vmatpush1.bf16.msra.mxu0 0
    %2585 = vmatprep.subr.bf16.mxu0 0
    %2586 = vmatpush1.bf16.msra.mxu0 0
    %2587 = vmatprep.subr.bf16.mxu0 0
    %2588 = vmatpush1.bf16.msra.mxu0 0
    %2589 = vmatprep.subr.bf16.mxu0 0
    %2590 = vmatpush1.bf16.msra.mxu0 0
    %2591 = vmatprep.subr.bf16.mxu0 0
    %2592 = vmatpush1.bf16.msra.mxu0 0
    %2593 = vmatprep.subr.bf16.mxu0 0
    %2594 = vmatpush1.bf16.msra.mxu0 0
    %2595 = vmatprep.subr.bf16.mxu0 0
    %2596 = vmatpush1.bf16.msra.mxu0 0
    %2597 = vmatprep.subr.bf16.mxu0 0
    %2598 = vmatpush1.bf16.msra.mxu0 0
    %2599 = vmatprep.subr.bf16.mxu0 0
    %2600 = vmatpush1.bf16.msra.mxu0 0
    %2601 = vmatprep.subr.bf16.mxu0 0
    %2602 = vmatpush1.bf16.msra.mxu0 0
    %2603 = vmatprep.subr.bf16.mxu0 0
    %2604 = vmatpush1.bf16.msra.mxu0 0
    %2605 = vmatprep.subr.bf16.mxu0 0
    %2606 = vmatpush1.bf16.msra.mxu0 0
    %2607 = vmatprep.mubr.bf16.mxu0 0
    %2608 = vmatmul.mubr.bf16.gmra.mrb[0].mxu0 %v2573
    %v2609 = vpop.f32.mrb[0].mxu0
    %v2610 = vadd.f32 0.0, %v2609
    %v2611 = vpop.f32.mrb[0].mxu0
    %v2612 = vpop.f32.mrb[0].mxu0
    %v2613 = vpop.f32.mrb[0].mxu0
    %2614 = vdwg.mxu0
    %v2616 = vsel %vm1440, %v2301, 0
    %2618 = vmatprep.subr.bf16.mxu0 0
    %2619 = vmatpush1.bf16.msra.mxu0 %v2444
    %2620 = vmatprep.subr.bf16.mxu0 0
    %2621 = vmatpush1.bf16.msra.mxu0 0
    %2622 = vmatprep.subr.bf16.mxu0 0
    %2623 = vmatpush1.bf16.msra.mxu0 0
    %2624 = vmatprep.subr.bf16.mxu0 0
    %2625 = vmatpush1.bf16.msra.mxu0 0
    %2626 = vmatprep.subr.bf16.mxu0 0
    %2627 = vmatpush1.bf16.msra.mxu0 0
    %2628 = vmatprep.subr.bf16.mxu0 0
    %2629 = vmatpush1.bf16.msra.mxu0 0
    %2630 = vmatprep.subr.bf16.mxu0 0
    %2631 = vmatpush1.bf16.msra.mxu0 0
    %2632 = vmatprep.subr.bf16.mxu0 0
    %2633 = vmatpush1.bf16.msra.mxu0 0
    %2634 = vmatprep.subr.bf16.mxu0 0
    %2635 = vmatpush1.bf16.msra.mxu0 0
    %2636 = vmatprep.subr.bf16.mxu0 0
    %2637 = vmatpush1.bf16.msra.mxu0 0
    %2638 = vmatprep.subr.bf16.mxu0 0
    %2639 = vmatpush1.bf16.msra.mxu0 0
    %2640 = vmatprep.subr.bf16.mxu0 0
    %2641 = vmatpush1.bf16.msra.mxu0 0
    %2642 = vmatprep.subr.bf16.mxu0 0
    %2643 = vmatpush1.bf16.msra.mxu0 0
    %2644 = vmatprep.subr.bf16.mxu0 0
    %2645 = vmatpush1.bf16.msra.mxu0 0
    %2646 = vmatprep.subr.bf16.mxu0 0
    %2647 = vmatpush1.bf16.msra.mxu0 0
    %2648 = vmatprep.subr.bf16.mxu0 0
    %2649 = vmatpush1.bf16.msra.mxu0 0
    %2650 = vmatprep.mubr.bf16.mxu0 0
    %2651 = vmatmul.mubr.bf16.gmra.mrb[0].mxu0 %v2616
    %v2652 = vpop.f32.mrb[0].mxu0
    %v2653 = vadd.f32 0.0, %v2652
    %v2654 = vpop.f32.mrb[0].mxu0
    %v2655 = vpop.f32.mrb[0].mxu0
    %v2656 = vpop.f32.mrb[0].mxu0
    %2657 = vdwg.mxu0
    %v2658 = vsel %vm135, %v2343, 0.0
    %v2659 = vsel %vm135, %v2389, 0.0
    %v2660 = vadd.f32 %v2658, %v2659
    %v2661 = vsel %vm135, %v2435, 0.0
    %v2662 = vadd.f32 %v2660, %v2661
    %v2663 = vsel %vm135, %v2481, 0.0
    %v2664 = vadd.f32 %v2662, %v2663
    %v2665 = vsel %vm135, %v2524, 0.0
    %v2666 = vsel %vm135, %v2567, 0.0
    %v2667 = vadd.f32 %v2665, %v2666
    %v2668 = vsel %vm135, %v2610, 0.0
    %v2669 = vadd.f32 %v2667, %v2668
    %v2670 = vsel %vm135, %v2653, 0.0
    %v2671 = vadd.f32 %v2669, %v2670
    %v2672 = vlaneseq
    %v2673 = vshrl.u32 %v2672, 7
    %v2674 = vsub.s32 0, %v2673
    %v2675 = vrot.slane %v175, %v2674
    %v2676 = vadd.f32 %v2664, %v2675
    %v2677 = vadd.f32 %v2671, %v2675
    %v2678 = vadd.f32 %v173, %v2676
    %v2679 = vadd.f32 %v174, %v2677
    %v2680 = vsel %vm135, %v2678, 0.0
    %2681 = vadd.xlane.f32.xlu0 %v2680
    %v2682 = vpop.xlane.xlu0 %2681
    %v2683 = vsel %vm135, %v2679, 0.0
    %2684 = vadd.xlane.f32.xlu0 %v2683
    %v2685 = vpop.xlane.xlu0 %2684
    %v2686 = vmul.f32 %v2682, %v142
    %v2687 = vmul.f32 %v2685, %v142
    %v2688 = vsub.f32 %v2678, %v2686
    %v2689 = vsub.f32 %v2679, %v2687
    %v2690 = vmul.f32 %v2688, %v2688
    %v2691 = vmul.f32 %v2689, %v2689
    %v2692 = vsel %vm135, %v2690, 0.0
    %2693 = vadd.xlane.f32.xlu0 %v2692
    %v2694 = vpop.xlane.xlu0 %2693
    %v2695 = vsel %vm135, %v2691, 0.0
    %2696 = vadd.xlane.f32.xlu0 %v2695
    %v2697 = vpop.xlane.xlu0 %2696
    %v2698 = vmul.f32 %v2694, %v142
    %v2699 = vmul.f32 %v2697, %v142
    %v2700 = vadd.f32 %v2698, 1e-12
    %v2701 = vadd.f32 %v2699, 1e-12
    %v2702 = vrsqrt.pop %v2700
    %v2703 = vrsqrt.pop %v2701
    %v2704 = vmul.f32 %v2688, %v2702
    %v2705 = vmul.f32 %v2689, %v2703
    %v2706 = vlaneseq
    %v2707 = vshrl.u32 %v2706, 7
    %v2708 = vsub.s32 1, %v2707
    %v2709 = vrot.slane %v175, %v2708
    %v2710 = vmul.f32 %v2704, %v2709
    %v2711 = vmul.f32 %v2705, %v2709
    %v2712 = vlaneseq
    %v2713 = vshrl.u32 %v2712, 7
    %v2714 = vsub.s32 2, %v2713
    %v2715 = vrot.slane %v175, %v2714
    %v2716 = vadd.f32 %v2710, %v2715
    %v2717 = vadd.f32 %v2711, %v2715
    %v2718 = vpack.c.bf16 %v2717, %v2716
    %v2719 = vld [vmem:[%s8] sm:$0xf]
    %v2720 = vld [vmem:[%s8 + $0x4] sm:$0xf]
    %v2721 = vld [vmem:[%s8 + $0x8] sm:$0xf]
    %v2722 = vld [vmem:[%s8 + $0xc] sm:$0xf]
    %v2723 = vld [vmem:[%s9] sm:$0x1]
    %v2725 = vlaneseq
    %v2726 = vshrl.u32 %v2725, 7
    %v2727 = vsub.s32 0, %v2726
    %v2728 = vrot.slane %v2723, %v2727
    %v2734 = vunpack.c.l.b16 %v2719
    %v2735 = vunpack.c.l.b16 %v2720
    %v2736 = vunpack.c.l.b16 %v2721
    %v2737 = vunpack.c.l.b16 %v2722
    %v2738 = vpack.c.b16 %v2735, %v2734
    %v2739 = vpack.c.b16 %v2737, %v2736
    %v2743 = vsel %vm135, %v2718, 0
    %2745 = vmatprep.subr.bf16.mxu0 0
    %2746 = vmatpush1.bf16.msra.mxu0 %v2738
    %2747 = vmatprep.subr.bf16.mxu0 0
    %2748 = vmatpush1.bf16.msra.mxu0 %v2739
    %2749 = vmatprep.subr.bf16.mxu0 0
    %2750 = vmatpush1.bf16.msra.mxu0 0
    %2751 = vmatprep.subr.bf16.mxu0 0
    %2752 = vmatpush1.bf16.msra.mxu0 0
    %2753 = vmatprep.subr.bf16.mxu0 0
    %2754 = vmatpush1.bf16.msra.mxu0 0
    %2755 = vmatprep.subr.bf16.mxu0 0
    %2756 = vmatpush1.bf16.msra.mxu0 0
    %2757 = vmatprep.subr.bf16.mxu0 0
    %2758 = vmatpush1.bf16.msra.mxu0 0
    %2759 = vmatprep.subr.bf16.mxu0 0
    %2760 = vmatpush1.bf16.msra.mxu0 0
    %2761 = vmatprep.subr.bf16.mxu0 0
    %2762 = vmatpush1.bf16.msra.mxu0 0
    %2763 = vmatprep.subr.bf16.mxu0 0
    %2764 = vmatpush1.bf16.msra.mxu0 0
    %2765 = vmatprep.subr.bf16.mxu0 0
    %2766 = vmatpush1.bf16.msra.mxu0 0
    %2767 = vmatprep.subr.bf16.mxu0 0
    %2768 = vmatpush1.bf16.msra.mxu0 0
    %2769 = vmatprep.subr.bf16.mxu0 0
    %2770 = vmatpush1.bf16.msra.mxu0 0
    %2771 = vmatprep.subr.bf16.mxu0 0
    %2772 = vmatpush1.bf16.msra.mxu0 0
    %2773 = vmatprep.subr.bf16.mxu0 0
    %2774 = vmatpush1.bf16.msra.mxu0 0
    %2775 = vmatprep.subr.bf16.mxu0 0
    %2776 = vmatpush1.bf16.msra.mxu0 0
    %2777 = vmatprep.mubr.bf16.mxu0 0
    %2778 = vmatmul.mubr.bf16.gmra.mrb[0].mxu0 %v2743
    %v2779 = vpop.f32.mrb[0].mxu0
    %v2780 = vadd.f32 %v2728, %v2779
    %v2781 = vpop.f32.mrb[0].mxu0
    %v2782 = vpop.f32.mrb[0].mxu0
    %v2783 = vadd.f32 %v2728, %v2782
    %v2784 = vpop.f32.mrb[0].mxu0
    %2785 = vdwg.mxu0
    %v2786 = vmul.f32 %v2780, %v2780
    %v2787 = vmul.f32 %v2783, %v2783
    %v2788 = vmul.f32 %v2780, %v2786
    %v2789 = vmul.f32 %v2783, %v2787
    %v2790 = vmul.f32 %v2788, 0.044715
    %v2791 = vmul.f32 %v2789, 0.044715
    %v2792 = vadd.f32 %v2780, %v2790
    %v2793 = vadd.f32 %v2783, %v2791
    %v2794 = vmul.f32 %v2792, 0.7978846
    %v2795 = vmul.f32 %v2793, 0.7978846
    %v2796 = vtanh.pop %v2794
    %v2797 = vtanh.pop %v2795
    %v2798 = vadd.f32 %v2796, 1.0
    %v2799 = vadd.f32 %v2797, 1.0
    %v2800 = vmul.f32 %v2798, 0.5
    %v2801 = vmul.f32 %v2799, 0.5
    %v2802 = vmul.f32 %v2780, %v2800
    %v2803 = vmul.f32 %v2783, %v2801
    %v2804 = vpack.c.bf16 %v2803, %v2802
    %v2805 = vld [vmem:[%s10] sm:$0xf]
    %v2806 = vld [vmem:[%s10 + $0x4] sm:$0xf]
    %v2807 = vld [vmem:[%s10 + $0x8] sm:$0xf]
    %v2808 = vld [vmem:[%s10 + $0xc] sm:$0xf]
    %v2809 = vld [vmem:[%s10 + $0x10] sm:$0xf]
    %v2810 = vld [vmem:[%s10 + $0x14] sm:$0xf]
    %v2811 = vld [vmem:[%s10 + $0x18] sm:$0xf]
    %v2812 = vld [vmem:[%s10 + $0x1c] sm:$0xf]
    %v2813 = vld [vmem:[%s10 + $0x20] sm:$0xf]
    %v2814 = vld [vmem:[%s10 + $0x24] sm:$0xf]
    %v2815 = vld [vmem:[%s10 + $0x28] sm:$0xf]
    %v2816 = vld [vmem:[%s10 + $0x2c] sm:$0xf]
    %v2817 = vld [vmem:[%s10 + $0x30] sm:$0xf]
    %v2818 = vld [vmem:[%s10 + $0x34] sm:$0xf]
    %v2819 = vld [vmem:[%s10 + $0x38] sm:$0xf]
    %v2820 = vld [vmem:[%s10 + $0x3c] sm:$0xf]
    %v2821 = vlaneseq
    %v2822 = vshrl.u32 %v2821, 7
    %v2823 = vsub.s32 3, %v2822
    %v2824 = vrot.slane %v175, %v2823
    %v2841 = vunpack.c.l.b16 %v2805
    %v2842 = vunpack.c.l.b16 %v2806
    %v2843 = vunpack.c.l.b16 %v2807
    %v2844 = vunpack.c.l.b16 %v2808
    %v2845 = vunpack.c.l.b16 %v2809
    %v2846 = vunpack.c.l.b16 %v2810
    %v2847 = vunpack.c.l.b16 %v2811
    %v2848 = vunpack.c.l.b16 %v2812
    %v2849 = vunpack.c.l.b16 %v2813
    %v2850 = vunpack.c.l.b16 %v2814
    %v2851 = vunpack.c.l.b16 %v2815
    %v2852 = vunpack.c.l.b16 %v2816
    %v2853 = vunpack.c.l.b16 %v2817
    %v2854 = vunpack.c.l.b16 %v2818
    %v2855 = vunpack.c.l.b16 %v2819
    %v2856 = vunpack.c.l.b16 %v2820
    %v2857 = vpack.c.b16 %v2842, %v2841
    %v2858 = vpack.c.b16 %v2844, %v2843
    %v2859 = vpack.c.b16 %v2846, %v2845
    %v2860 = vpack.c.b16 %v2848, %v2847
    %v2861 = vpack.c.b16 %v2850, %v2849
    %v2862 = vpack.c.b16 %v2852, %v2851
    %v2863 = vpack.c.b16 %v2854, %v2853
    %v2864 = vpack.c.b16 %v2856, %v2855
    %2873 = vmatprep.subr.bf16.mxu0 0
    %2874 = vmatpush1.bf16.msra.mxu0 %v2857
    %2875 = vmatprep.subr.bf16.mxu0 0
    %2876 = vmatpush1.bf16.msra.mxu0 %v2858
    %2877 = vmatprep.subr.bf16.mxu0 0
    %2878 = vmatpush1.bf16.msra.mxu0 %v2859
    %2879 = vmatprep.subr.bf16.mxu0 0
    %2880 = vmatpush1.bf16.msra.mxu0 %v2860
    %2881 = vmatprep.subr.bf16.mxu0 0
    %2882 = vmatpush1.bf16.msra.mxu0 %v2861
    %2883 = vmatprep.subr.bf16.mxu0 0
    %2884 = vmatpush1.bf16.msra.mxu0 %v2862
    %2885 = vmatprep.subr.bf16.mxu0 0
    %2886 = vmatpush1.bf16.msra.mxu0 %v2863
    %2887 = vmatprep.subr.bf16.mxu0 0
    %2888 = vmatpush1.bf16.msra.mxu0 %v2864
    %2889 = vmatprep.subr.bf16.mxu0 0
    %2890 = vmatpush1.bf16.msra.mxu0 0
    %2891 = vmatprep.subr.bf16.mxu0 0
    %2892 = vmatpush1.bf16.msra.mxu0 0
    %2893 = vmatprep.subr.bf16.mxu0 0
    %2894 = vmatpush1.bf16.msra.mxu0 0
    %2895 = vmatprep.subr.bf16.mxu0 0
    %2896 = vmatpush1.bf16.msra.mxu0 0
    %2897 = vmatprep.subr.bf16.mxu0 0
    %2898 = vmatpush1.bf16.msra.mxu0 0
    %2899 = vmatprep.subr.bf16.mxu0 0
    %2900 = vmatpush1.bf16.msra.mxu0 0
    %2901 = vmatprep.subr.bf16.mxu0 0
    %2902 = vmatpush1.bf16.msra.mxu0 0
    %2903 = vmatprep.subr.bf16.mxu0 0
    %2904 = vmatpush1.bf16.msra.mxu0 0
    %2905 = vmatprep.mubr.bf16.mxu0 0
    %2906 = vmatmul.mubr.bf16.gmra.mrb[0].mxu0 %v2804
    %v2907 = vpop.f32.mrb[0].mxu0
    %v2908 = vadd.f32 %v2824, %v2907
    %v2909 = vpop.f32.mrb[0].mxu0
    %v2910 = vpop.f32.mrb[0].mxu0
    %v2911 = vadd.f32 %v2824, %v2910
    %v2912 = vpop.f32.mrb[0].mxu0
    %2913 = vdwg.mxu0
    %v2914 = vadd.f32 %v2716, %v2908
    %v2915 = vadd.f32 %v2717, %v2911
    %v2916 = vsel %vm135, %v2914, 0.0
    %2917 = vadd.xlane.f32.xlu0 %v2916
    %v2918 = vpop.xlane.xlu0 %2917
    %v2919 = vsel %vm135, %v2915, 0.0
    %2920 = vadd.xlane.f32.xlu0 %v2919
    %v2921 = vpop.xlane.xlu0 %2920
    %v2922 = vmul.f32 %v2918, %v142
    %v2923 = vmul.f32 %v2921, %v142
    %v2924 = vsub.f32 %v2914, %v2922
    %v2925 = vsub.f32 %v2915, %v2923
    %v2926 = vmul.f32 %v2924, %v2924
    %v2927 = vmul.f32 %v2925, %v2925
    %v2928 = vsel %vm135, %v2926, 0.0
    %2929 = vadd.xlane.f32.xlu0 %v2928
    %v2930 = vpop.xlane.xlu0 %2929
    %v2931 = vsel %vm135, %v2927, 0.0
    %2932 = vadd.xlane.f32.xlu0 %v2931
    %v2933 = vpop.xlane.xlu0 %2932
    %v2934 = vmul.f32 %v2930, %v142
    %v2935 = vmul.f32 %v2933, %v142
    %v2936 = vadd.f32 %v2934, 1e-12
    %v2937 = vadd.f32 %v2935, 1e-12
    %v2938 = vrsqrt.pop %v2936
    %v2939 = vrsqrt.pop %v2937
    %v2940 = vmul.f32 %v2924, %v2938
    %v2941 = vmul.f32 %v2925, %v2939
    %v2942 = vlaneseq
    %v2943 = vshrl.u32 %v2942, 7
    %v2944 = vsub.s32 4, %v2943
    %v2945 = vrot.slane %v175, %v2944
    %v2946 = vmul.f32 %v2940, %v2945
    %v2947 = vmul.f32 %v2941, %v2945
    %v2948 = vlaneseq
    %v2949 = vshrl.u32 %v2948, 7
    %v2950 = vsub.s32 5, %v2949
    %v2951 = vrot.slane %v175, %v2950
    %v2952 = vadd.f32 %v2946, %v2951
    %v2953 = vadd.f32 %v2947, %v2951
    %s2954 = scalar_lea.vmem %s7, 8
    %v2955 = vld [vmem:[%s2954] sm:$0x3f]
    %s2956 = scalar_lea.vmem %s4, 192
    %v2957 = vld [vmem:[%s2956] sm:$0xf]
    %v2958 = vld [vmem:[%s2956 + $0x4] sm:$0xf]
    %v2959 = vld [vmem:[%s2956 + $0x8] sm:$0xf]
    %v2960 = vld [vmem:[%s2956 + $0xc] sm:$0xf]
    %v2961 = vld [vmem:[%s2956 + $0x10] sm:$0xf]
    %v2962 = vld [vmem:[%s2956 + $0x14] sm:$0xf]
    %v2963 = vld [vmem:[%s2956 + $0x18] sm:$0xf]
    %v2964 = vld [vmem:[%s2956 + $0x1c] sm:$0xf]
    %v2965 = vld [vmem:[%s2956 + $0x20] sm:$0xf]
    %v2966 = vld [vmem:[%s2956 + $0x24] sm:$0xf]
    %v2967 = vld [vmem:[%s2956 + $0x28] sm:$0xf]
    %v2968 = vld [vmem:[%s2956 + $0x2c] sm:$0xf]
    %v2969 = vld [vmem:[%s2956 + $0x30] sm:$0xf]
    %v2970 = vld [vmem:[%s2956 + $0x34] sm:$0xf]
    %v2971 = vld [vmem:[%s2956 + $0x38] sm:$0xf]
    %v2972 = vld [vmem:[%s2956 + $0x3c] sm:$0xf]
    %v2973 = vld [vmem:[%s2956 + $0x40] sm:$0xf]
    %v2974 = vld [vmem:[%s2956 + $0x44] sm:$0xf]
    %v2975 = vld [vmem:[%s2956 + $0x48] sm:$0xf]
    %v2976 = vld [vmem:[%s2956 + $0x4c] sm:$0xf]
    %v2977 = vld [vmem:[%s2956 + $0x50] sm:$0xf]
    %v2978 = vld [vmem:[%s2956 + $0x54] sm:$0xf]
    %v2979 = vld [vmem:[%s2956 + $0x58] sm:$0xf]
    %v2980 = vld [vmem:[%s2956 + $0x5c] sm:$0xf]
    %v2981 = vld [vmem:[%s2956 + $0x60] sm:$0xf]
    %v2982 = vld [vmem:[%s2956 + $0x64] sm:$0xf]
    %v2983 = vld [vmem:[%s2956 + $0x68] sm:$0xf]
    %v2984 = vld [vmem:[%s2956 + $0x6c] sm:$0xf]
    %v2985 = vld [vmem:[%s2956 + $0x70] sm:$0xf]
    %v2986 = vld [vmem:[%s2956 + $0x74] sm:$0xf]
    %v2987 = vld [vmem:[%s2956 + $0x78] sm:$0xf]
    %v2988 = vld [vmem:[%s2956 + $0x7c] sm:$0xf]
    %v2989 = vld [vmem:[%s2956 + $0x80] sm:$0xf]
    %v2990 = vld [vmem:[%s2956 + $0x84] sm:$0xf]
    %v2991 = vld [vmem:[%s2956 + $0x88] sm:$0xf]
    %v2992 = vld [vmem:[%s2956 + $0x8c] sm:$0xf]
    %v2993 = vld [vmem:[%s2956 + $0x90] sm:$0xf]
    %v2994 = vld [vmem:[%s2956 + $0x94] sm:$0xf]
    %v2995 = vld [vmem:[%s2956 + $0x98] sm:$0xf]
    %v2996 = vld [vmem:[%s2956 + $0x9c] sm:$0xf]
    %v2997 = vld [vmem:[%s2956 + $0xa0] sm:$0xf]
    %v2998 = vld [vmem:[%s2956 + $0xa4] sm:$0xf]
    %v2999 = vld [vmem:[%s2956 + $0xa8] sm:$0xf]
    %v3000 = vld [vmem:[%s2956 + $0xac] sm:$0xf]
    %v3001 = vld [vmem:[%s2956 + $0xb0] sm:$0xf]
    %v3002 = vld [vmem:[%s2956 + $0xb4] sm:$0xf]
    %v3003 = vld [vmem:[%s2956 + $0xb8] sm:$0xf]
    %v3004 = vld [vmem:[%s2956 + $0xbc] sm:$0xf]
    %s3005 = scalar_lea.vmem %s5, 12
    %v3006 = vld [vmem:[%s3005] sm:$0x1]
    %v3007 = vld [vmem:[%s3005 + $0x1] sm:$0x1]
    %v3008 = vld [vmem:[%s3005 + $0x2] sm:$0x1]
    %v3009 = vld [vmem:[%s3005 + $0x3] sm:$0x1]
    %v3010 = vld [vmem:[%s3005 + $0x4] sm:$0x1]
    %v3011 = vld [vmem:[%s3005 + $0x5] sm:$0x1]
    %v3012 = vld [vmem:[%s3005 + $0x6] sm:$0x1]
    %v3013 = vld [vmem:[%s3005 + $0x7] sm:$0x1]
    %v3014 = vld [vmem:[%s3005 + $0x8] sm:$0x1]
    %v3015 = vld [vmem:[%s3005 + $0x9] sm:$0x1]
    %v3016 = vld [vmem:[%s3005 + $0xa] sm:$0x1]
    %v3017 = vld [vmem:[%s3005 + $0xb] sm:$0x1]
    %v3018 = vpack.c.bf16 %v2953, %v2952
    %v3020 = vunpack.c.l.b16 %v3018
    %v3021 = vunpack.c.h.b16 %v3018
    %v3022 = vpack.c.b16 %v3020, %v3020
    %v3023 = vpack.c.b16 %v3021, %v3021
    %v3028 = vlaneseq
    %v3029 = vshrl.u32 %v3028, 7
    %v3030 = vsub.s32 0, %v3029
    %v3031 = vrot.slane %v3006, %v3030
    %v3032 = vlaneseq
    %v3033 = vshrl.u32 %v3032, 7
    %v3034 = vsub.s32 0, %v3033
    %v3035 = vrot.slane %v3007, %v3034
    %v3036 = vlaneseq
    %v3037 = vshrl.u32 %v3036, 7
    %v3038 = vsub.s32 0, %v3037
    %v3039 = vrot.slane %v3008, %v3038
    %v3040 = vlaneseq
    %v3041 = vshrl.u32 %v3040, 7
    %v3042 = vsub.s32 0, %v3041
    %v3043 = vrot.slane %v3009, %v3042
    %v3052 = vunpack.c.l.b16 %v2957
    %v3053 = vunpack.c.l.b16 %v2958
    %v3054 = vunpack.c.l.b16 %v2959
    %v3055 = vunpack.c.l.b16 %v2960
    %v3056 = vpack.c.b16 %v3053, %v3052
    %v3057 = vpack.c.b16 %v3055, %v3054
    %v3061 = vsel %vm135, %v3022, 0
    %3063 = vmatprep.subr.bf16.mxu0 0
    %3064 = vmatpush1.bf16.msra.mxu0 %v3056
    %3065 = vmatprep.subr.bf16.mxu0 0
    %3066 = vmatpush1.bf16.msra.mxu0 %v3057
    %3067 = vmatprep.subr.bf16.mxu0 0
    %3068 = vmatpush1.bf16.msra.mxu0 0
    %3069 = vmatprep.subr.bf16.mxu0 0
    %3070 = vmatpush1.bf16.msra.mxu0 0
    %3071 = vmatprep.subr.bf16.mxu0 0
    %3072 = vmatpush1.bf16.msra.mxu0 0
    %3073 = vmatprep.subr.bf16.mxu0 0
    %3074 = vmatpush1.bf16.msra.mxu0 0
    %3075 = vmatprep.subr.bf16.mxu0 0
    %3076 = vmatpush1.bf16.msra.mxu0 0
    %3077 = vmatprep.subr.bf16.mxu0 0
    %3078 = vmatpush1.bf16.msra.mxu0 0
    %3079 = vmatprep.subr.bf16.mxu0 0
    %3080 = vmatpush1.bf16.msra.mxu0 0
    %3081 = vmatprep.subr.bf16.mxu0 0
    %3082 = vmatpush1.bf16.msra.mxu0 0
    %3083 = vmatprep.subr.bf16.mxu0 0
    %3084 = vmatpush1.bf16.msra.mxu0 0
    %3085 = vmatprep.subr.bf16.mxu0 0
    %3086 = vmatpush1.bf16.msra.mxu0 0
    %3087 = vmatprep.subr.bf16.mxu0 0
    %3088 = vmatpush1.bf16.msra.mxu0 0
    %3089 = vmatprep.subr.bf16.mxu0 0
    %3090 = vmatpush1.bf16.msra.mxu0 0
    %3091 = vmatprep.subr.bf16.mxu0 0
    %3092 = vmatpush1.bf16.msra.mxu0 0
    %3093 = vmatprep.subr.bf16.mxu0 0
    %3094 = vmatpush1.bf16.msra.mxu0 0
    %3095 = vmatprep.mubr.bf16.mxu0 0
    %3096 = vmatmul.mubr.bf16.gmra.mrb[0].mxu0 %v3061
    %v3097 = vpop.f32.mrb[0].mxu0
    %v3098 = vadd.f32 %v3031, %v3097
    %v3099 = vpop.f32.mrb[0].mxu0
    %v3100 = vpop.f32.mrb[0].mxu0
    %v3101 = vpop.f32.mrb[0].mxu0
    %3102 = vdwg.mxu0
    %v3107 = vunpack.c.l.b16 %v2961
    %v3108 = vunpack.c.l.b16 %v2962
    %v3109 = vunpack.c.l.b16 %v2963
    %v3110 = vunpack.c.l.b16 %v2964
    %v3111 = vpack.c.b16 %v3108, %v3107
    %v3112 = vpack.c.b16 %v3110, %v3109
    %3115 = vmatprep.subr.bf16.mxu0 0
    %3116 = vmatpush1.bf16.msra.mxu0 %v3111
    %3117 = vmatprep.subr.bf16.mxu0 0
    %3118 = vmatpush1.bf16.msra.mxu0 %v3112
    %3119 = vmatprep.subr.bf16.mxu0 0
    %3120 = vmatpush1.bf16.msra.mxu0 0
    %3121 = vmatprep.subr.bf16.mxu0 0
    %3122 = vmatpush1.bf16.msra.mxu0 0
    %3123 = vmatprep.subr.bf16.mxu0 0
    %3124 = vmatpush1.bf16.msra.mxu0 0
    %3125 = vmatprep.subr.bf16.mxu0 0
    %3126 = vmatpush1.bf16.msra.mxu0 0
    %3127 = vmatprep.subr.bf16.mxu0 0
    %3128 = vmatpush1.bf16.msra.mxu0 0
    %3129 = vmatprep.subr.bf16.mxu0 0
    %3130 = vmatpush1.bf16.msra.mxu0 0
    %3131 = vmatprep.subr.bf16.mxu0 0
    %3132 = vmatpush1.bf16.msra.mxu0 0
    %3133 = vmatprep.subr.bf16.mxu0 0
    %3134 = vmatpush1.bf16.msra.mxu0 0
    %3135 = vmatprep.subr.bf16.mxu0 0
    %3136 = vmatpush1.bf16.msra.mxu0 0
    %3137 = vmatprep.subr.bf16.mxu0 0
    %3138 = vmatpush1.bf16.msra.mxu0 0
    %3139 = vmatprep.subr.bf16.mxu0 0
    %3140 = vmatpush1.bf16.msra.mxu0 0
    %3141 = vmatprep.subr.bf16.mxu0 0
    %3142 = vmatpush1.bf16.msra.mxu0 0
    %3143 = vmatprep.subr.bf16.mxu0 0
    %3144 = vmatpush1.bf16.msra.mxu0 0
    %3145 = vmatprep.subr.bf16.mxu0 0
    %3146 = vmatpush1.bf16.msra.mxu0 0
    %3147 = vmatprep.mubr.bf16.mxu0 0
    %3148 = vmatmul.mubr.bf16.gmra.mrb[0].mxu0 %v3061
    %v3149 = vpop.f32.mrb[0].mxu0
    %v3150 = vadd.f32 %v3035, %v3149
    %v3151 = vpop.f32.mrb[0].mxu0
    %v3152 = vpop.f32.mrb[0].mxu0
    %v3153 = vpop.f32.mrb[0].mxu0
    %3154 = vdwg.mxu0
    %v3159 = vunpack.c.l.b16 %v2965
    %v3160 = vunpack.c.l.b16 %v2966
    %v3161 = vunpack.c.l.b16 %v2967
    %v3162 = vunpack.c.l.b16 %v2968
    %v3163 = vpack.c.b16 %v3160, %v3159
    %v3164 = vpack.c.b16 %v3162, %v3161
    %3167 = vmatprep.subr.bf16.mxu0 0
    %3168 = vmatpush1.bf16.msra.mxu0 %v3163
    %3169 = vmatprep.subr.bf16.mxu0 0
    %3170 = vmatpush1.bf16.msra.mxu0 %v3164
    %3171 = vmatprep.subr.bf16.mxu0 0
    %3172 = vmatpush1.bf16.msra.mxu0 0
    %3173 = vmatprep.subr.bf16.mxu0 0
    %3174 = vmatpush1.bf16.msra.mxu0 0
    %3175 = vmatprep.subr.bf16.mxu0 0
    %3176 = vmatpush1.bf16.msra.mxu0 0
    %3177 = vmatprep.subr.bf16.mxu0 0
    %3178 = vmatpush1.bf16.msra.mxu0 0
    %3179 = vmatprep.subr.bf16.mxu0 0
    %3180 = vmatpush1.bf16.msra.mxu0 0
    %3181 = vmatprep.subr.bf16.mxu0 0
    %3182 = vmatpush1.bf16.msra.mxu0 0
    %3183 = vmatprep.subr.bf16.mxu0 0
    %3184 = vmatpush1.bf16.msra.mxu0 0
    %3185 = vmatprep.subr.bf16.mxu0 0
    %3186 = vmatpush1.bf16.msra.mxu0 0
    %3187 = vmatprep.subr.bf16.mxu0 0
    %3188 = vmatpush1.bf16.msra.mxu0 0
    %3189 = vmatprep.subr.bf16.mxu0 0
    %3190 = vmatpush1.bf16.msra.mxu0 0
    %3191 = vmatprep.subr.bf16.mxu0 0
    %3192 = vmatpush1.bf16.msra.mxu0 0
    %3193 = vmatprep.subr.bf16.mxu0 0
    %3194 = vmatpush1.bf16.msra.mxu0 0
    %3195 = vmatprep.subr.bf16.mxu0 0
    %3196 = vmatpush1.bf16.msra.mxu0 0
    %3197 = vmatprep.subr.bf16.mxu0 0
    %3198 = vmatpush1.bf16.msra.mxu0 0
    %3199 = vmatprep.mubr.bf16.mxu0 0
    %3200 = vmatmul.mubr.bf16.gmra.mrb[0].mxu0 %v3061
    %v3201 = vpop.f32.mrb[0].mxu0
    %v3202 = vadd.f32 %v3039, %v3201
    %v3203 = vpop.f32.mrb[0].mxu0
    %v3204 = vpop.f32.mrb[0].mxu0
    %v3205 = vpop.f32.mrb[0].mxu0
    %3206 = vdwg.mxu0
    %v3211 = vunpack.c.l.b16 %v2969
    %v3212 = vunpack.c.l.b16 %v2970
    %v3213 = vunpack.c.l.b16 %v2971
    %v3214 = vunpack.c.l.b16 %v2972
    %v3215 = vpack.c.b16 %v3212, %v3211
    %v3216 = vpack.c.b16 %v3214, %v3213
    %3219 = vmatprep.subr.bf16.mxu0 0
    %3220 = vmatpush1.bf16.msra.mxu0 %v3215
    %3221 = vmatprep.subr.bf16.mxu0 0
    %3222 = vmatpush1.bf16.msra.mxu0 %v3216
    %3223 = vmatprep.subr.bf16.mxu0 0
    %3224 = vmatpush1.bf16.msra.mxu0 0
    %3225 = vmatprep.subr.bf16.mxu0 0
    %3226 = vmatpush1.bf16.msra.mxu0 0
    %3227 = vmatprep.subr.bf16.mxu0 0
    %3228 = vmatpush1.bf16.msra.mxu0 0
    %3229 = vmatprep.subr.bf16.mxu0 0
    %3230 = vmatpush1.bf16.msra.mxu0 0
    %3231 = vmatprep.subr.bf16.mxu0 0
    %3232 = vmatpush1.bf16.msra.mxu0 0
    %3233 = vmatprep.subr.bf16.mxu0 0
    %3234 = vmatpush1.bf16.msra.mxu0 0
    %3235 = vmatprep.subr.bf16.mxu0 0
    %3236 = vmatpush1.bf16.msra.mxu0 0
    %3237 = vmatprep.subr.bf16.mxu0 0
    %3238 = vmatpush1.bf16.msra.mxu0 0
    %3239 = vmatprep.subr.bf16.mxu0 0
    %3240 = vmatpush1.bf16.msra.mxu0 0
    %3241 = vmatprep.subr.bf16.mxu0 0
    %3242 = vmatpush1.bf16.msra.mxu0 0
    %3243 = vmatprep.subr.bf16.mxu0 0
    %3244 = vmatpush1.bf16.msra.mxu0 0
    %3245 = vmatprep.subr.bf16.mxu0 0
    %3246 = vmatpush1.bf16.msra.mxu0 0
    %3247 = vmatprep.subr.bf16.mxu0 0
    %3248 = vmatpush1.bf16.msra.mxu0 0
    %3249 = vmatprep.subr.bf16.mxu0 0
    %3250 = vmatpush1.bf16.msra.mxu0 0
    %3251 = vmatprep.mubr.bf16.mxu0 0
    %3252 = vmatmul.mubr.bf16.gmra.mrb[0].mxu0 %v3061
    %v3253 = vpop.f32.mrb[0].mxu0
    %v3254 = vadd.f32 %v3043, %v3253
    %v3255 = vpop.f32.mrb[0].mxu0
    %v3256 = vpop.f32.mrb[0].mxu0
    %v3257 = vpop.f32.mrb[0].mxu0
    %3258 = vdwg.mxu0
    %v3260 = vsel %vm135, %v3023, 0
    %3262 = vmatprep.subr.bf16.mxu0 0
    %3263 = vmatpush1.bf16.msra.mxu0 %v3056
    %3264 = vmatprep.subr.bf16.mxu0 0
    %3265 = vmatpush1.bf16.msra.mxu0 %v3057
    %3266 = vmatprep.subr.bf16.mxu0 0
    %3267 = vmatpush1.bf16.msra.mxu0 0
    %3268 = vmatprep.subr.bf16.mxu0 0
    %3269 = vmatpush1.bf16.msra.mxu0 0
    %3270 = vmatprep.subr.bf16.mxu0 0
    %3271 = vmatpush1.bf16.msra.mxu0 0
    %3272 = vmatprep.subr.bf16.mxu0 0
    %3273 = vmatpush1.bf16.msra.mxu0 0
    %3274 = vmatprep.subr.bf16.mxu0 0
    %3275 = vmatpush1.bf16.msra.mxu0 0
    %3276 = vmatprep.subr.bf16.mxu0 0
    %3277 = vmatpush1.bf16.msra.mxu0 0
    %3278 = vmatprep.subr.bf16.mxu0 0
    %3279 = vmatpush1.bf16.msra.mxu0 0
    %3280 = vmatprep.subr.bf16.mxu0 0
    %3281 = vmatpush1.bf16.msra.mxu0 0
    %3282 = vmatprep.subr.bf16.mxu0 0
    %3283 = vmatpush1.bf16.msra.mxu0 0
    %3284 = vmatprep.subr.bf16.mxu0 0
    %3285 = vmatpush1.bf16.msra.mxu0 0
    %3286 = vmatprep.subr.bf16.mxu0 0
    %3287 = vmatpush1.bf16.msra.mxu0 0
    %3288 = vmatprep.subr.bf16.mxu0 0
    %3289 = vmatpush1.bf16.msra.mxu0 0
    %3290 = vmatprep.subr.bf16.mxu0 0
    %3291 = vmatpush1.bf16.msra.mxu0 0
    %3292 = vmatprep.subr.bf16.mxu0 0
    %3293 = vmatpush1.bf16.msra.mxu0 0
    %3294 = vmatprep.mubr.bf16.mxu0 0
    %3295 = vmatmul.mubr.bf16.gmra.mrb[0].mxu0 %v3260
    %v3296 = vpop.f32.mrb[0].mxu0
    %v3297 = vadd.f32 %v3031, %v3296
    %v3298 = vpop.f32.mrb[0].mxu0
    %v3299 = vpop.f32.mrb[0].mxu0
    %v3300 = vpop.f32.mrb[0].mxu0
    %3301 = vdwg.mxu0
    %3302 = vmatprep.subr.bf16.mxu0 0
    %3303 = vmatpush1.bf16.msra.mxu0 %v3111
    %3304 = vmatprep.subr.bf16.mxu0 0
    %3305 = vmatpush1.bf16.msra.mxu0 %v3112
    %3306 = vmatprep.subr.bf16.mxu0 0
    %3307 = vmatpush1.bf16.msra.mxu0 0
    %3308 = vmatprep.subr.bf16.mxu0 0
    %3309 = vmatpush1.bf16.msra.mxu0 0
    %3310 = vmatprep.subr.bf16.mxu0 0
    %3311 = vmatpush1.bf16.msra.mxu0 0
    %3312 = vmatprep.subr.bf16.mxu0 0
    %3313 = vmatpush1.bf16.msra.mxu0 0
    %3314 = vmatprep.subr.bf16.mxu0 0
    %3315 = vmatpush1.bf16.msra.mxu0 0
    %3316 = vmatprep.subr.bf16.mxu0 0
    %3317 = vmatpush1.bf16.msra.mxu0 0
    %3318 = vmatprep.subr.bf16.mxu0 0
    %3319 = vmatpush1.bf16.msra.mxu0 0
    %3320 = vmatprep.subr.bf16.mxu0 0
    %3321 = vmatpush1.bf16.msra.mxu0 0
    %3322 = vmatprep.subr.bf16.mxu0 0
    %3323 = vmatpush1.bf16.msra.mxu0 0
    %3324 = vmatprep.subr.bf16.mxu0 0
    %3325 = vmatpush1.bf16.msra.mxu0 0
    %3326 = vmatprep.subr.bf16.mxu0 0
    %3327 = vmatpush1.bf16.msra.mxu0 0
    %3328 = vmatprep.subr.bf16.mxu0 0
    %3329 = vmatpush1.bf16.msra.mxu0 0
    %3330 = vmatprep.subr.bf16.mxu0 0
    %3331 = vmatpush1.bf16.msra.mxu0 0
    %3332 = vmatprep.subr.bf16.mxu0 0
    %3333 = vmatpush1.bf16.msra.mxu0 0
    %3334 = vmatprep.mubr.bf16.mxu0 0
    %3335 = vmatmul.mubr.bf16.gmra.mrb[0].mxu0 %v3260
    %v3336 = vpop.f32.mrb[0].mxu0
    %v3337 = vadd.f32 %v3035, %v3336
    %v3338 = vpop.f32.mrb[0].mxu0
    %v3339 = vpop.f32.mrb[0].mxu0
    %v3340 = vpop.f32.mrb[0].mxu0
    %3341 = vdwg.mxu0
    %3342 = vmatprep.subr.bf16.mxu0 0
    %3343 = vmatpush1.bf16.msra.mxu0 %v3163
    %3344 = vmatprep.subr.bf16.mxu0 0
    %3345 = vmatpush1.bf16.msra.mxu0 %v3164
    %3346 = vmatprep.subr.bf16.mxu0 0
    %3347 = vmatpush1.bf16.msra.mxu0 0
    %3348 = vmatprep.subr.bf16.mxu0 0
    %3349 = vmatpush1.bf16.msra.mxu0 0
    %3350 = vmatprep.subr.bf16.mxu0 0
    %3351 = vmatpush1.bf16.msra.mxu0 0
    %3352 = vmatprep.subr.bf16.mxu0 0
    %3353 = vmatpush1.bf16.msra.mxu0 0
    %3354 = vmatprep.subr.bf16.mxu0 0
    %3355 = vmatpush1.bf16.msra.mxu0 0
    %3356 = vmatprep.subr.bf16.mxu0 0
    %3357 = vmatpush1.bf16.msra.mxu0 0
    %3358 = vmatprep.subr.bf16.mxu0 0
    %3359 = vmatpush1.bf16.msra.mxu0 0
    %3360 = vmatprep.subr.bf16.mxu0 0
    %3361 = vmatpush1.bf16.msra.mxu0 0
    %3362 = vmatprep.subr.bf16.mxu0 0
    %3363 = vmatpush1.bf16.msra.mxu0 0
    %3364 = vmatprep.subr.bf16.mxu0 0
    %3365 = vmatpush1.bf16.msra.mxu0 0
    %3366 = vmatprep.subr.bf16.mxu0 0
    %3367 = vmatpush1.bf16.msra.mxu0 0
    %3368 = vmatprep.subr.bf16.mxu0 0
    %3369 = vmatpush1.bf16.msra.mxu0 0
    %3370 = vmatprep.subr.bf16.mxu0 0
    %3371 = vmatpush1.bf16.msra.mxu0 0
    %3372 = vmatprep.subr.bf16.mxu0 0
    %3373 = vmatpush1.bf16.msra.mxu0 0
    %3374 = vmatprep.mubr.bf16.mxu0 0
    %3375 = vmatmul.mubr.bf16.gmra.mrb[0].mxu0 %v3260
    %v3376 = vpop.f32.mrb[0].mxu0
    %v3377 = vadd.f32 %v3039, %v3376
    %v3378 = vpop.f32.mrb[0].mxu0
    %v3379 = vpop.f32.mrb[0].mxu0
    %v3380 = vpop.f32.mrb[0].mxu0
    %3381 = vdwg.mxu0
    %3382 = vmatprep.subr.bf16.mxu0 0
    %3383 = vmatpush1.bf16.msra.mxu0 %v3215
    %3384 = vmatprep.subr.bf16.mxu0 0
    %3385 = vmatpush1.bf16.msra.mxu0 %v3216
    %3386 = vmatprep.subr.bf16.mxu0 0
    %3387 = vmatpush1.bf16.msra.mxu0 0
    %3388 = vmatprep.subr.bf16.mxu0 0
    %3389 = vmatpush1.bf16.msra.mxu0 0
    %3390 = vmatprep.subr.bf16.mxu0 0
    %3391 = vmatpush1.bf16.msra.mxu0 0
    %3392 = vmatprep.subr.bf16.mxu0 0
    %3393 = vmatpush1.bf16.msra.mxu0 0
    %3394 = vmatprep.subr.bf16.mxu0 0
    %3395 = vmatpush1.bf16.msra.mxu0 0
    %3396 = vmatprep.subr.bf16.mxu0 0
    %3397 = vmatpush1.bf16.msra.mxu0 0
    %3398 = vmatprep.subr.bf16.mxu0 0
    %3399 = vmatpush1.bf16.msra.mxu0 0
    %3400 = vmatprep.subr.bf16.mxu0 0
    %3401 = vmatpush1.bf16.msra.mxu0 0
    %3402 = vmatprep.subr.bf16.mxu0 0
    %3403 = vmatpush1.bf16.msra.mxu0 0
    %3404 = vmatprep.subr.bf16.mxu0 0
    %3405 = vmatpush1.bf16.msra.mxu0 0
    %3406 = vmatprep.subr.bf16.mxu0 0
    %3407 = vmatpush1.bf16.msra.mxu0 0
    %3408 = vmatprep.subr.bf16.mxu0 0
    %3409 = vmatpush1.bf16.msra.mxu0 0
    %3410 = vmatprep.subr.bf16.mxu0 0
    %3411 = vmatpush1.bf16.msra.mxu0 0
    %3412 = vmatprep.subr.bf16.mxu0 0
    %3413 = vmatpush1.bf16.msra.mxu0 0
    %3414 = vmatprep.mubr.bf16.mxu0 0
    %3415 = vmatmul.mubr.bf16.gmra.mrb[0].mxu0 %v3260
    %v3416 = vpop.f32.mrb[0].mxu0
    %v3417 = vadd.f32 %v3043, %v3416
    %v3418 = vpop.f32.mrb[0].mxu0
    %v3419 = vpop.f32.mrb[0].mxu0
    %v3420 = vpop.f32.mrb[0].mxu0
    %3421 = vdwg.mxu0
    %v3426 = vlaneseq
    %v3427 = vshrl.u32 %v3426, 7
    %v3428 = vsub.s32 0, %v3427
    %v3429 = vrot.slane %v3010, %v3428
    %v3430 = vlaneseq
    %v3431 = vshrl.u32 %v3430, 7
    %v3432 = vsub.s32 0, %v3431
    %v3433 = vrot.slane %v3011, %v3432
    %v3434 = vlaneseq
    %v3435 = vshrl.u32 %v3434, 7
    %v3436 = vsub.s32 0, %v3435
    %v3437 = vrot.slane %v3012, %v3436
    %v3438 = vlaneseq
    %v3439 = vshrl.u32 %v3438, 7
    %v3440 = vsub.s32 0, %v3439
    %v3441 = vrot.slane %v3013, %v3440
    %v3450 = vunpack.c.l.b16 %v2973
    %v3451 = vunpack.c.l.b16 %v2974
    %v3452 = vunpack.c.l.b16 %v2975
    %v3453 = vunpack.c.l.b16 %v2976
    %v3454 = vpack.c.b16 %v3451, %v3450
    %v3455 = vpack.c.b16 %v3453, %v3452
    %3458 = vmatprep.subr.bf16.mxu0 0
    %3459 = vmatpush1.bf16.msra.mxu0 %v3454
    %3460 = vmatprep.subr.bf16.mxu0 0
    %3461 = vmatpush1.bf16.msra.mxu0 %v3455
    %3462 = vmatprep.subr.bf16.mxu0 0
    %3463 = vmatpush1.bf16.msra.mxu0 0
    %3464 = vmatprep.subr.bf16.mxu0 0
    %3465 = vmatpush1.bf16.msra.mxu0 0
    %3466 = vmatprep.subr.bf16.mxu0 0
    %3467 = vmatpush1.bf16.msra.mxu0 0
    %3468 = vmatprep.subr.bf16.mxu0 0
    %3469 = vmatpush1.bf16.msra.mxu0 0
    %3470 = vmatprep.subr.bf16.mxu0 0
    %3471 = vmatpush1.bf16.msra.mxu0 0
    %3472 = vmatprep.subr.bf16.mxu0 0
    %3473 = vmatpush1.bf16.msra.mxu0 0
    %3474 = vmatprep.subr.bf16.mxu0 0
    %3475 = vmatpush1.bf16.msra.mxu0 0
    %3476 = vmatprep.subr.bf16.mxu0 0
    %3477 = vmatpush1.bf16.msra.mxu0 0
    %3478 = vmatprep.subr.bf16.mxu0 0
    %3479 = vmatpush1.bf16.msra.mxu0 0
    %3480 = vmatprep.subr.bf16.mxu0 0
    %3481 = vmatpush1.bf16.msra.mxu0 0
    %3482 = vmatprep.subr.bf16.mxu0 0
    %3483 = vmatpush1.bf16.msra.mxu0 0
    %3484 = vmatprep.subr.bf16.mxu0 0
    %3485 = vmatpush1.bf16.msra.mxu0 0
    %3486 = vmatprep.subr.bf16.mxu0 0
    %3487 = vmatpush1.bf16.msra.mxu0 0
    %3488 = vmatprep.subr.bf16.mxu0 0
    %3489 = vmatpush1.bf16.msra.mxu0 0
    %3490 = vmatprep.mubr.bf16.mxu0 0
    %3491 = vmatmul.mubr.bf16.gmra.mrb[0].mxu0 %v3061
    %v3492 = vpop.f32.mrb[0].mxu0
    %v3493 = vadd.f32 %v3429, %v3492
    %v3494 = vpop.f32.mrb[0].mxu0
    %v3495 = vpop.f32.mrb[0].mxu0
    %v3496 = vpop.f32.mrb[0].mxu0
    %3497 = vdwg.mxu0
    %v3502 = vunpack.c.l.b16 %v2977
    %v3503 = vunpack.c.l.b16 %v2978
    %v3504 = vunpack.c.l.b16 %v2979
    %v3505 = vunpack.c.l.b16 %v2980
    %v3506 = vpack.c.b16 %v3503, %v3502
    %v3507 = vpack.c.b16 %v3505, %v3504
    %3510 = vmatprep.subr.bf16.mxu0 0
    %3511 = vmatpush1.bf16.msra.mxu0 %v3506
    %3512 = vmatprep.subr.bf16.mxu0 0
    %3513 = vmatpush1.bf16.msra.mxu0 %v3507
    %3514 = vmatprep.subr.bf16.mxu0 0
    %3515 = vmatpush1.bf16.msra.mxu0 0
    %3516 = vmatprep.subr.bf16.mxu0 0
    %3517 = vmatpush1.bf16.msra.mxu0 0
    %3518 = vmatprep.subr.bf16.mxu0 0
    %3519 = vmatpush1.bf16.msra.mxu0 0
    %3520 = vmatprep.subr.bf16.mxu0 0
    %3521 = vmatpush1.bf16.msra.mxu0 0
    %3522 = vmatprep.subr.bf16.mxu0 0
    %3523 = vmatpush1.bf16.msra.mxu0 0
    %3524 = vmatprep.subr.bf16.mxu0 0
    %3525 = vmatpush1.bf16.msra.mxu0 0
    %3526 = vmatprep.subr.bf16.mxu0 0
    %3527 = vmatpush1.bf16.msra.mxu0 0
    %3528 = vmatprep.subr.bf16.mxu0 0
    %3529 = vmatpush1.bf16.msra.mxu0 0
    %3530 = vmatprep.subr.bf16.mxu0 0
    %3531 = vmatpush1.bf16.msra.mxu0 0
    %3532 = vmatprep.subr.bf16.mxu0 0
    %3533 = vmatpush1.bf16.msra.mxu0 0
    %3534 = vmatprep.subr.bf16.mxu0 0
    %3535 = vmatpush1.bf16.msra.mxu0 0
    %3536 = vmatprep.subr.bf16.mxu0 0
    %3537 = vmatpush1.bf16.msra.mxu0 0
    %3538 = vmatprep.subr.bf16.mxu0 0
    %3539 = vmatpush1.bf16.msra.mxu0 0
    %3540 = vmatprep.subr.bf16.mxu0 0
    %3541 = vmatpush1.bf16.msra.mxu0 0
    %3542 = vmatprep.mubr.bf16.mxu0 0
    %3543 = vmatmul.mubr.bf16.gmra.mrb[0].mxu0 %v3061
    %v3544 = vpop.f32.mrb[0].mxu0
    %v3545 = vadd.f32 %v3433, %v3544
    %v3546 = vpop.f32.mrb[0].mxu0
    %v3547 = vpop.f32.mrb[0].mxu0
    %v3548 = vpop.f32.mrb[0].mxu0
    %3549 = vdwg.mxu0
    %v3554 = vunpack.c.l.b16 %v2981
    %v3555 = vunpack.c.l.b16 %v2982
    %v3556 = vunpack.c.l.b16 %v2983
    %v3557 = vunpack.c.l.b16 %v2984
    %v3558 = vpack.c.b16 %v3555, %v3554
    %v3559 = vpack.c.b16 %v3557, %v3556
    %3562 = vmatprep.subr.bf16.mxu0 0
    %3563 = vmatpush1.bf16.msra.mxu0 %v3558
    %3564 = vmatprep.subr.bf16.mxu0 0
    %3565 = vmatpush1.bf16.msra.mxu0 %v3559
    %3566 = vmatprep.subr.bf16.mxu0 0
    %3567 = vmatpush1.bf16.msra.mxu0 0
    %3568 = vmatprep.subr.bf16.mxu0 0
    %3569 = vmatpush1.bf16.msra.mxu0 0
    %3570 = vmatprep.subr.bf16.mxu0 0
    %3571 = vmatpush1.bf16.msra.mxu0 0
    %3572 = vmatprep.subr.bf16.mxu0 0
    %3573 = vmatpush1.bf16.msra.mxu0 0
    %3574 = vmatprep.subr.bf16.mxu0 0
    %3575 = vmatpush1.bf16.msra.mxu0 0
    %3576 = vmatprep.subr.bf16.mxu0 0
    %3577 = vmatpush1.bf16.msra.mxu0 0
    %3578 = vmatprep.subr.bf16.mxu0 0
    %3579 = vmatpush1.bf16.msra.mxu0 0
    %3580 = vmatprep.subr.bf16.mxu0 0
    %3581 = vmatpush1.bf16.msra.mxu0 0
    %3582 = vmatprep.subr.bf16.mxu0 0
    %3583 = vmatpush1.bf16.msra.mxu0 0
    %3584 = vmatprep.subr.bf16.mxu0 0
    %3585 = vmatpush1.bf16.msra.mxu0 0
    %3586 = vmatprep.subr.bf16.mxu0 0
    %3587 = vmatpush1.bf16.msra.mxu0 0
    %3588 = vmatprep.subr.bf16.mxu0 0
    %3589 = vmatpush1.bf16.msra.mxu0 0
    %3590 = vmatprep.subr.bf16.mxu0 0
    %3591 = vmatpush1.bf16.msra.mxu0 0
    %3592 = vmatprep.subr.bf16.mxu0 0
    %3593 = vmatpush1.bf16.msra.mxu0 0
    %3594 = vmatprep.mubr.bf16.mxu0 0
    %3595 = vmatmul.mubr.bf16.gmra.mrb[0].mxu0 %v3061
    %v3596 = vpop.f32.mrb[0].mxu0
    %v3597 = vadd.f32 %v3437, %v3596
    %v3598 = vpop.f32.mrb[0].mxu0
    %v3599 = vpop.f32.mrb[0].mxu0
    %v3600 = vpop.f32.mrb[0].mxu0
    %3601 = vdwg.mxu0
    %v3606 = vunpack.c.l.b16 %v2985
    %v3607 = vunpack.c.l.b16 %v2986
    %v3608 = vunpack.c.l.b16 %v2987
    %v3609 = vunpack.c.l.b16 %v2988
    %v3610 = vpack.c.b16 %v3607, %v3606
    %v3611 = vpack.c.b16 %v3609, %v3608
    %3614 = vmatprep.subr.bf16.mxu0 0
    %3615 = vmatpush1.bf16.msra.mxu0 %v3610
    %3616 = vmatprep.subr.bf16.mxu0 0
    %3617 = vmatpush1.bf16.msra.mxu0 %v3611
    %3618 = vmatprep.subr.bf16.mxu0 0
    %3619 = vmatpush1.bf16.msra.mxu0 0
    %3620 = vmatprep.subr.bf16.mxu0 0
    %3621 = vmatpush1.bf16.msra.mxu0 0
    %3622 = vmatprep.subr.bf16.mxu0 0
    %3623 = vmatpush1.bf16.msra.mxu0 0
    %3624 = vmatprep.subr.bf16.mxu0 0
    %3625 = vmatpush1.bf16.msra.mxu0 0
    %3626 = vmatprep.subr.bf16.mxu0 0
    %3627 = vmatpush1.bf16.msra.mxu0 0
    %3628 = vmatprep.subr.bf16.mxu0 0
    %3629 = vmatpush1.bf16.msra.mxu0 0
    %3630 = vmatprep.subr.bf16.mxu0 0
    %3631 = vmatpush1.bf16.msra.mxu0 0
    %3632 = vmatprep.subr.bf16.mxu0 0
    %3633 = vmatpush1.bf16.msra.mxu0 0
    %3634 = vmatprep.subr.bf16.mxu0 0
    %3635 = vmatpush1.bf16.msra.mxu0 0
    %3636 = vmatprep.subr.bf16.mxu0 0
    %3637 = vmatpush1.bf16.msra.mxu0 0
    %3638 = vmatprep.subr.bf16.mxu0 0
    %3639 = vmatpush1.bf16.msra.mxu0 0
    %3640 = vmatprep.subr.bf16.mxu0 0
    %3641 = vmatpush1.bf16.msra.mxu0 0
    %3642 = vmatprep.subr.bf16.mxu0 0
    %3643 = vmatpush1.bf16.msra.mxu0 0
    %3644 = vmatprep.subr.bf16.mxu0 0
    %3645 = vmatpush1.bf16.msra.mxu0 0
    %3646 = vmatprep.mubr.bf16.mxu0 0
    %3647 = vmatmul.mubr.bf16.gmra.mrb[0].mxu0 %v3061
    %v3648 = vpop.f32.mrb[0].mxu0
    %v3649 = vadd.f32 %v3441, %v3648
    %v3650 = vpop.f32.mrb[0].mxu0
    %v3651 = vpop.f32.mrb[0].mxu0
    %v3652 = vpop.f32.mrb[0].mxu0
    %3653 = vdwg.mxu0
    %3654 = vmatprep.subr.bf16.mxu0 0
    %3655 = vmatpush1.bf16.msra.mxu0 %v3454
    %3656 = vmatprep.subr.bf16.mxu0 0
    %3657 = vmatpush1.bf16.msra.mxu0 %v3455
    %3658 = vmatprep.subr.bf16.mxu0 0
    %3659 = vmatpush1.bf16.msra.mxu0 0
    %3660 = vmatprep.subr.bf16.mxu0 0
    %3661 = vmatpush1.bf16.msra.mxu0 0
    %3662 = vmatprep.subr.bf16.mxu0 0
    %3663 = vmatpush1.bf16.msra.mxu0 0
    %3664 = vmatprep.subr.bf16.mxu0 0
    %3665 = vmatpush1.bf16.msra.mxu0 0
    %3666 = vmatprep.subr.bf16.mxu0 0
    %3667 = vmatpush1.bf16.msra.mxu0 0
    %3668 = vmatprep.subr.bf16.mxu0 0
    %3669 = vmatpush1.bf16.msra.mxu0 0
    %3670 = vmatprep.subr.bf16.mxu0 0
    %3671 = vmatpush1.bf16.msra.mxu0 0
    %3672 = vmatprep.subr.bf16.mxu0 0
    %3673 = vmatpush1.bf16.msra.mxu0 0
    %3674 = vmatprep.subr.bf16.mxu0 0
    %3675 = vmatpush1.bf16.msra.mxu0 0
    %3676 = vmatprep.subr.bf16.mxu0 0
    %3677 = vmatpush1.bf16.msra.mxu0 0
    %3678 = vmatprep.subr.bf16.mxu0 0
    %3679 = vmatpush1.bf16.msra.mxu0 0
    %3680 = vmatprep.subr.bf16.mxu0 0
    %3681 = vmatpush1.bf16.msra.mxu0 0
    %3682 = vmatprep.subr.bf16.mxu0 0
    %3683 = vmatpush1.bf16.msra.mxu0 0
    %3684 = vmatprep.subr.bf16.mxu0 0
    %3685 = vmatpush1.bf16.msra.mxu0 0
    %3686 = vmatprep.mubr.bf16.mxu0 0
    %3687 = vmatmul.mubr.bf16.gmra.mrb[0].mxu0 %v3260
    %v3688 = vpop.f32.mrb[0].mxu0
    %v3689 = vadd.f32 %v3429, %v3688
    %v3690 = vpop.f32.mrb[0].mxu0
    %v3691 = vpop.f32.mrb[0].mxu0
    %v3692 = vpop.f32.mrb[0].mxu0
    %3693 = vdwg.mxu0
    %3694 = vmatprep.subr.bf16.mxu0 0
    %3695 = vmatpush1.bf16.msra.mxu0 %v3506
    %3696 = vmatprep.subr.bf16.mxu0 0
    %3697 = vmatpush1.bf16.msra.mxu0 %v3507
    %3698 = vmatprep.subr.bf16.mxu0 0
    %3699 = vmatpush1.bf16.msra.mxu0 0
    %3700 = vmatprep.subr.bf16.mxu0 0
    %3701 = vmatpush1.bf16.msra.mxu0 0
    %3702 = vmatprep.subr.bf16.mxu0 0
    %3703 = vmatpush1.bf16.msra.mxu0 0
    %3704 = vmatprep.subr.bf16.mxu0 0
    %3705 = vmatpush1.bf16.msra.mxu0 0
    %3706 = vmatprep.subr.bf16.mxu0 0
    %3707 = vmatpush1.bf16.msra.mxu0 0
    %3708 = vmatprep.subr.bf16.mxu0 0
    %3709 = vmatpush1.bf16.msra.mxu0 0
    %3710 = vmatprep.subr.bf16.mxu0 0
    %3711 = vmatpush1.bf16.msra.mxu0 0
    %3712 = vmatprep.subr.bf16.mxu0 0
    %3713 = vmatpush1.bf16.msra.mxu0 0
    %3714 = vmatprep.subr.bf16.mxu0 0
    %3715 = vmatpush1.bf16.msra.mxu0 0
    %3716 = vmatprep.subr.bf16.mxu0 0
    %3717 = vmatpush1.bf16.msra.mxu0 0
    %3718 = vmatprep.subr.bf16.mxu0 0
    %3719 = vmatpush1.bf16.msra.mxu0 0
    %3720 = vmatprep.subr.bf16.mxu0 0
    %3721 = vmatpush1.bf16.msra.mxu0 0
    %3722 = vmatprep.subr.bf16.mxu0 0
    %3723 = vmatpush1.bf16.msra.mxu0 0
    %3724 = vmatprep.subr.bf16.mxu0 0
    %3725 = vmatpush1.bf16.msra.mxu0 0
    %3726 = vmatprep.mubr.bf16.mxu0 0
    %3727 = vmatmul.mubr.bf16.gmra.mrb[0].mxu0 %v3260
    %v3728 = vpop.f32.mrb[0].mxu0
    %v3729 = vadd.f32 %v3433, %v3728
    %v3730 = vpop.f32.mrb[0].mxu0
    %v3731 = vpop.f32.mrb[0].mxu0
    %v3732 = vpop.f32.mrb[0].mxu0
    %3733 = vdwg.mxu0
    %3734 = vmatprep.subr.bf16.mxu0 0
    %3735 = vmatpush1.bf16.msra.mxu0 %v3558
    %3736 = vmatprep.subr.bf16.mxu0 0
    %3737 = vmatpush1.bf16.msra.mxu0 %v3559
    %3738 = vmatprep.subr.bf16.mxu0 0
    %3739 = vmatpush1.bf16.msra.mxu0 0
    %3740 = vmatprep.subr.bf16.mxu0 0
    %3741 = vmatpush1.bf16.msra.mxu0 0
    %3742 = vmatprep.subr.bf16.mxu0 0
    %3743 = vmatpush1.bf16.msra.mxu0 0
    %3744 = vmatprep.subr.bf16.mxu0 0
    %3745 = vmatpush1.bf16.msra.mxu0 0
    %3746 = vmatprep.subr.bf16.mxu0 0
    %3747 = vmatpush1.bf16.msra.mxu0 0
    %3748 = vmatprep.subr.bf16.mxu0 0
    %3749 = vmatpush1.bf16.msra.mxu0 0
    %3750 = vmatprep.subr.bf16.mxu0 0
    %3751 = vmatpush1.bf16.msra.mxu0 0
    %3752 = vmatprep.subr.bf16.mxu0 0
    %3753 = vmatpush1.bf16.msra.mxu0 0
    %3754 = vmatprep.subr.bf16.mxu0 0
    %3755 = vmatpush1.bf16.msra.mxu0 0
    %3756 = vmatprep.subr.bf16.mxu0 0
    %3757 = vmatpush1.bf16.msra.mxu0 0
    %3758 = vmatprep.subr.bf16.mxu0 0
    %3759 = vmatpush1.bf16.msra.mxu0 0
    %3760 = vmatprep.subr.bf16.mxu0 0
    %3761 = vmatpush1.bf16.msra.mxu0 0
    %3762 = vmatprep.subr.bf16.mxu0 0
    %3763 = vmatpush1.bf16.msra.mxu0 0
    %3764 = vmatprep.subr.bf16.mxu0 0
    %3765 = vmatpush1.bf16.msra.mxu0 0
    %3766 = vmatprep.mubr.bf16.mxu0 0
    %3767 = vmatmul.mubr.bf16.gmra.mrb[0].mxu0 %v3260
    %v3768 = vpop.f32.mrb[0].mxu0
    %v3769 = vadd.f32 %v3437, %v3768
    %v3770 = vpop.f32.mrb[0].mxu0
    %v3771 = vpop.f32.mrb[0].mxu0
    %v3772 = vpop.f32.mrb[0].mxu0
    %3773 = vdwg.mxu0
    %3774 = vmatprep.subr.bf16.mxu0 0
    %3775 = vmatpush1.bf16.msra.mxu0 %v3610
    %3776 = vmatprep.subr.bf16.mxu0 0
    %3777 = vmatpush1.bf16.msra.mxu0 %v3611
    %3778 = vmatprep.subr.bf16.mxu0 0
    %3779 = vmatpush1.bf16.msra.mxu0 0
    %3780 = vmatprep.subr.bf16.mxu0 0
    %3781 = vmatpush1.bf16.msra.mxu0 0
    %3782 = vmatprep.subr.bf16.mxu0 0
    %3783 = vmatpush1.bf16.msra.mxu0 0
    %3784 = vmatprep.subr.bf16.mxu0 0
    %3785 = vmatpush1.bf16.msra.mxu0 0
    %3786 = vmatprep.subr.bf16.mxu0 0
    %3787 = vmatpush1.bf16.msra.mxu0 0
    %3788 = vmatprep.subr.bf16.mxu0 0
    %3789 = vmatpush1.bf16.msra.mxu0 0
    %3790 = vmatprep.subr.bf16.mxu0 0
    %3791 = vmatpush1.bf16.msra.mxu0 0
    %3792 = vmatprep.subr.bf16.mxu0 0
    %3793 = vmatpush1.bf16.msra.mxu0 0
    %3794 = vmatprep.subr.bf16.mxu0 0
    %3795 = vmatpush1.bf16.msra.mxu0 0
    %3796 = vmatprep.subr.bf16.mxu0 0
    %3797 = vmatpush1.bf16.msra.mxu0 0
    %3798 = vmatprep.subr.bf16.mxu0 0
    %3799 = vmatpush1.bf16.msra.mxu0 0
    %3800 = vmatprep.subr.bf16.mxu0 0
    %3801 = vmatpush1.bf16.msra.mxu0 0
    %3802 = vmatprep.subr.bf16.mxu0 0
    %3803 = vmatpush1.bf16.msra.mxu0 0
    %3804 = vmatprep.subr.bf16.mxu0 0
    %3805 = vmatpush1.bf16.msra.mxu0 0
    %3806 = vmatprep.mubr.bf16.mxu0 0
    %3807 = vmatmul.mubr.bf16.gmra.mrb[0].mxu0 %v3260
    %v3808 = vpop.f32.mrb[0].mxu0
    %v3809 = vadd.f32 %v3441, %v3808
    %v3810 = vpop.f32.mrb[0].mxu0
    %v3811 = vpop.f32.mrb[0].mxu0
    %v3812 = vpop.f32.mrb[0].mxu0
    %3813 = vdwg.mxu0
    %v3818 = vlaneseq
    %v3819 = vshrl.u32 %v3818, 7
    %v3820 = vsub.s32 0, %v3819
    %v3821 = vrot.slane %v3014, %v3820
    %v3822 = vlaneseq
    %v3823 = vshrl.u32 %v3822, 7
    %v3824 = vsub.s32 0, %v3823
    %v3825 = vrot.slane %v3015, %v3824
    %v3826 = vlaneseq
    %v3827 = vshrl.u32 %v3826, 7
    %v3828 = vsub.s32 0, %v3827
    %v3829 = vrot.slane %v3016, %v3828
    %v3830 = vlaneseq
    %v3831 = vshrl.u32 %v3830, 7
    %v3832 = vsub.s32 0, %v3831
    %v3833 = vrot.slane %v3017, %v3832
    %v3842 = vunpack.c.l.b16 %v2989
    %v3843 = vunpack.c.l.b16 %v2990
    %v3844 = vunpack.c.l.b16 %v2991
    %v3845 = vunpack.c.l.b16 %v2992
    %v3846 = vpack.c.b16 %v3843, %v3842
    %v3847 = vpack.c.b16 %v3845, %v3844
    %3850 = vmatprep.subr.bf16.mxu0 0
    %3851 = vmatpush1.bf16.msra.mxu0 %v3846
    %3852 = vmatprep.subr.bf16.mxu0 0
    %3853 = vmatpush1.bf16.msra.mxu0 %v3847
    %3854 = vmatprep.subr.bf16.mxu0 0
    %3855 = vmatpush1.bf16.msra.mxu0 0
    %3856 = vmatprep.subr.bf16.mxu0 0
    %3857 = vmatpush1.bf16.msra.mxu0 0
    %3858 = vmatprep.subr.bf16.mxu0 0
    %3859 = vmatpush1.bf16.msra.mxu0 0
    %3860 = vmatprep.subr.bf16.mxu0 0
    %3861 = vmatpush1.bf16.msra.mxu0 0
    %3862 = vmatprep.subr.bf16.mxu0 0
    %3863 = vmatpush1.bf16.msra.mxu0 0
    %3864 = vmatprep.subr.bf16.mxu0 0
    %3865 = vmatpush1.bf16.msra.mxu0 0
    %3866 = vmatprep.subr.bf16.mxu0 0
    %3867 = vmatpush1.bf16.msra.mxu0 0
    %3868 = vmatprep.subr.bf16.mxu0 0
    %3869 = vmatpush1.bf16.msra.mxu0 0
    %3870 = vmatprep.subr.bf16.mxu0 0
    %3871 = vmatpush1.bf16.msra.mxu0 0
    %3872 = vmatprep.subr.bf16.mxu0 0
    %3873 = vmatpush1.bf16.msra.mxu0 0
    %3874 = vmatprep.subr.bf16.mxu0 0
    %3875 = vmatpush1.bf16.msra.mxu0 0
    %3876 = vmatprep.subr.bf16.mxu0 0
    %3877 = vmatpush1.bf16.msra.mxu0 0
    %3878 = vmatprep.subr.bf16.mxu0 0
    %3879 = vmatpush1.bf16.msra.mxu0 0
    %3880 = vmatprep.subr.bf16.mxu0 0
    %3881 = vmatpush1.bf16.msra.mxu0 0
    %3882 = vmatprep.mubr.bf16.mxu0 0
    %3883 = vmatmul.mubr.bf16.gmra.mrb[0].mxu0 %v3061
    %v3884 = vpop.f32.mrb[0].mxu0
    %v3885 = vadd.f32 %v3821, %v3884
    %v3886 = vpop.f32.mrb[0].mxu0
    %v3887 = vpop.f32.mrb[0].mxu0
    %v3888 = vpop.f32.mrb[0].mxu0
    %3889 = vdwg.mxu0
    %v3894 = vunpack.c.l.b16 %v2993
    %v3895 = vunpack.c.l.b16 %v2994
    %v3896 = vunpack.c.l.b16 %v2995
    %v3897 = vunpack.c.l.b16 %v2996
    %v3898 = vpack.c.b16 %v3895, %v3894
    %v3899 = vpack.c.b16 %v3897, %v3896
    %3902 = vmatprep.subr.bf16.mxu0 0
    %3903 = vmatpush1.bf16.msra.mxu0 %v3898
    %3904 = vmatprep.subr.bf16.mxu0 0
    %3905 = vmatpush1.bf16.msra.mxu0 %v3899
    %3906 = vmatprep.subr.bf16.mxu0 0
    %3907 = vmatpush1.bf16.msra.mxu0 0
    %3908 = vmatprep.subr.bf16.mxu0 0
    %3909 = vmatpush1.bf16.msra.mxu0 0
    %3910 = vmatprep.subr.bf16.mxu0 0
    %3911 = vmatpush1.bf16.msra.mxu0 0
    %3912 = vmatprep.subr.bf16.mxu0 0
    %3913 = vmatpush1.bf16.msra.mxu0 0
    %3914 = vmatprep.subr.bf16.mxu0 0
    %3915 = vmatpush1.bf16.msra.mxu0 0
    %3916 = vmatprep.subr.bf16.mxu0 0
    %3917 = vmatpush1.bf16.msra.mxu0 0
    %3918 = vmatprep.subr.bf16.mxu0 0
    %3919 = vmatpush1.bf16.msra.mxu0 0
    %3920 = vmatprep.subr.bf16.mxu0 0
    %3921 = vmatpush1.bf16.msra.mxu0 0
    %3922 = vmatprep.subr.bf16.mxu0 0
    %3923 = vmatpush1.bf16.msra.mxu0 0
    %3924 = vmatprep.subr.bf16.mxu0 0
    %3925 = vmatpush1.bf16.msra.mxu0 0
    %3926 = vmatprep.subr.bf16.mxu0 0
    %3927 = vmatpush1.bf16.msra.mxu0 0
    %3928 = vmatprep.subr.bf16.mxu0 0
    %3929 = vmatpush1.bf16.msra.mxu0 0
    %3930 = vmatprep.subr.bf16.mxu0 0
    %3931 = vmatpush1.bf16.msra.mxu0 0
    %3932 = vmatprep.subr.bf16.mxu0 0
    %3933 = vmatpush1.bf16.msra.mxu0 0
    %3934 = vmatprep.mubr.bf16.mxu0 0
    %3935 = vmatmul.mubr.bf16.gmra.mrb[0].mxu0 %v3061
    %v3936 = vpop.f32.mrb[0].mxu0
    %v3937 = vadd.f32 %v3825, %v3936
    %v3938 = vpop.f32.mrb[0].mxu0
    %v3939 = vpop.f32.mrb[0].mxu0
    %v3940 = vpop.f32.mrb[0].mxu0
    %3941 = vdwg.mxu0
    %v3946 = vunpack.c.l.b16 %v2997
    %v3947 = vunpack.c.l.b16 %v2998
    %v3948 = vunpack.c.l.b16 %v2999
    %v3949 = vunpack.c.l.b16 %v3000
    %v3950 = vpack.c.b16 %v3947, %v3946
    %v3951 = vpack.c.b16 %v3949, %v3948
    %3954 = vmatprep.subr.bf16.mxu0 0
    %3955 = vmatpush1.bf16.msra.mxu0 %v3950
    %3956 = vmatprep.subr.bf16.mxu0 0
    %3957 = vmatpush1.bf16.msra.mxu0 %v3951
    %3958 = vmatprep.subr.bf16.mxu0 0
    %3959 = vmatpush1.bf16.msra.mxu0 0
    %3960 = vmatprep.subr.bf16.mxu0 0
    %3961 = vmatpush1.bf16.msra.mxu0 0
    %3962 = vmatprep.subr.bf16.mxu0 0
    %3963 = vmatpush1.bf16.msra.mxu0 0
    %3964 = vmatprep.subr.bf16.mxu0 0
    %3965 = vmatpush1.bf16.msra.mxu0 0
    %3966 = vmatprep.subr.bf16.mxu0 0
    %3967 = vmatpush1.bf16.msra.mxu0 0
    %3968 = vmatprep.subr.bf16.mxu0 0
    %3969 = vmatpush1.bf16.msra.mxu0 0
    %3970 = vmatprep.subr.bf16.mxu0 0
    %3971 = vmatpush1.bf16.msra.mxu0 0
    %3972 = vmatprep.subr.bf16.mxu0 0
    %3973 = vmatpush1.bf16.msra.mxu0 0
    %3974 = vmatprep.subr.bf16.mxu0 0
    %3975 = vmatpush1.bf16.msra.mxu0 0
    %3976 = vmatprep.subr.bf16.mxu0 0
    %3977 = vmatpush1.bf16.msra.mxu0 0
    %3978 = vmatprep.subr.bf16.mxu0 0
    %3979 = vmatpush1.bf16.msra.mxu0 0
    %3980 = vmatprep.subr.bf16.mxu0 0
    %3981 = vmatpush1.bf16.msra.mxu0 0
    %3982 = vmatprep.subr.bf16.mxu0 0
    %3983 = vmatpush1.bf16.msra.mxu0 0
    %3984 = vmatprep.subr.bf16.mxu0 0
    %3985 = vmatpush1.bf16.msra.mxu0 0
    %3986 = vmatprep.mubr.bf16.mxu0 0
    %3987 = vmatmul.mubr.bf16.gmra.mrb[0].mxu0 %v3061
    %v3988 = vpop.f32.mrb[0].mxu0
    %v3989 = vadd.f32 %v3829, %v3988
    %v3990 = vpop.f32.mrb[0].mxu0
    %v3991 = vpop.f32.mrb[0].mxu0
    %v3992 = vpop.f32.mrb[0].mxu0
    %3993 = vdwg.mxu0
    %v3998 = vunpack.c.l.b16 %v3001
    %v3999 = vunpack.c.l.b16 %v3002
    %v4000 = vunpack.c.l.b16 %v3003
    %v4001 = vunpack.c.l.b16 %v3004
    %v4002 = vpack.c.b16 %v3999, %v3998
    %v4003 = vpack.c.b16 %v4001, %v4000
    %4006 = vmatprep.subr.bf16.mxu0 0
    %4007 = vmatpush1.bf16.msra.mxu0 %v4002
    %4008 = vmatprep.subr.bf16.mxu0 0
    %4009 = vmatpush1.bf16.msra.mxu0 %v4003
    %4010 = vmatprep.subr.bf16.mxu0 0
    %4011 = vmatpush1.bf16.msra.mxu0 0
    %4012 = vmatprep.subr.bf16.mxu0 0
    %4013 = vmatpush1.bf16.msra.mxu0 0
    %4014 = vmatprep.subr.bf16.mxu0 0
    %4015 = vmatpush1.bf16.msra.mxu0 0
    %4016 = vmatprep.subr.bf16.mxu0 0
    %4017 = vmatpush1.bf16.msra.mxu0 0
    %4018 = vmatprep.subr.bf16.mxu0 0
    %4019 = vmatpush1.bf16.msra.mxu0 0
    %4020 = vmatprep.subr.bf16.mxu0 0
    %4021 = vmatpush1.bf16.msra.mxu0 0
    %4022 = vmatprep.subr.bf16.mxu0 0
    %4023 = vmatpush1.bf16.msra.mxu0 0
    %4024 = vmatprep.subr.bf16.mxu0 0
    %4025 = vmatpush1.bf16.msra.mxu0 0
    %4026 = vmatprep.subr.bf16.mxu0 0
    %4027 = vmatpush1.bf16.msra.mxu0 0
    %4028 = vmatprep.subr.bf16.mxu0 0
    %4029 = vmatpush1.bf16.msra.mxu0 0
    %4030 = vmatprep.subr.bf16.mxu0 0
    %4031 = vmatpush1.bf16.msra.mxu0 0
    %4032 = vmatprep.subr.bf16.mxu0 0
    %4033 = vmatpush1.bf16.msra.mxu0 0
    %4034 = vmatprep.subr.bf16.mxu0 0
    %4035 = vmatpush1.bf16.msra.mxu0 0
    %4036 = vmatprep.subr.bf16.mxu0 0
    %4037 = vmatpush1.bf16.msra.mxu0 0
    %4038 = vmatprep.mubr.bf16.mxu0 0
    %4039 = vmatmul.mubr.bf16.gmra.mrb[0].mxu0 %v3061
    %v4040 = vpop.f32.mrb[0].mxu0
    %v4041 = vadd.f32 %v3833, %v4040
    %v4042 = vpop.f32.mrb[0].mxu0
    %v4043 = vpop.f32.mrb[0].mxu0
    %v4044 = vpop.f32.mrb[0].mxu0
    %4045 = vdwg.mxu0
    %4046 = vmatprep.subr.bf16.mxu0 0
    %4047 = vmatpush1.bf16.msra.mxu0 %v3846
    %4048 = vmatprep.subr.bf16.mxu0 0
    %4049 = vmatpush1.bf16.msra.mxu0 %v3847
    %4050 = vmatprep.subr.bf16.mxu0 0
    %4051 = vmatpush1.bf16.msra.mxu0 0
    %4052 = vmatprep.subr.bf16.mxu0 0
    %4053 = vmatpush1.bf16.msra.mxu0 0
    %4054 = vmatprep.subr.bf16.mxu0 0
    %4055 = vmatpush1.bf16.msra.mxu0 0
    %4056 = vmatprep.subr.bf16.mxu0 0
    %4057 = vmatpush1.bf16.msra.mxu0 0
    %4058 = vmatprep.subr.bf16.mxu0 0
    %4059 = vmatpush1.bf16.msra.mxu0 0
    %4060 = vmatprep.subr.bf16.mxu0 0
    %4061 = vmatpush1.bf16.msra.mxu0 0
    %4062 = vmatprep.subr.bf16.mxu0 0
    %4063 = vmatpush1.bf16.msra.mxu0 0
    %4064 = vmatprep.subr.bf16.mxu0 0
    %4065 = vmatpush1.bf16.msra.mxu0 0
    %4066 = vmatprep.subr.bf16.mxu0 0
    %4067 = vmatpush1.bf16.msra.mxu0 0
    %4068 = vmatprep.subr.bf16.mxu0 0
    %4069 = vmatpush1.bf16.msra.mxu0 0
    %4070 = vmatprep.subr.bf16.mxu0 0
    %4071 = vmatpush1.bf16.msra.mxu0 0
    %4072 = vmatprep.subr.bf16.mxu0 0
    %4073 = vmatpush1.bf16.msra.mxu0 0
    %4074 = vmatprep.subr.bf16.mxu0 0
    %4075 = vmatpush1.bf16.msra.mxu0 0
    %4076 = vmatprep.subr.bf16.mxu0 0
    %4077 = vmatpush1.bf16.msra.mxu0 0
    %4078 = vmatprep.mubr.bf16.mxu0 0
    %4079 = vmatmul.mubr.bf16.gmra.mrb[0].mxu0 %v3260
    %v4080 = vpop.f32.mrb[0].mxu0
    %v4081 = vadd.f32 %v3821, %v4080
    %v4082 = vpop.f32.mrb[0].mxu0
    %v4083 = vpop.f32.mrb[0].mxu0
    %v4084 = vpop.f32.mrb[0].mxu0
    %4085 = vdwg.mxu0
    %4086 = vmatprep.subr.bf16.mxu0 0
    %4087 = vmatpush1.bf16.msra.mxu0 %v3898
    %4088 = vmatprep.subr.bf16.mxu0 0
    %4089 = vmatpush1.bf16.msra.mxu0 %v3899
    %4090 = vmatprep.subr.bf16.mxu0 0
    %4091 = vmatpush1.bf16.msra.mxu0 0
    %4092 = vmatprep.subr.bf16.mxu0 0
    %4093 = vmatpush1.bf16.msra.mxu0 0
    %4094 = vmatprep.subr.bf16.mxu0 0
    %4095 = vmatpush1.bf16.msra.mxu0 0
    %4096 = vmatprep.subr.bf16.mxu0 0
    %4097 = vmatpush1.bf16.msra.mxu0 0
    %4098 = vmatprep.subr.bf16.mxu0 0
    %4099 = vmatpush1.bf16.msra.mxu0 0
    %4100 = vmatprep.subr.bf16.mxu0 0
    %4101 = vmatpush1.bf16.msra.mxu0 0
    %4102 = vmatprep.subr.bf16.mxu0 0
    %4103 = vmatpush1.bf16.msra.mxu0 0
    %4104 = vmatprep.subr.bf16.mxu0 0
    %4105 = vmatpush1.bf16.msra.mxu0 0
    %4106 = vmatprep.subr.bf16.mxu0 0
    %4107 = vmatpush1.bf16.msra.mxu0 0
    %4108 = vmatprep.subr.bf16.mxu0 0
    %4109 = vmatpush1.bf16.msra.mxu0 0
    %4110 = vmatprep.subr.bf16.mxu0 0
    %4111 = vmatpush1.bf16.msra.mxu0 0
    %4112 = vmatprep.subr.bf16.mxu0 0
    %4113 = vmatpush1.bf16.msra.mxu0 0
    %4114 = vmatprep.subr.bf16.mxu0 0
    %4115 = vmatpush1.bf16.msra.mxu0 0
    %4116 = vmatprep.subr.bf16.mxu0 0
    %4117 = vmatpush1.bf16.msra.mxu0 0
    %4118 = vmatprep.mubr.bf16.mxu0 0
    %4119 = vmatmul.mubr.bf16.gmra.mrb[0].mxu0 %v3260
    %v4120 = vpop.f32.mrb[0].mxu0
    %v4121 = vadd.f32 %v3825, %v4120
    %v4122 = vpop.f32.mrb[0].mxu0
    %v4123 = vpop.f32.mrb[0].mxu0
    %v4124 = vpop.f32.mrb[0].mxu0
    %4125 = vdwg.mxu0
    %4126 = vmatprep.subr.bf16.mxu0 0
    %4127 = vmatpush1.bf16.msra.mxu0 %v3950
    %4128 = vmatprep.subr.bf16.mxu0 0
    %4129 = vmatpush1.bf16.msra.mxu0 %v3951
    %4130 = vmatprep.subr.bf16.mxu0 0
    %4131 = vmatpush1.bf16.msra.mxu0 0
    %4132 = vmatprep.subr.bf16.mxu0 0
    %4133 = vmatpush1.bf16.msra.mxu0 0
    %4134 = vmatprep.subr.bf16.mxu0 0
    %4135 = vmatpush1.bf16.msra.mxu0 0
    %4136 = vmatprep.subr.bf16.mxu0 0
    %4137 = vmatpush1.bf16.msra.mxu0 0
    %4138 = vmatprep.subr.bf16.mxu0 0
    %4139 = vmatpush1.bf16.msra.mxu0 0
    %4140 = vmatprep.subr.bf16.mxu0 0
    %4141 = vmatpush1.bf16.msra.mxu0 0
    %4142 = vmatprep.subr.bf16.mxu0 0
    %4143 = vmatpush1.bf16.msra.mxu0 0
    %4144 = vmatprep.subr.bf16.mxu0 0
    %4145 = vmatpush1.bf16.msra.mxu0 0
    %4146 = vmatprep.subr.bf16.mxu0 0
    %4147 = vmatpush1.bf16.msra.mxu0 0
    %4148 = vmatprep.subr.bf16.mxu0 0
    %4149 = vmatpush1.bf16.msra.mxu0 0
    %4150 = vmatprep.subr.bf16.mxu0 0
    %4151 = vmatpush1.bf16.msra.mxu0 0
    %4152 = vmatprep.subr.bf16.mxu0 0
    %4153 = vmatpush1.bf16.msra.mxu0 0
    %4154 = vmatprep.subr.bf16.mxu0 0
    %4155 = vmatpush1.bf16.msra.mxu0 0
    %4156 = vmatprep.subr.bf16.mxu0 0
    %4157 = vmatpush1.bf16.msra.mxu0 0
    %4158 = vmatprep.mubr.bf16.mxu0 0
    %4159 = vmatmul.mubr.bf16.gmra.mrb[0].mxu0 %v3260
    %v4160 = vpop.f32.mrb[0].mxu0
    %v4161 = vadd.f32 %v3829, %v4160
    %v4162 = vpop.f32.mrb[0].mxu0
    %v4163 = vpop.f32.mrb[0].mxu0
    %v4164 = vpop.f32.mrb[0].mxu0
    %4165 = vdwg.mxu0
    %4166 = vmatprep.subr.bf16.mxu0 0
    %4167 = vmatpush1.bf16.msra.mxu0 %v4002
    %4168 = vmatprep.subr.bf16.mxu0 0
    %4169 = vmatpush1.bf16.msra.mxu0 %v4003
    %4170 = vmatprep.subr.bf16.mxu0 0
    %4171 = vmatpush1.bf16.msra.mxu0 0
    %4172 = vmatprep.subr.bf16.mxu0 0
    %4173 = vmatpush1.bf16.msra.mxu0 0
    %4174 = vmatprep.subr.bf16.mxu0 0
    %4175 = vmatpush1.bf16.msra.mxu0 0
    %4176 = vmatprep.subr.bf16.mxu0 0
    %4177 = vmatpush1.bf16.msra.mxu0 0
    %4178 = vmatprep.subr.bf16.mxu0 0
    %4179 = vmatpush1.bf16.msra.mxu0 0
    %4180 = vmatprep.subr.bf16.mxu0 0
    %4181 = vmatpush1.bf16.msra.mxu0 0
    %4182 = vmatprep.subr.bf16.mxu0 0
    %4183 = vmatpush1.bf16.msra.mxu0 0
    %4184 = vmatprep.subr.bf16.mxu0 0
    %4185 = vmatpush1.bf16.msra.mxu0 0
    %4186 = vmatprep.subr.bf16.mxu0 0
    %4187 = vmatpush1.bf16.msra.mxu0 0
    %4188 = vmatprep.subr.bf16.mxu0 0
    %4189 = vmatpush1.bf16.msra.mxu0 0
    %4190 = vmatprep.subr.bf16.mxu0 0
    %4191 = vmatpush1.bf16.msra.mxu0 0
    %4192 = vmatprep.subr.bf16.mxu0 0
    %4193 = vmatpush1.bf16.msra.mxu0 0
    %4194 = vmatprep.subr.bf16.mxu0 0
    %4195 = vmatpush1.bf16.msra.mxu0 0
    %4196 = vmatprep.subr.bf16.mxu0 0
    %4197 = vmatpush1.bf16.msra.mxu0 0
    %4198 = vmatprep.mubr.bf16.mxu0 0
    %4199 = vmatmul.mubr.bf16.gmra.mrb[0].mxu0 %v3260
    %v4200 = vpop.f32.mrb[0].mxu0
    %v4201 = vadd.f32 %v3833, %v4200
    %v4202 = vpop.f32.mrb[0].mxu0
    %v4203 = vpop.f32.mrb[0].mxu0
    %v4204 = vpop.f32.mrb[0].mxu0
    %4205 = vdwg.mxu0
    %v4206 = vpack.c.bf16 %v3098, %v3098
    %v4207 = vpack.c.bf16 %v3150, %v3150
    %v4208 = vpack.c.bf16 %v3202, %v3202
    %v4209 = vpack.c.bf16 %v3254, %v3254
    %v4210 = vpack.c.bf16 %v3297, %v3297
    %v4211 = vpack.c.bf16 %v3337, %v3337
    %v4212 = vpack.c.bf16 %v3377, %v3377
    %v4213 = vpack.c.bf16 %v3417, %v3417
    %v4214 = vpack.c.bf16 %v3493, %v3493
    %v4215 = vpack.c.bf16 %v3545, %v3545
    %v4216 = vpack.c.bf16 %v3597, %v3597
    %v4217 = vpack.c.bf16 %v3649, %v3649
    %v4218 = vpack.c.bf16 %v3689, %v3689
    %v4219 = vpack.c.bf16 %v3729, %v3729
    %v4220 = vpack.c.bf16 %v3769, %v3769
    %v4221 = vpack.c.bf16 %v3809, %v3809
    %v4223 = vsel %vm1440, %v4206, 0
    %v4226 = vsel %vm1440, %v4214, 0
    %4228 = vmatprep.subr.bf16.mxu0 0
    %4229 = vmatpush1.bf16.xpose.msra.mxu0 %v4226
    %4230 = vmatprep.subr.bf16.mxu0 0
    %4231 = vmatpush1.bf16.xpose.msra.mxu0 0
    %4232 = vmatprep.subr.bf16.mxu0 0
    %4233 = vmatpush1.bf16.xpose.msra.mxu0 0
    %4234 = vmatprep.subr.bf16.mxu0 0
    %4235 = vmatpush1.bf16.xpose.msra.mxu0 0
    %4236 = vmatprep.subr.bf16.mxu0 0
    %4237 = vmatpush1.bf16.xpose.msra.mxu0 0
    %4238 = vmatprep.subr.bf16.mxu0 0
    %4239 = vmatpush1.bf16.xpose.msra.mxu0 0
    %4240 = vmatprep.subr.bf16.mxu0 0
    %4241 = vmatpush1.bf16.xpose.msra.mxu0 0
    %4242 = vmatprep.subr.bf16.mxu0 0
    %4243 = vmatpush1.bf16.xpose.msra.mxu0 0
    %4244 = vmatprep.subr.bf16.mxu0 0
    %4245 = vmatpush1.bf16.xpose.msra.mxu0 0
    %4246 = vmatprep.subr.bf16.mxu0 0
    %4247 = vmatpush1.bf16.xpose.msra.mxu0 0
    %4248 = vmatprep.subr.bf16.mxu0 0
    %4249 = vmatpush1.bf16.xpose.msra.mxu0 0
    %4250 = vmatprep.subr.bf16.mxu0 0
    %4251 = vmatpush1.bf16.xpose.msra.mxu0 0
    %4252 = vmatprep.subr.bf16.mxu0 0
    %4253 = vmatpush1.bf16.xpose.msra.mxu0 0
    %4254 = vmatprep.subr.bf16.mxu0 0
    %4255 = vmatpush1.bf16.xpose.msra.mxu0 0
    %4256 = vmatprep.subr.bf16.mxu0 0
    %4257 = vmatpush1.bf16.xpose.msra.mxu0 0
    %4258 = vmatprep.subr.bf16.mxu0 0
    %4259 = vmatpush1.bf16.xpose.msra.mxu0 0
    %4260 = vmatprep.mubr.bf16.mxu0 0
    %4261 = vmatmul.mubr.bf16.gmra.mrb[0].mxu0 %v4223
    %v4262 = vpop.f32.mrb[0].mxu0
    %v4263 = vadd.f32 0.0, %v4262
    %v4264 = vpop.f32.mrb[0].mxu0
    %v4265 = vpop.f32.mrb[0].mxu0
    %v4266 = vpop.f32.mrb[0].mxu0
    %4267 = vdwg.mxu0
    %v4269 = vsel %vm1440, %v4207, 0
    %v4272 = vsel %vm1440, %v4215, 0
    %4274 = vmatprep.subr.bf16.mxu0 0
    %4275 = vmatpush1.bf16.xpose.msra.mxu0 %v4272
    %4276 = vmatprep.subr.bf16.mxu0 0
    %4277 = vmatpush1.bf16.xpose.msra.mxu0 0
    %4278 = vmatprep.subr.bf16.mxu0 0
    %4279 = vmatpush1.bf16.xpose.msra.mxu0 0
    %4280 = vmatprep.subr.bf16.mxu0 0
    %4281 = vmatpush1.bf16.xpose.msra.mxu0 0
    %4282 = vmatprep.subr.bf16.mxu0 0
    %4283 = vmatpush1.bf16.xpose.msra.mxu0 0
    %4284 = vmatprep.subr.bf16.mxu0 0
    %4285 = vmatpush1.bf16.xpose.msra.mxu0 0
    %4286 = vmatprep.subr.bf16.mxu0 0
    %4287 = vmatpush1.bf16.xpose.msra.mxu0 0
    %4288 = vmatprep.subr.bf16.mxu0 0
    %4289 = vmatpush1.bf16.xpose.msra.mxu0 0
    %4290 = vmatprep.subr.bf16.mxu0 0
    %4291 = vmatpush1.bf16.xpose.msra.mxu0 0
    %4292 = vmatprep.subr.bf16.mxu0 0
    %4293 = vmatpush1.bf16.xpose.msra.mxu0 0
    %4294 = vmatprep.subr.bf16.mxu0 0
    %4295 = vmatpush1.bf16.xpose.msra.mxu0 0
    %4296 = vmatprep.subr.bf16.mxu0 0
    %4297 = vmatpush1.bf16.xpose.msra.mxu0 0
    %4298 = vmatprep.subr.bf16.mxu0 0
    %4299 = vmatpush1.bf16.xpose.msra.mxu0 0
    %4300 = vmatprep.subr.bf16.mxu0 0
    %4301 = vmatpush1.bf16.xpose.msra.mxu0 0
    %4302 = vmatprep.subr.bf16.mxu0 0
    %4303 = vmatpush1.bf16.xpose.msra.mxu0 0
    %4304 = vmatprep.subr.bf16.mxu0 0
    %4305 = vmatpush1.bf16.xpose.msra.mxu0 0
    %4306 = vmatprep.mubr.bf16.mxu0 0
    %4307 = vmatmul.mubr.bf16.gmra.mrb[0].mxu0 %v4269
    %v4308 = vpop.f32.mrb[0].mxu0
    %v4309 = vadd.f32 0.0, %v4308
    %v4310 = vpop.f32.mrb[0].mxu0
    %v4311 = vpop.f32.mrb[0].mxu0
    %v4312 = vpop.f32.mrb[0].mxu0
    %4313 = vdwg.mxu0
    %v4315 = vsel %vm1440, %v4208, 0
    %v4318 = vsel %vm1440, %v4216, 0
    %4320 = vmatprep.subr.bf16.mxu0 0
    %4321 = vmatpush1.bf16.xpose.msra.mxu0 %v4318
    %4322 = vmatprep.subr.bf16.mxu0 0
    %4323 = vmatpush1.bf16.xpose.msra.mxu0 0
    %4324 = vmatprep.subr.bf16.mxu0 0
    %4325 = vmatpush1.bf16.xpose.msra.mxu0 0
    %4326 = vmatprep.subr.bf16.mxu0 0
    %4327 = vmatpush1.bf16.xpose.msra.mxu0 0
    %4328 = vmatprep.subr.bf16.mxu0 0
    %4329 = vmatpush1.bf16.xpose.msra.mxu0 0
    %4330 = vmatprep.subr.bf16.mxu0 0
    %4331 = vmatpush1.bf16.xpose.msra.mxu0 0
    %4332 = vmatprep.subr.bf16.mxu0 0
    %4333 = vmatpush1.bf16.xpose.msra.mxu0 0
    %4334 = vmatprep.subr.bf16.mxu0 0
    %4335 = vmatpush1.bf16.xpose.msra.mxu0 0
    %4336 = vmatprep.subr.bf16.mxu0 0
    %4337 = vmatpush1.bf16.xpose.msra.mxu0 0
    %4338 = vmatprep.subr.bf16.mxu0 0
    %4339 = vmatpush1.bf16.xpose.msra.mxu0 0
    %4340 = vmatprep.subr.bf16.mxu0 0
    %4341 = vmatpush1.bf16.xpose.msra.mxu0 0
    %4342 = vmatprep.subr.bf16.mxu0 0
    %4343 = vmatpush1.bf16.xpose.msra.mxu0 0
    %4344 = vmatprep.subr.bf16.mxu0 0
    %4345 = vmatpush1.bf16.xpose.msra.mxu0 0
    %4346 = vmatprep.subr.bf16.mxu0 0
    %4347 = vmatpush1.bf16.xpose.msra.mxu0 0
    %4348 = vmatprep.subr.bf16.mxu0 0
    %4349 = vmatpush1.bf16.xpose.msra.mxu0 0
    %4350 = vmatprep.subr.bf16.mxu0 0
    %4351 = vmatpush1.bf16.xpose.msra.mxu0 0
    %4352 = vmatprep.mubr.bf16.mxu0 0
    %4353 = vmatmul.mubr.bf16.gmra.mrb[0].mxu0 %v4315
    %v4354 = vpop.f32.mrb[0].mxu0
    %v4355 = vadd.f32 0.0, %v4354
    %v4356 = vpop.f32.mrb[0].mxu0
    %v4357 = vpop.f32.mrb[0].mxu0
    %v4358 = vpop.f32.mrb[0].mxu0
    %4359 = vdwg.mxu0
    %v4361 = vsel %vm1440, %v4209, 0
    %v4364 = vsel %vm1440, %v4217, 0
    %4366 = vmatprep.subr.bf16.mxu0 0
    %4367 = vmatpush1.bf16.xpose.msra.mxu0 %v4364
    %4368 = vmatprep.subr.bf16.mxu0 0
    %4369 = vmatpush1.bf16.xpose.msra.mxu0 0
    %4370 = vmatprep.subr.bf16.mxu0 0
    %4371 = vmatpush1.bf16.xpose.msra.mxu0 0
    %4372 = vmatprep.subr.bf16.mxu0 0
    %4373 = vmatpush1.bf16.xpose.msra.mxu0 0
    %4374 = vmatprep.subr.bf16.mxu0 0
    %4375 = vmatpush1.bf16.xpose.msra.mxu0 0
    %4376 = vmatprep.subr.bf16.mxu0 0
    %4377 = vmatpush1.bf16.xpose.msra.mxu0 0
    %4378 = vmatprep.subr.bf16.mxu0 0
    %4379 = vmatpush1.bf16.xpose.msra.mxu0 0
    %4380 = vmatprep.subr.bf16.mxu0 0
    %4381 = vmatpush1.bf16.xpose.msra.mxu0 0
    %4382 = vmatprep.subr.bf16.mxu0 0
    %4383 = vmatpush1.bf16.xpose.msra.mxu0 0
    %4384 = vmatprep.subr.bf16.mxu0 0
    %4385 = vmatpush1.bf16.xpose.msra.mxu0 0
    %4386 = vmatprep.subr.bf16.mxu0 0
    %4387 = vmatpush1.bf16.xpose.msra.mxu0 0
    %4388 = vmatprep.subr.bf16.mxu0 0
    %4389 = vmatpush1.bf16.xpose.msra.mxu0 0
    %4390 = vmatprep.subr.bf16.mxu0 0
    %4391 = vmatpush1.bf16.xpose.msra.mxu0 0
    %4392 = vmatprep.subr.bf16.mxu0 0
    %4393 = vmatpush1.bf16.xpose.msra.mxu0 0
    %4394 = vmatprep.subr.bf16.mxu0 0
    %4395 = vmatpush1.bf16.xpose.msra.mxu0 0
    %4396 = vmatprep.subr.bf16.mxu0 0
    %4397 = vmatpush1.bf16.xpose.msra.mxu0 0
    %4398 = vmatprep.mubr.bf16.mxu0 0
    %4399 = vmatmul.mubr.bf16.gmra.mrb[0].mxu0 %v4361
    %v4400 = vpop.f32.mrb[0].mxu0
    %v4401 = vadd.f32 0.0, %v4400
    %v4402 = vpop.f32.mrb[0].mxu0
    %v4403 = vpop.f32.mrb[0].mxu0
    %v4404 = vpop.f32.mrb[0].mxu0
    %4405 = vdwg.mxu0
    %v4407 = vsel %vm1440, %v4210, 0
    %v4410 = vsel %vm1440, %v4218, 0
    %4412 = vmatprep.subr.bf16.mxu0 0
    %4413 = vmatpush1.bf16.xpose.msra.mxu0 %v4410
    %4414 = vmatprep.subr.bf16.mxu0 0
    %4415 = vmatpush1.bf16.xpose.msra.mxu0 0
    %4416 = vmatprep.subr.bf16.mxu0 0
    %4417 = vmatpush1.bf16.xpose.msra.mxu0 0
    %4418 = vmatprep.subr.bf16.mxu0 0
    %4419 = vmatpush1.bf16.xpose.msra.mxu0 0
    %4420 = vmatprep.subr.bf16.mxu0 0
    %4421 = vmatpush1.bf16.xpose.msra.mxu0 0
    %4422 = vmatprep.subr.bf16.mxu0 0
    %4423 = vmatpush1.bf16.xpose.msra.mxu0 0
    %4424 = vmatprep.subr.bf16.mxu0 0
    %4425 = vmatpush1.bf16.xpose.msra.mxu0 0
    %4426 = vmatprep.subr.bf16.mxu0 0
    %4427 = vmatpush1.bf16.xpose.msra.mxu0 0
    %4428 = vmatprep.subr.bf16.mxu0 0
    %4429 = vmatpush1.bf16.xpose.msra.mxu0 0
    %4430 = vmatprep.subr.bf16.mxu0 0
    %4431 = vmatpush1.bf16.xpose.msra.mxu0 0
    %4432 = vmatprep.subr.bf16.mxu0 0
    %4433 = vmatpush1.bf16.xpose.msra.mxu0 0
    %4434 = vmatprep.subr.bf16.mxu0 0
    %4435 = vmatpush1.bf16.xpose.msra.mxu0 0
    %4436 = vmatprep.subr.bf16.mxu0 0
    %4437 = vmatpush1.bf16.xpose.msra.mxu0 0
    %4438 = vmatprep.subr.bf16.mxu0 0
    %4439 = vmatpush1.bf16.xpose.msra.mxu0 0
    %4440 = vmatprep.subr.bf16.mxu0 0
    %4441 = vmatpush1.bf16.xpose.msra.mxu0 0
    %4442 = vmatprep.subr.bf16.mxu0 0
    %4443 = vmatpush1.bf16.xpose.msra.mxu0 0
    %4444 = vmatprep.mubr.bf16.mxu0 0
    %4445 = vmatmul.mubr.bf16.gmra.mrb[0].mxu0 %v4407
    %v4446 = vpop.f32.mrb[0].mxu0
    %v4447 = vadd.f32 0.0, %v4446
    %v4448 = vpop.f32.mrb[0].mxu0
    %v4449 = vpop.f32.mrb[0].mxu0
    %v4450 = vpop.f32.mrb[0].mxu0
    %4451 = vdwg.mxu0
    %v4453 = vsel %vm1440, %v4211, 0
    %v4456 = vsel %vm1440, %v4219, 0
    %4458 = vmatprep.subr.bf16.mxu0 0
    %4459 = vmatpush1.bf16.xpose.msra.mxu0 %v4456
    %4460 = vmatprep.subr.bf16.mxu0 0
    %4461 = vmatpush1.bf16.xpose.msra.mxu0 0
    %4462 = vmatprep.subr.bf16.mxu0 0
    %4463 = vmatpush1.bf16.xpose.msra.mxu0 0
    %4464 = vmatprep.subr.bf16.mxu0 0
    %4465 = vmatpush1.bf16.xpose.msra.mxu0 0
    %4466 = vmatprep.subr.bf16.mxu0 0
    %4467 = vmatpush1.bf16.xpose.msra.mxu0 0
    %4468 = vmatprep.subr.bf16.mxu0 0
    %4469 = vmatpush1.bf16.xpose.msra.mxu0 0
    %4470 = vmatprep.subr.bf16.mxu0 0
    %4471 = vmatpush1.bf16.xpose.msra.mxu0 0
    %4472 = vmatprep.subr.bf16.mxu0 0
    %4473 = vmatpush1.bf16.xpose.msra.mxu0 0
    %4474 = vmatprep.subr.bf16.mxu0 0
    %4475 = vmatpush1.bf16.xpose.msra.mxu0 0
    %4476 = vmatprep.subr.bf16.mxu0 0
    %4477 = vmatpush1.bf16.xpose.msra.mxu0 0
    %4478 = vmatprep.subr.bf16.mxu0 0
    %4479 = vmatpush1.bf16.xpose.msra.mxu0 0
    %4480 = vmatprep.subr.bf16.mxu0 0
    %4481 = vmatpush1.bf16.xpose.msra.mxu0 0
    %4482 = vmatprep.subr.bf16.mxu0 0
    %4483 = vmatpush1.bf16.xpose.msra.mxu0 0
    %4484 = vmatprep.subr.bf16.mxu0 0
    %4485 = vmatpush1.bf16.xpose.msra.mxu0 0
    %4486 = vmatprep.subr.bf16.mxu0 0
    %4487 = vmatpush1.bf16.xpose.msra.mxu0 0
    %4488 = vmatprep.subr.bf16.mxu0 0
    %4489 = vmatpush1.bf16.xpose.msra.mxu0 0
    %4490 = vmatprep.mubr.bf16.mxu0 0
    %4491 = vmatmul.mubr.bf16.gmra.mrb[0].mxu0 %v4453
    %v4492 = vpop.f32.mrb[0].mxu0
    %v4493 = vadd.f32 0.0, %v4492
    %v4494 = vpop.f32.mrb[0].mxu0
    %v4495 = vpop.f32.mrb[0].mxu0
    %v4496 = vpop.f32.mrb[0].mxu0
    %4497 = vdwg.mxu0
    %v4499 = vsel %vm1440, %v4212, 0
    %v4502 = vsel %vm1440, %v4220, 0
    %4504 = vmatprep.subr.bf16.mxu0 0
    %4505 = vmatpush1.bf16.xpose.msra.mxu0 %v4502
    %4506 = vmatprep.subr.bf16.mxu0 0
    %4507 = vmatpush1.bf16.xpose.msra.mxu0 0
    %4508 = vmatprep.subr.bf16.mxu0 0
    %4509 = vmatpush1.bf16.xpose.msra.mxu0 0
    %4510 = vmatprep.subr.bf16.mxu0 0
    %4511 = vmatpush1.bf16.xpose.msra.mxu0 0
    %4512 = vmatprep.subr.bf16.mxu0 0
    %4513 = vmatpush1.bf16.xpose.msra.mxu0 0
    %4514 = vmatprep.subr.bf16.mxu0 0
    %4515 = vmatpush1.bf16.xpose.msra.mxu0 0
    %4516 = vmatprep.subr.bf16.mxu0 0
    %4517 = vmatpush1.bf16.xpose.msra.mxu0 0
    %4518 = vmatprep.subr.bf16.mxu0 0
    %4519 = vmatpush1.bf16.xpose.msra.mxu0 0
    %4520 = vmatprep.subr.bf16.mxu0 0
    %4521 = vmatpush1.bf16.xpose.msra.mxu0 0
    %4522 = vmatprep.subr.bf16.mxu0 0
    %4523 = vmatpush1.bf16.xpose.msra.mxu0 0
    %4524 = vmatprep.subr.bf16.mxu0 0
    %4525 = vmatpush1.bf16.xpose.msra.mxu0 0
    %4526 = vmatprep.subr.bf16.mxu0 0
    %4527 = vmatpush1.bf16.xpose.msra.mxu0 0
    %4528 = vmatprep.subr.bf16.mxu0 0
    %4529 = vmatpush1.bf16.xpose.msra.mxu0 0
    %4530 = vmatprep.subr.bf16.mxu0 0
    %4531 = vmatpush1.bf16.xpose.msra.mxu0 0
    %4532 = vmatprep.subr.bf16.mxu0 0
    %4533 = vmatpush1.bf16.xpose.msra.mxu0 0
    %4534 = vmatprep.subr.bf16.mxu0 0
    %4535 = vmatpush1.bf16.xpose.msra.mxu0 0
    %4536 = vmatprep.mubr.bf16.mxu0 0
    %4537 = vmatmul.mubr.bf16.gmra.mrb[0].mxu0 %v4499
    %v4538 = vpop.f32.mrb[0].mxu0
    %v4539 = vadd.f32 0.0, %v4538
    %v4540 = vpop.f32.mrb[0].mxu0
    %v4541 = vpop.f32.mrb[0].mxu0
    %v4542 = vpop.f32.mrb[0].mxu0
    %4543 = vdwg.mxu0
    %v4545 = vsel %vm1440, %v4213, 0
    %v4548 = vsel %vm1440, %v4221, 0
    %4550 = vmatprep.subr.bf16.mxu0 0
    %4551 = vmatpush1.bf16.xpose.msra.mxu0 %v4548
    %4552 = vmatprep.subr.bf16.mxu0 0
    %4553 = vmatpush1.bf16.xpose.msra.mxu0 0
    %4554 = vmatprep.subr.bf16.mxu0 0
    %4555 = vmatpush1.bf16.xpose.msra.mxu0 0
    %4556 = vmatprep.subr.bf16.mxu0 0
    %4557 = vmatpush1.bf16.xpose.msra.mxu0 0
    %4558 = vmatprep.subr.bf16.mxu0 0
    %4559 = vmatpush1.bf16.xpose.msra.mxu0 0
    %4560 = vmatprep.subr.bf16.mxu0 0
    %4561 = vmatpush1.bf16.xpose.msra.mxu0 0
    %4562 = vmatprep.subr.bf16.mxu0 0
    %4563 = vmatpush1.bf16.xpose.msra.mxu0 0
    %4564 = vmatprep.subr.bf16.mxu0 0
    %4565 = vmatpush1.bf16.xpose.msra.mxu0 0
    %4566 = vmatprep.subr.bf16.mxu0 0
    %4567 = vmatpush1.bf16.xpose.msra.mxu0 0
    %4568 = vmatprep.subr.bf16.mxu0 0
    %4569 = vmatpush1.bf16.xpose.msra.mxu0 0
    %4570 = vmatprep.subr.bf16.mxu0 0
    %4571 = vmatpush1.bf16.xpose.msra.mxu0 0
    %4572 = vmatprep.subr.bf16.mxu0 0
    %4573 = vmatpush1.bf16.xpose.msra.mxu0 0
    %4574 = vmatprep.subr.bf16.mxu0 0
    %4575 = vmatpush1.bf16.xpose.msra.mxu0 0
    %4576 = vmatprep.subr.bf16.mxu0 0
    %4577 = vmatpush1.bf16.xpose.msra.mxu0 0
    %4578 = vmatprep.subr.bf16.mxu0 0
    %4579 = vmatpush1.bf16.xpose.msra.mxu0 0
    %4580 = vmatprep.subr.bf16.mxu0 0
    %4581 = vmatpush1.bf16.xpose.msra.mxu0 0
    %4582 = vmatprep.mubr.bf16.mxu0 0
    %4583 = vmatmul.mubr.bf16.gmra.mrb[0].mxu0 %v4545
    %v4584 = vpop.f32.mrb[0].mxu0
    %v4585 = vadd.f32 0.0, %v4584
    %v4586 = vpop.f32.mrb[0].mxu0
    %v4587 = vpop.f32.mrb[0].mxu0
    %v4588 = vpop.f32.mrb[0].mxu0
    %4589 = vdwg.mxu0
    %v4590 = vmul.f32 %v4263, 0.35355338
    %v4591 = vmul.f32 %v4309, 0.35355338
    %v4592 = vmul.f32 %v4355, 0.35355338
    %v4593 = vmul.f32 %v4401, 0.35355338
    %v4594 = vmul.f32 %v4447, 0.35355338
    %v4595 = vmul.f32 %v4493, 0.35355338
    %v4596 = vmul.f32 %v4539, 0.35355338
    %v4597 = vmul.f32 %v4585, 0.35355338
    %v4598 = vsel %vm1440, %v4590, -inf
    %4599 = vmax.xlane.f32.xlu0 %v4598
    %v4600 = vpop.xlane.xlu0 %4599
    %v4601 = vsel %vm1440, %v4591, -inf
    %4602 = vmax.xlane.f32.xlu0 %v4601
    %v4603 = vpop.xlane.xlu0 %4602
    %v4604 = vsel %vm1440, %v4592, -inf
    %4605 = vmax.xlane.f32.xlu0 %v4604
    %v4606 = vpop.xlane.xlu0 %4605
    %v4607 = vsel %vm1440, %v4593, -inf
    %4608 = vmax.xlane.f32.xlu0 %v4607
    %v4609 = vpop.xlane.xlu0 %4608
    %v4610 = vsel %vm1440, %v4594, -inf
    %4611 = vmax.xlane.f32.xlu0 %v4610
    %v4612 = vpop.xlane.xlu0 %4611
    %v4613 = vsel %vm1440, %v4595, -inf
    %4614 = vmax.xlane.f32.xlu0 %v4613
    %v4615 = vpop.xlane.xlu0 %4614
    %v4616 = vsel %vm1440, %v4596, -inf
    %4617 = vmax.xlane.f32.xlu0 %v4616
    %v4618 = vpop.xlane.xlu0 %4617
    %v4619 = vsel %vm1440, %v4597, -inf
    %4620 = vmax.xlane.f32.xlu0 %v4619
    %v4621 = vpop.xlane.xlu0 %4620
    %v4622 = vsub.f32 %v4590, %v4600
    %v4623 = vsub.f32 %v4591, %v4603
    %v4624 = vsub.f32 %v4592, %v4606
    %v4625 = vsub.f32 %v4593, %v4609
    %v4626 = vsub.f32 %v4594, %v4612
    %v4627 = vsub.f32 %v4595, %v4615
    %v4628 = vsub.f32 %v4596, %v4618
    %v4629 = vsub.f32 %v4597, %v4621
    %v4630 = vmul.f32 %v4622, 1.442695
    %v4631 = vpow.pop %v4630
    %v4632 = vmul.f32 %v4623, 1.442695
    %v4633 = vpow.pop %v4632
    %v4634 = vmul.f32 %v4624, 1.442695
    %v4635 = vpow.pop %v4634
    %v4636 = vmul.f32 %v4625, 1.442695
    %v4637 = vpow.pop %v4636
    %v4638 = vmul.f32 %v4626, 1.442695
    %v4639 = vpow.pop %v4638
    %v4640 = vmul.f32 %v4627, 1.442695
    %v4641 = vpow.pop %v4640
    %v4642 = vmul.f32 %v4628, 1.442695
    %v4643 = vpow.pop %v4642
    %v4644 = vmul.f32 %v4629, 1.442695
    %v4645 = vpow.pop %v4644
    %v4646 = vsel %vm1440, %v4631, 0.0
    %4647 = vadd.xlane.f32.xlu0 %v4646
    %v4648 = vpop.xlane.xlu0 %4647
    %v4649 = vsel %vm1440, %v4633, 0.0
    %4650 = vadd.xlane.f32.xlu0 %v4649
    %v4651 = vpop.xlane.xlu0 %4650
    %v4652 = vsel %vm1440, %v4635, 0.0
    %4653 = vadd.xlane.f32.xlu0 %v4652
    %v4654 = vpop.xlane.xlu0 %4653
    %v4655 = vsel %vm1440, %v4637, 0.0
    %4656 = vadd.xlane.f32.xlu0 %v4655
    %v4657 = vpop.xlane.xlu0 %4656
    %v4658 = vsel %vm1440, %v4639, 0.0
    %4659 = vadd.xlane.f32.xlu0 %v4658
    %v4660 = vpop.xlane.xlu0 %4659
    %v4661 = vsel %vm1440, %v4641, 0.0
    %4662 = vadd.xlane.f32.xlu0 %v4661
    %v4663 = vpop.xlane.xlu0 %4662
    %v4664 = vsel %vm1440, %v4643, 0.0
    %4665 = vadd.xlane.f32.xlu0 %v4664
    %v4666 = vpop.xlane.xlu0 %4665
    %v4667 = vsel %vm1440, %v4645, 0.0
    %4668 = vadd.xlane.f32.xlu0 %v4667
    %v4669 = vpop.xlane.xlu0 %4668
    %v4670 = vrcp.pop %v4648
    %v4671 = vmul.f32 %v4631, %v4670
    %v4672 = vrcp.pop %v4651
    %v4673 = vmul.f32 %v4633, %v4672
    %v4674 = vrcp.pop %v4654
    %v4675 = vmul.f32 %v4635, %v4674
    %v4676 = vrcp.pop %v4657
    %v4677 = vmul.f32 %v4637, %v4676
    %v4678 = vrcp.pop %v4660
    %v4679 = vmul.f32 %v4639, %v4678
    %v4680 = vrcp.pop %v4663
    %v4681 = vmul.f32 %v4641, %v4680
    %v4682 = vrcp.pop %v4666
    %v4683 = vmul.f32 %v4643, %v4682
    %v4684 = vrcp.pop %v4669
    %v4685 = vmul.f32 %v4645, %v4684
    %v4686 = vpack.c.bf16 %v4671, %v4671
    %v4687 = vpack.c.bf16 %v4673, %v4673
    %v4688 = vpack.c.bf16 %v4675, %v4675
    %v4689 = vpack.c.bf16 %v4677, %v4677
    %v4690 = vpack.c.bf16 %v4679, %v4679
    %v4691 = vpack.c.bf16 %v4681, %v4681
    %v4692 = vpack.c.bf16 %v4683, %v4683
    %v4693 = vpack.c.bf16 %v4685, %v4685
    %v4694 = vpack.c.bf16 %v3885, %v3885
    %v4695 = vpack.c.bf16 %v3937, %v3937
    %v4696 = vpack.c.bf16 %v3989, %v3989
    %v4697 = vpack.c.bf16 %v4041, %v4041
    %v4698 = vpack.c.bf16 %v4081, %v4081
    %v4699 = vpack.c.bf16 %v4121, %v4121
    %v4700 = vpack.c.bf16 %v4161, %v4161
    %v4701 = vpack.c.bf16 %v4201, %v4201
    %v4703 = vsel %vm1440, %v4686, 0
    %v4706 = vsel %vm1924, %v4694, 0
    %4708 = vmatprep.subr.bf16.mxu0 0
    %4709 = vmatpush1.bf16.msra.mxu0 %v4706
    %4710 = vmatprep.subr.bf16.mxu0 0
    %4711 = vmatpush1.bf16.msra.mxu0 0
    %4712 = vmatprep.subr.bf16.mxu0 0
    %4713 = vmatpush1.bf16.msra.mxu0 0
    %4714 = vmatprep.subr.bf16.mxu0 0
    %4715 = vmatpush1.bf16.msra.mxu0 0
    %4716 = vmatprep.subr.bf16.mxu0 0
    %4717 = vmatpush1.bf16.msra.mxu0 0
    %4718 = vmatprep.subr.bf16.mxu0 0
    %4719 = vmatpush1.bf16.msra.mxu0 0
    %4720 = vmatprep.subr.bf16.mxu0 0
    %4721 = vmatpush1.bf16.msra.mxu0 0
    %4722 = vmatprep.subr.bf16.mxu0 0
    %4723 = vmatpush1.bf16.msra.mxu0 0
    %4724 = vmatprep.subr.bf16.mxu0 0
    %4725 = vmatpush1.bf16.msra.mxu0 0
    %4726 = vmatprep.subr.bf16.mxu0 0
    %4727 = vmatpush1.bf16.msra.mxu0 0
    %4728 = vmatprep.subr.bf16.mxu0 0
    %4729 = vmatpush1.bf16.msra.mxu0 0
    %4730 = vmatprep.subr.bf16.mxu0 0
    %4731 = vmatpush1.bf16.msra.mxu0 0
    %4732 = vmatprep.subr.bf16.mxu0 0
    %4733 = vmatpush1.bf16.msra.mxu0 0
    %4734 = vmatprep.subr.bf16.mxu0 0
    %4735 = vmatpush1.bf16.msra.mxu0 0
    %4736 = vmatprep.subr.bf16.mxu0 0
    %4737 = vmatpush1.bf16.msra.mxu0 0
    %4738 = vmatprep.subr.bf16.mxu0 0
    %4739 = vmatpush1.bf16.msra.mxu0 0
    %4740 = vmatprep.mubr.bf16.mxu0 0
    %4741 = vmatmul.mubr.bf16.gmra.mrb[0].mxu0 %v4703
    %v4742 = vpop.f32.mrb[0].mxu0
    %v4743 = vadd.f32 0.0, %v4742
    %v4744 = vpop.f32.mrb[0].mxu0
    %v4745 = vpop.f32.mrb[0].mxu0
    %v4746 = vpop.f32.mrb[0].mxu0
    %4747 = vdwg.mxu0
    %v4749 = vsel %vm1440, %v4687, 0
    %v4752 = vsel %vm1924, %v4695, 0
    %4754 = vmatprep.subr.bf16.mxu0 0
    %4755 = vmatpush1.bf16.msra.mxu0 %v4752
    %4756 = vmatprep.subr.bf16.mxu0 0
    %4757 = vmatpush1.bf16.msra.mxu0 0
    %4758 = vmatprep.subr.bf16.mxu0 0
    %4759 = vmatpush1.bf16.msra.mxu0 0
    %4760 = vmatprep.subr.bf16.mxu0 0
    %4761 = vmatpush1.bf16.msra.mxu0 0
    %4762 = vmatprep.subr.bf16.mxu0 0
    %4763 = vmatpush1.bf16.msra.mxu0 0
    %4764 = vmatprep.subr.bf16.mxu0 0
    %4765 = vmatpush1.bf16.msra.mxu0 0
    %4766 = vmatprep.subr.bf16.mxu0 0
    %4767 = vmatpush1.bf16.msra.mxu0 0
    %4768 = vmatprep.subr.bf16.mxu0 0
    %4769 = vmatpush1.bf16.msra.mxu0 0
    %4770 = vmatprep.subr.bf16.mxu0 0
    %4771 = vmatpush1.bf16.msra.mxu0 0
    %4772 = vmatprep.subr.bf16.mxu0 0
    %4773 = vmatpush1.bf16.msra.mxu0 0
    %4774 = vmatprep.subr.bf16.mxu0 0
    %4775 = vmatpush1.bf16.msra.mxu0 0
    %4776 = vmatprep.subr.bf16.mxu0 0
    %4777 = vmatpush1.bf16.msra.mxu0 0
    %4778 = vmatprep.subr.bf16.mxu0 0
    %4779 = vmatpush1.bf16.msra.mxu0 0
    %4780 = vmatprep.subr.bf16.mxu0 0
    %4781 = vmatpush1.bf16.msra.mxu0 0
    %4782 = vmatprep.subr.bf16.mxu0 0
    %4783 = vmatpush1.bf16.msra.mxu0 0
    %4784 = vmatprep.subr.bf16.mxu0 0
    %4785 = vmatpush1.bf16.msra.mxu0 0
    %4786 = vmatprep.mubr.bf16.mxu0 0
    %4787 = vmatmul.mubr.bf16.gmra.mrb[0].mxu0 %v4749
    %v4788 = vpop.f32.mrb[0].mxu0
    %v4789 = vadd.f32 0.0, %v4788
    %v4790 = vpop.f32.mrb[0].mxu0
    %v4791 = vpop.f32.mrb[0].mxu0
    %v4792 = vpop.f32.mrb[0].mxu0
    %4793 = vdwg.mxu0
    %v4795 = vsel %vm1440, %v4688, 0
    %v4798 = vsel %vm1924, %v4696, 0
    %4800 = vmatprep.subr.bf16.mxu0 0
    %4801 = vmatpush1.bf16.msra.mxu0 %v4798
    %4802 = vmatprep.subr.bf16.mxu0 0
    %4803 = vmatpush1.bf16.msra.mxu0 0
    %4804 = vmatprep.subr.bf16.mxu0 0
    %4805 = vmatpush1.bf16.msra.mxu0 0
    %4806 = vmatprep.subr.bf16.mxu0 0
    %4807 = vmatpush1.bf16.msra.mxu0 0
    %4808 = vmatprep.subr.bf16.mxu0 0
    %4809 = vmatpush1.bf16.msra.mxu0 0
    %4810 = vmatprep.subr.bf16.mxu0 0
    %4811 = vmatpush1.bf16.msra.mxu0 0
    %4812 = vmatprep.subr.bf16.mxu0 0
    %4813 = vmatpush1.bf16.msra.mxu0 0
    %4814 = vmatprep.subr.bf16.mxu0 0
    %4815 = vmatpush1.bf16.msra.mxu0 0
    %4816 = vmatprep.subr.bf16.mxu0 0
    %4817 = vmatpush1.bf16.msra.mxu0 0
    %4818 = vmatprep.subr.bf16.mxu0 0
    %4819 = vmatpush1.bf16.msra.mxu0 0
    %4820 = vmatprep.subr.bf16.mxu0 0
    %4821 = vmatpush1.bf16.msra.mxu0 0
    %4822 = vmatprep.subr.bf16.mxu0 0
    %4823 = vmatpush1.bf16.msra.mxu0 0
    %4824 = vmatprep.subr.bf16.mxu0 0
    %4825 = vmatpush1.bf16.msra.mxu0 0
    %4826 = vmatprep.subr.bf16.mxu0 0
    %4827 = vmatpush1.bf16.msra.mxu0 0
    %4828 = vmatprep.subr.bf16.mxu0 0
    %4829 = vmatpush1.bf16.msra.mxu0 0
    %4830 = vmatprep.subr.bf16.mxu0 0
    %4831 = vmatpush1.bf16.msra.mxu0 0
    %4832 = vmatprep.mubr.bf16.mxu0 0
    %4833 = vmatmul.mubr.bf16.gmra.mrb[0].mxu0 %v4795
    %v4834 = vpop.f32.mrb[0].mxu0
    %v4835 = vadd.f32 0.0, %v4834
    %v4836 = vpop.f32.mrb[0].mxu0
    %v4837 = vpop.f32.mrb[0].mxu0
    %v4838 = vpop.f32.mrb[0].mxu0
    %4839 = vdwg.mxu0
    %v4841 = vsel %vm1440, %v4689, 0
    %v4844 = vsel %vm1924, %v4697, 0
    %4846 = vmatprep.subr.bf16.mxu0 0
    %4847 = vmatpush1.bf16.msra.mxu0 %v4844
    %4848 = vmatprep.subr.bf16.mxu0 0
    %4849 = vmatpush1.bf16.msra.mxu0 0
    %4850 = vmatprep.subr.bf16.mxu0 0
    %4851 = vmatpush1.bf16.msra.mxu0 0
    %4852 = vmatprep.subr.bf16.mxu0 0
    %4853 = vmatpush1.bf16.msra.mxu0 0
    %4854 = vmatprep.subr.bf16.mxu0 0
    %4855 = vmatpush1.bf16.msra.mxu0 0
    %4856 = vmatprep.subr.bf16.mxu0 0
    %4857 = vmatpush1.bf16.msra.mxu0 0
    %4858 = vmatprep.subr.bf16.mxu0 0
    %4859 = vmatpush1.bf16.msra.mxu0 0
    %4860 = vmatprep.subr.bf16.mxu0 0
    %4861 = vmatpush1.bf16.msra.mxu0 0
    %4862 = vmatprep.subr.bf16.mxu0 0
    %4863 = vmatpush1.bf16.msra.mxu0 0
    %4864 = vmatprep.subr.bf16.mxu0 0
    %4865 = vmatpush1.bf16.msra.mxu0 0
    %4866 = vmatprep.subr.bf16.mxu0 0
    %4867 = vmatpush1.bf16.msra.mxu0 0
    %4868 = vmatprep.subr.bf16.mxu0 0
    %4869 = vmatpush1.bf16.msra.mxu0 0
    %4870 = vmatprep.subr.bf16.mxu0 0
    %4871 = vmatpush1.bf16.msra.mxu0 0
    %4872 = vmatprep.subr.bf16.mxu0 0
    %4873 = vmatpush1.bf16.msra.mxu0 0
    %4874 = vmatprep.subr.bf16.mxu0 0
    %4875 = vmatpush1.bf16.msra.mxu0 0
    %4876 = vmatprep.subr.bf16.mxu0 0
    %4877 = vmatpush1.bf16.msra.mxu0 0
    %4878 = vmatprep.mubr.bf16.mxu0 0
    %4879 = vmatmul.mubr.bf16.gmra.mrb[0].mxu0 %v4841
    %v4880 = vpop.f32.mrb[0].mxu0
    %v4881 = vadd.f32 0.0, %v4880
    %v4882 = vpop.f32.mrb[0].mxu0
    %v4883 = vpop.f32.mrb[0].mxu0
    %v4884 = vpop.f32.mrb[0].mxu0
    %4885 = vdwg.mxu0
    %v4887 = vsel %vm1440, %v4690, 0
    %v4890 = vsel %vm1924, %v4698, 0
    %4892 = vmatprep.subr.bf16.mxu0 0
    %4893 = vmatpush1.bf16.msra.mxu0 %v4890
    %4894 = vmatprep.subr.bf16.mxu0 0
    %4895 = vmatpush1.bf16.msra.mxu0 0
    %4896 = vmatprep.subr.bf16.mxu0 0
    %4897 = vmatpush1.bf16.msra.mxu0 0
    %4898 = vmatprep.subr.bf16.mxu0 0
    %4899 = vmatpush1.bf16.msra.mxu0 0
    %4900 = vmatprep.subr.bf16.mxu0 0
    %4901 = vmatpush1.bf16.msra.mxu0 0
    %4902 = vmatprep.subr.bf16.mxu0 0
    %4903 = vmatpush1.bf16.msra.mxu0 0
    %4904 = vmatprep.subr.bf16.mxu0 0
    %4905 = vmatpush1.bf16.msra.mxu0 0
    %4906 = vmatprep.subr.bf16.mxu0 0
    %4907 = vmatpush1.bf16.msra.mxu0 0
    %4908 = vmatprep.subr.bf16.mxu0 0
    %4909 = vmatpush1.bf16.msra.mxu0 0
    %4910 = vmatprep.subr.bf16.mxu0 0
    %4911 = vmatpush1.bf16.msra.mxu0 0
    %4912 = vmatprep.subr.bf16.mxu0 0
    %4913 = vmatpush1.bf16.msra.mxu0 0
    %4914 = vmatprep.subr.bf16.mxu0 0
    %4915 = vmatpush1.bf16.msra.mxu0 0
    %4916 = vmatprep.subr.bf16.mxu0 0
    %4917 = vmatpush1.bf16.msra.mxu0 0
    %4918 = vmatprep.subr.bf16.mxu0 0
    %4919 = vmatpush1.bf16.msra.mxu0 0
    %4920 = vmatprep.subr.bf16.mxu0 0
    %4921 = vmatpush1.bf16.msra.mxu0 0
    %4922 = vmatprep.subr.bf16.mxu0 0
    %4923 = vmatpush1.bf16.msra.mxu0 0
    %4924 = vmatprep.mubr.bf16.mxu0 0
    %4925 = vmatmul.mubr.bf16.gmra.mrb[0].mxu0 %v4887
    %v4926 = vpop.f32.mrb[0].mxu0
    %v4927 = vadd.f32 0.0, %v4926
    %v4928 = vpop.f32.mrb[0].mxu0
    %v4929 = vpop.f32.mrb[0].mxu0
    %v4930 = vpop.f32.mrb[0].mxu0
    %4931 = vdwg.mxu0
    %v4933 = vsel %vm1440, %v4691, 0
    %v4936 = vsel %vm1924, %v4699, 0
    %4938 = vmatprep.subr.bf16.mxu0 0
    %4939 = vmatpush1.bf16.msra.mxu0 %v4936
    %4940 = vmatprep.subr.bf16.mxu0 0
    %4941 = vmatpush1.bf16.msra.mxu0 0
    %4942 = vmatprep.subr.bf16.mxu0 0
    %4943 = vmatpush1.bf16.msra.mxu0 0
    %4944 = vmatprep.subr.bf16.mxu0 0
    %4945 = vmatpush1.bf16.msra.mxu0 0
    %4946 = vmatprep.subr.bf16.mxu0 0
    %4947 = vmatpush1.bf16.msra.mxu0 0
    %4948 = vmatprep.subr.bf16.mxu0 0
    %4949 = vmatpush1.bf16.msra.mxu0 0
    %4950 = vmatprep.subr.bf16.mxu0 0
    %4951 = vmatpush1.bf16.msra.mxu0 0
    %4952 = vmatprep.subr.bf16.mxu0 0
    %4953 = vmatpush1.bf16.msra.mxu0 0
    %4954 = vmatprep.subr.bf16.mxu0 0
    %4955 = vmatpush1.bf16.msra.mxu0 0
    %4956 = vmatprep.subr.bf16.mxu0 0
    %4957 = vmatpush1.bf16.msra.mxu0 0
    %4958 = vmatprep.subr.bf16.mxu0 0
    %4959 = vmatpush1.bf16.msra.mxu0 0
    %4960 = vmatprep.subr.bf16.mxu0 0
    %4961 = vmatpush1.bf16.msra.mxu0 0
    %4962 = vmatprep.subr.bf16.mxu0 0
    %4963 = vmatpush1.bf16.msra.mxu0 0
    %4964 = vmatprep.subr.bf16.mxu0 0
    %4965 = vmatpush1.bf16.msra.mxu0 0
    %4966 = vmatprep.subr.bf16.mxu0 0
    %4967 = vmatpush1.bf16.msra.mxu0 0
    %4968 = vmatprep.subr.bf16.mxu0 0
    %4969 = vmatpush1.bf16.msra.mxu0 0
    %4970 = vmatprep.mubr.bf16.mxu0 0
    %4971 = vmatmul.mubr.bf16.gmra.mrb[0].mxu0 %v4933
    %v4972 = vpop.f32.mrb[0].mxu0
    %v4973 = vadd.f32 0.0, %v4972
    %v4974 = vpop.f32.mrb[0].mxu0
    %v4975 = vpop.f32.mrb[0].mxu0
    %v4976 = vpop.f32.mrb[0].mxu0
    %4977 = vdwg.mxu0
    %v4979 = vsel %vm1440, %v4692, 0
    %v4982 = vsel %vm1924, %v4700, 0
    %4984 = vmatprep.subr.bf16.mxu0 0
    %4985 = vmatpush1.bf16.msra.mxu0 %v4982
    %4986 = vmatprep.subr.bf16.mxu0 0
    %4987 = vmatpush1.bf16.msra.mxu0 0
    %4988 = vmatprep.subr.bf16.mxu0 0
    %4989 = vmatpush1.bf16.msra.mxu0 0
    %4990 = vmatprep.subr.bf16.mxu0 0
    %4991 = vmatpush1.bf16.msra.mxu0 0
    %4992 = vmatprep.subr.bf16.mxu0 0
    %4993 = vmatpush1.bf16.msra.mxu0 0
    %4994 = vmatprep.subr.bf16.mxu0 0
    %4995 = vmatpush1.bf16.msra.mxu0 0
    %4996 = vmatprep.subr.bf16.mxu0 0
    %4997 = vmatpush1.bf16.msra.mxu0 0
    %4998 = vmatprep.subr.bf16.mxu0 0
    %4999 = vmatpush1.bf16.msra.mxu0 0
    %5000 = vmatprep.subr.bf16.mxu0 0
    %5001 = vmatpush1.bf16.msra.mxu0 0
    %5002 = vmatprep.subr.bf16.mxu0 0
    %5003 = vmatpush1.bf16.msra.mxu0 0
    %5004 = vmatprep.subr.bf16.mxu0 0
    %5005 = vmatpush1.bf16.msra.mxu0 0
    %5006 = vmatprep.subr.bf16.mxu0 0
    %5007 = vmatpush1.bf16.msra.mxu0 0
    %5008 = vmatprep.subr.bf16.mxu0 0
    %5009 = vmatpush1.bf16.msra.mxu0 0
    %5010 = vmatprep.subr.bf16.mxu0 0
    %5011 = vmatpush1.bf16.msra.mxu0 0
    %5012 = vmatprep.subr.bf16.mxu0 0
    %5013 = vmatpush1.bf16.msra.mxu0 0
    %5014 = vmatprep.subr.bf16.mxu0 0
    %5015 = vmatpush1.bf16.msra.mxu0 0
    %5016 = vmatprep.mubr.bf16.mxu0 0
    %5017 = vmatmul.mubr.bf16.gmra.mrb[0].mxu0 %v4979
    %v5018 = vpop.f32.mrb[0].mxu0
    %v5019 = vadd.f32 0.0, %v5018
    %v5020 = vpop.f32.mrb[0].mxu0
    %v5021 = vpop.f32.mrb[0].mxu0
    %v5022 = vpop.f32.mrb[0].mxu0
    %5023 = vdwg.mxu0
    %v5025 = vsel %vm1440, %v4693, 0
    %v5028 = vsel %vm1924, %v4701, 0
    %5030 = vmatprep.subr.bf16.mxu0 0
    %5031 = vmatpush1.bf16.msra.mxu0 %v5028
    %5032 = vmatprep.subr.bf16.mxu0 0
    %5033 = vmatpush1.bf16.msra.mxu0 0
    %5034 = vmatprep.subr.bf16.mxu0 0
    %5035 = vmatpush1.bf16.msra.mxu0 0
    %5036 = vmatprep.subr.bf16.mxu0 0
    %5037 = vmatpush1.bf16.msra.mxu0 0
    %5038 = vmatprep.subr.bf16.mxu0 0
    %5039 = vmatpush1.bf16.msra.mxu0 0
    %5040 = vmatprep.subr.bf16.mxu0 0
    %5041 = vmatpush1.bf16.msra.mxu0 0
    %5042 = vmatprep.subr.bf16.mxu0 0
    %5043 = vmatpush1.bf16.msra.mxu0 0
    %5044 = vmatprep.subr.bf16.mxu0 0
    %5045 = vmatpush1.bf16.msra.mxu0 0
    %5046 = vmatprep.subr.bf16.mxu0 0
    %5047 = vmatpush1.bf16.msra.mxu0 0
    %5048 = vmatprep.subr.bf16.mxu0 0
    %5049 = vmatpush1.bf16.msra.mxu0 0
    %5050 = vmatprep.subr.bf16.mxu0 0
    %5051 = vmatpush1.bf16.msra.mxu0 0
    %5052 = vmatprep.subr.bf16.mxu0 0
    %5053 = vmatpush1.bf16.msra.mxu0 0
    %5054 = vmatprep.subr.bf16.mxu0 0
    %5055 = vmatpush1.bf16.msra.mxu0 0
    %5056 = vmatprep.subr.bf16.mxu0 0
    %5057 = vmatpush1.bf16.msra.mxu0 0
    %5058 = vmatprep.subr.bf16.mxu0 0
    %5059 = vmatpush1.bf16.msra.mxu0 0
    %5060 = vmatprep.subr.bf16.mxu0 0
    %5061 = vmatpush1.bf16.msra.mxu0 0
    %5062 = vmatprep.mubr.bf16.mxu0 0
    %5063 = vmatmul.mubr.bf16.gmra.mrb[0].mxu0 %v5025
    %v5064 = vpop.f32.mrb[0].mxu0
    %v5065 = vadd.f32 0.0, %v5064
    %v5066 = vpop.f32.mrb[0].mxu0
    %v5067 = vpop.f32.mrb[0].mxu0
    %v5068 = vpop.f32.mrb[0].mxu0
    %5069 = vdwg.mxu0
    %s5070 = scalar_lea.vmem %s6, 16
    %v5071 = vld [vmem:[%s5070] sm:$0xf]
    %v5072 = vld [vmem:[%s5070 + $0x4] sm:$0xf]
    %v5073 = vld [vmem:[%s5070 + $0x8] sm:$0xf]
    %v5074 = vld [vmem:[%s5070 + $0xc] sm:$0xf]
    %v5075 = vpack.c.bf16 %v4743, %v4743
    %v5076 = vpack.c.bf16 %v4789, %v4789
    %v5077 = vpack.c.bf16 %v4835, %v4835
    %v5078 = vpack.c.bf16 %v4881, %v4881
    %v5079 = vpack.c.bf16 %v4927, %v4927
    %v5080 = vpack.c.bf16 %v4973, %v4973
    %v5081 = vpack.c.bf16 %v5019, %v5019
    %v5082 = vpack.c.bf16 %v5065, %v5065
    %v5084 = vsel %vm1440, %v5075, 0
    %v5087 = vsel %vm1924, %v5071, 0
    %5089 = vmatprep.subr.bf16.mxu0 0
    %5090 = vmatpush1.bf16.msra.mxu0 %v5087
    %5091 = vmatprep.subr.bf16.mxu0 0
    %5092 = vmatpush1.bf16.msra.mxu0 0
    %5093 = vmatprep.subr.bf16.mxu0 0
    %5094 = vmatpush1.bf16.msra.mxu0 0
    %5095 = vmatprep.subr.bf16.mxu0 0
    %5096 = vmatpush1.bf16.msra.mxu0 0
    %5097 = vmatprep.subr.bf16.mxu0 0
    %5098 = vmatpush1.bf16.msra.mxu0 0
    %5099 = vmatprep.subr.bf16.mxu0 0
    %5100 = vmatpush1.bf16.msra.mxu0 0
    %5101 = vmatprep.subr.bf16.mxu0 0
    %5102 = vmatpush1.bf16.msra.mxu0 0
    %5103 = vmatprep.subr.bf16.mxu0 0
    %5104 = vmatpush1.bf16.msra.mxu0 0
    %5105 = vmatprep.subr.bf16.mxu0 0
    %5106 = vmatpush1.bf16.msra.mxu0 0
    %5107 = vmatprep.subr.bf16.mxu0 0
    %5108 = vmatpush1.bf16.msra.mxu0 0
    %5109 = vmatprep.subr.bf16.mxu0 0
    %5110 = vmatpush1.bf16.msra.mxu0 0
    %5111 = vmatprep.subr.bf16.mxu0 0
    %5112 = vmatpush1.bf16.msra.mxu0 0
    %5113 = vmatprep.subr.bf16.mxu0 0
    %5114 = vmatpush1.bf16.msra.mxu0 0
    %5115 = vmatprep.subr.bf16.mxu0 0
    %5116 = vmatpush1.bf16.msra.mxu0 0
    %5117 = vmatprep.subr.bf16.mxu0 0
    %5118 = vmatpush1.bf16.msra.mxu0 0
    %5119 = vmatprep.subr.bf16.mxu0 0
    %5120 = vmatpush1.bf16.msra.mxu0 0
    %5121 = vmatprep.mubr.bf16.mxu0 0
    %5122 = vmatmul.mubr.bf16.gmra.mrb[0].mxu0 %v5084
    %v5123 = vpop.f32.mrb[0].mxu0
    %v5124 = vadd.f32 0.0, %v5123
    %v5125 = vpop.f32.mrb[0].mxu0
    %v5126 = vpop.f32.mrb[0].mxu0
    %v5127 = vpop.f32.mrb[0].mxu0
    %5128 = vdwg.mxu0
    %v5130 = vsel %vm1440, %v5076, 0
    %v5133 = vsel %vm1924, %v5072, 0
    %5135 = vmatprep.subr.bf16.mxu0 0
    %5136 = vmatpush1.bf16.msra.mxu0 %v5133
    %5137 = vmatprep.subr.bf16.mxu0 0
    %5138 = vmatpush1.bf16.msra.mxu0 0
    %5139 = vmatprep.subr.bf16.mxu0 0
    %5140 = vmatpush1.bf16.msra.mxu0 0
    %5141 = vmatprep.subr.bf16.mxu0 0
    %5142 = vmatpush1.bf16.msra.mxu0 0
    %5143 = vmatprep.subr.bf16.mxu0 0
    %5144 = vmatpush1.bf16.msra.mxu0 0
    %5145 = vmatprep.subr.bf16.mxu0 0
    %5146 = vmatpush1.bf16.msra.mxu0 0
    %5147 = vmatprep.subr.bf16.mxu0 0
    %5148 = vmatpush1.bf16.msra.mxu0 0
    %5149 = vmatprep.subr.bf16.mxu0 0
    %5150 = vmatpush1.bf16.msra.mxu0 0
    %5151 = vmatprep.subr.bf16.mxu0 0
    %5152 = vmatpush1.bf16.msra.mxu0 0
    %5153 = vmatprep.subr.bf16.mxu0 0
    %5154 = vmatpush1.bf16.msra.mxu0 0
    %5155 = vmatprep.subr.bf16.mxu0 0
    %5156 = vmatpush1.bf16.msra.mxu0 0
    %5157 = vmatprep.subr.bf16.mxu0 0
    %5158 = vmatpush1.bf16.msra.mxu0 0
    %5159 = vmatprep.subr.bf16.mxu0 0
    %5160 = vmatpush1.bf16.msra.mxu0 0
    %5161 = vmatprep.subr.bf16.mxu0 0
    %5162 = vmatpush1.bf16.msra.mxu0 0
    %5163 = vmatprep.subr.bf16.mxu0 0
    %5164 = vmatpush1.bf16.msra.mxu0 0
    %5165 = vmatprep.subr.bf16.mxu0 0
    %5166 = vmatpush1.bf16.msra.mxu0 0
    %5167 = vmatprep.mubr.bf16.mxu0 0
    %5168 = vmatmul.mubr.bf16.gmra.mrb[0].mxu0 %v5130
    %v5169 = vpop.f32.mrb[0].mxu0
    %v5170 = vadd.f32 0.0, %v5169
    %v5171 = vpop.f32.mrb[0].mxu0
    %v5172 = vpop.f32.mrb[0].mxu0
    %v5173 = vpop.f32.mrb[0].mxu0
    %5174 = vdwg.mxu0
    %v5176 = vsel %vm1440, %v5077, 0
    %v5179 = vsel %vm1924, %v5073, 0
    %5181 = vmatprep.subr.bf16.mxu0 0
    %5182 = vmatpush1.bf16.msra.mxu0 %v5179
    %5183 = vmatprep.subr.bf16.mxu0 0
    %5184 = vmatpush1.bf16.msra.mxu0 0
    %5185 = vmatprep.subr.bf16.mxu0 0
    %5186 = vmatpush1.bf16.msra.mxu0 0
    %5187 = vmatprep.subr.bf16.mxu0 0
    %5188 = vmatpush1.bf16.msra.mxu0 0
    %5189 = vmatprep.subr.bf16.mxu0 0
    %5190 = vmatpush1.bf16.msra.mxu0 0
    %5191 = vmatprep.subr.bf16.mxu0 0
    %5192 = vmatpush1.bf16.msra.mxu0 0
    %5193 = vmatprep.subr.bf16.mxu0 0
    %5194 = vmatpush1.bf16.msra.mxu0 0
    %5195 = vmatprep.subr.bf16.mxu0 0
    %5196 = vmatpush1.bf16.msra.mxu0 0
    %5197 = vmatprep.subr.bf16.mxu0 0
    %5198 = vmatpush1.bf16.msra.mxu0 0
    %5199 = vmatprep.subr.bf16.mxu0 0
    %5200 = vmatpush1.bf16.msra.mxu0 0
    %5201 = vmatprep.subr.bf16.mxu0 0
    %5202 = vmatpush1.bf16.msra.mxu0 0
    %5203 = vmatprep.subr.bf16.mxu0 0
    %5204 = vmatpush1.bf16.msra.mxu0 0
    %5205 = vmatprep.subr.bf16.mxu0 0
    %5206 = vmatpush1.bf16.msra.mxu0 0
    %5207 = vmatprep.subr.bf16.mxu0 0
    %5208 = vmatpush1.bf16.msra.mxu0 0
    %5209 = vmatprep.subr.bf16.mxu0 0
    %5210 = vmatpush1.bf16.msra.mxu0 0
    %5211 = vmatprep.subr.bf16.mxu0 0
    %5212 = vmatpush1.bf16.msra.mxu0 0
    %5213 = vmatprep.mubr.bf16.mxu0 0
    %5214 = vmatmul.mubr.bf16.gmra.mrb[0].mxu0 %v5176
    %v5215 = vpop.f32.mrb[0].mxu0
    %v5216 = vadd.f32 0.0, %v5215
    %v5217 = vpop.f32.mrb[0].mxu0
    %v5218 = vpop.f32.mrb[0].mxu0
    %v5219 = vpop.f32.mrb[0].mxu0
    %5220 = vdwg.mxu0
    %v5222 = vsel %vm1440, %v5078, 0
    %v5225 = vsel %vm1924, %v5074, 0
    %5227 = vmatprep.subr.bf16.mxu0 0
    %5228 = vmatpush1.bf16.msra.mxu0 %v5225
    %5229 = vmatprep.subr.bf16.mxu0 0
    %5230 = vmatpush1.bf16.msra.mxu0 0
    %5231 = vmatprep.subr.bf16.mxu0 0
    %5232 = vmatpush1.bf16.msra.mxu0 0
    %5233 = vmatprep.subr.bf16.mxu0 0
    %5234 = vmatpush1.bf16.msra.mxu0 0
    %5235 = vmatprep.subr.bf16.mxu0 0
    %5236 = vmatpush1.bf16.msra.mxu0 0
    %5237 = vmatprep.subr.bf16.mxu0 0
    %5238 = vmatpush1.bf16.msra.mxu0 0
    %5239 = vmatprep.subr.bf16.mxu0 0
    %5240 = vmatpush1.bf16.msra.mxu0 0
    %5241 = vmatprep.subr.bf16.mxu0 0
    %5242 = vmatpush1.bf16.msra.mxu0 0
    %5243 = vmatprep.subr.bf16.mxu0 0
    %5244 = vmatpush1.bf16.msra.mxu0 0
    %5245 = vmatprep.subr.bf16.mxu0 0
    %5246 = vmatpush1.bf16.msra.mxu0 0
    %5247 = vmatprep.subr.bf16.mxu0 0
    %5248 = vmatpush1.bf16.msra.mxu0 0
    %5249 = vmatprep.subr.bf16.mxu0 0
    %5250 = vmatpush1.bf16.msra.mxu0 0
    %5251 = vmatprep.subr.bf16.mxu0 0
    %5252 = vmatpush1.bf16.msra.mxu0 0
    %5253 = vmatprep.subr.bf16.mxu0 0
    %5254 = vmatpush1.bf16.msra.mxu0 0
    %5255 = vmatprep.subr.bf16.mxu0 0
    %5256 = vmatpush1.bf16.msra.mxu0 0
    %5257 = vmatprep.subr.bf16.mxu0 0
    %5258 = vmatpush1.bf16.msra.mxu0 0
    %5259 = vmatprep.mubr.bf16.mxu0 0
    %5260 = vmatmul.mubr.bf16.gmra.mrb[0].mxu0 %v5222
    %v5261 = vpop.f32.mrb[0].mxu0
    %v5262 = vadd.f32 0.0, %v5261
    %v5263 = vpop.f32.mrb[0].mxu0
    %v5264 = vpop.f32.mrb[0].mxu0
    %v5265 = vpop.f32.mrb[0].mxu0
    %5266 = vdwg.mxu0
    %v5268 = vsel %vm1440, %v5079, 0
    %5270 = vmatprep.subr.bf16.mxu0 0
    %5271 = vmatpush1.bf16.msra.mxu0 %v5087
    %5272 = vmatprep.subr.bf16.mxu0 0
    %5273 = vmatpush1.bf16.msra.mxu0 0
    %5274 = vmatprep.subr.bf16.mxu0 0
    %5275 = vmatpush1.bf16.msra.mxu0 0
    %5276 = vmatprep.subr.bf16.mxu0 0
    %5277 = vmatpush1.bf16.msra.mxu0 0
    %5278 = vmatprep.subr.bf16.mxu0 0
    %5279 = vmatpush1.bf16.msra.mxu0 0
    %5280 = vmatprep.subr.bf16.mxu0 0
    %5281 = vmatpush1.bf16.msra.mxu0 0
    %5282 = vmatprep.subr.bf16.mxu0 0
    %5283 = vmatpush1.bf16.msra.mxu0 0
    %5284 = vmatprep.subr.bf16.mxu0 0
    %5285 = vmatpush1.bf16.msra.mxu0 0
    %5286 = vmatprep.subr.bf16.mxu0 0
    %5287 = vmatpush1.bf16.msra.mxu0 0
    %5288 = vmatprep.subr.bf16.mxu0 0
    %5289 = vmatpush1.bf16.msra.mxu0 0
    %5290 = vmatprep.subr.bf16.mxu0 0
    %5291 = vmatpush1.bf16.msra.mxu0 0
    %5292 = vmatprep.subr.bf16.mxu0 0
    %5293 = vmatpush1.bf16.msra.mxu0 0
    %5294 = vmatprep.subr.bf16.mxu0 0
    %5295 = vmatpush1.bf16.msra.mxu0 0
    %5296 = vmatprep.subr.bf16.mxu0 0
    %5297 = vmatpush1.bf16.msra.mxu0 0
    %5298 = vmatprep.subr.bf16.mxu0 0
    %5299 = vmatpush1.bf16.msra.mxu0 0
    %5300 = vmatprep.subr.bf16.mxu0 0
    %5301 = vmatpush1.bf16.msra.mxu0 0
    %5302 = vmatprep.mubr.bf16.mxu0 0
    %5303 = vmatmul.mubr.bf16.gmra.mrb[0].mxu0 %v5268
    %v5304 = vpop.f32.mrb[0].mxu0
    %v5305 = vadd.f32 0.0, %v5304
    %v5306 = vpop.f32.mrb[0].mxu0
    %v5307 = vpop.f32.mrb[0].mxu0
    %v5308 = vpop.f32.mrb[0].mxu0
    %5309 = vdwg.mxu0
    %v5311 = vsel %vm1440, %v5080, 0
    %5313 = vmatprep.subr.bf16.mxu0 0
    %5314 = vmatpush1.bf16.msra.mxu0 %v5133
    %5315 = vmatprep.subr.bf16.mxu0 0
    %5316 = vmatpush1.bf16.msra.mxu0 0
    %5317 = vmatprep.subr.bf16.mxu0 0
    %5318 = vmatpush1.bf16.msra.mxu0 0
    %5319 = vmatprep.subr.bf16.mxu0 0
    %5320 = vmatpush1.bf16.msra.mxu0 0
    %5321 = vmatprep.subr.bf16.mxu0 0
    %5322 = vmatpush1.bf16.msra.mxu0 0
    %5323 = vmatprep.subr.bf16.mxu0 0
    %5324 = vmatpush1.bf16.msra.mxu0 0
    %5325 = vmatprep.subr.bf16.mxu0 0
    %5326 = vmatpush1.bf16.msra.mxu0 0
    %5327 = vmatprep.subr.bf16.mxu0 0
    %5328 = vmatpush1.bf16.msra.mxu0 0
    %5329 = vmatprep.subr.bf16.mxu0 0
    %5330 = vmatpush1.bf16.msra.mxu0 0
    %5331 = vmatprep.subr.bf16.mxu0 0
    %5332 = vmatpush1.bf16.msra.mxu0 0
    %5333 = vmatprep.subr.bf16.mxu0 0
    %5334 = vmatpush1.bf16.msra.mxu0 0
    %5335 = vmatprep.subr.bf16.mxu0 0
    %5336 = vmatpush1.bf16.msra.mxu0 0
    %5337 = vmatprep.subr.bf16.mxu0 0
    %5338 = vmatpush1.bf16.msra.mxu0 0
    %5339 = vmatprep.subr.bf16.mxu0 0
    %5340 = vmatpush1.bf16.msra.mxu0 0
    %5341 = vmatprep.subr.bf16.mxu0 0
    %5342 = vmatpush1.bf16.msra.mxu0 0
    %5343 = vmatprep.subr.bf16.mxu0 0
    %5344 = vmatpush1.bf16.msra.mxu0 0
    %5345 = vmatprep.mubr.bf16.mxu0 0
    %5346 = vmatmul.mubr.bf16.gmra.mrb[0].mxu0 %v5311
    %v5347 = vpop.f32.mrb[0].mxu0
    %v5348 = vadd.f32 0.0, %v5347
    %v5349 = vpop.f32.mrb[0].mxu0
    %v5350 = vpop.f32.mrb[0].mxu0
    %v5351 = vpop.f32.mrb[0].mxu0
    %5352 = vdwg.mxu0
    %v5354 = vsel %vm1440, %v5081, 0
    %5356 = vmatprep.subr.bf16.mxu0 0
    %5357 = vmatpush1.bf16.msra.mxu0 %v5179
    %5358 = vmatprep.subr.bf16.mxu0 0
    %5359 = vmatpush1.bf16.msra.mxu0 0
    %5360 = vmatprep.subr.bf16.mxu0 0
    %5361 = vmatpush1.bf16.msra.mxu0 0
    %5362 = vmatprep.subr.bf16.mxu0 0
    %5363 = vmatpush1.bf16.msra.mxu0 0
    %5364 = vmatprep.subr.bf16.mxu0 0
    %5365 = vmatpush1.bf16.msra.mxu0 0
    %5366 = vmatprep.subr.bf16.mxu0 0
    %5367 = vmatpush1.bf16.msra.mxu0 0
    %5368 = vmatprep.subr.bf16.mxu0 0
    %5369 = vmatpush1.bf16.msra.mxu0 0
    %5370 = vmatprep.subr.bf16.mxu0 0
    %5371 = vmatpush1.bf16.msra.mxu0 0
    %5372 = vmatprep.subr.bf16.mxu0 0
    %5373 = vmatpush1.bf16.msra.mxu0 0
    %5374 = vmatprep.subr.bf16.mxu0 0
    %5375 = vmatpush1.bf16.msra.mxu0 0
    %5376 = vmatprep.subr.bf16.mxu0 0
    %5377 = vmatpush1.bf16.msra.mxu0 0
    %5378 = vmatprep.subr.bf16.mxu0 0
    %5379 = vmatpush1.bf16.msra.mxu0 0
    %5380 = vmatprep.subr.bf16.mxu0 0
    %5381 = vmatpush1.bf16.msra.mxu0 0
    %5382 = vmatprep.subr.bf16.mxu0 0
    %5383 = vmatpush1.bf16.msra.mxu0 0
    %5384 = vmatprep.subr.bf16.mxu0 0
    %5385 = vmatpush1.bf16.msra.mxu0 0
    %5386 = vmatprep.subr.bf16.mxu0 0
    %5387 = vmatpush1.bf16.msra.mxu0 0
    %5388 = vmatprep.mubr.bf16.mxu0 0
    %5389 = vmatmul.mubr.bf16.gmra.mrb[0].mxu0 %v5354
    %v5390 = vpop.f32.mrb[0].mxu0
    %v5391 = vadd.f32 0.0, %v5390
    %v5392 = vpop.f32.mrb[0].mxu0
    %v5393 = vpop.f32.mrb[0].mxu0
    %v5394 = vpop.f32.mrb[0].mxu0
    %5395 = vdwg.mxu0
    %v5397 = vsel %vm1440, %v5082, 0
    %5399 = vmatprep.subr.bf16.mxu0 0
    %5400 = vmatpush1.bf16.msra.mxu0 %v5225
    %5401 = vmatprep.subr.bf16.mxu0 0
    %5402 = vmatpush1.bf16.msra.mxu0 0
    %5403 = vmatprep.subr.bf16.mxu0 0
    %5404 = vmatpush1.bf16.msra.mxu0 0
    %5405 = vmatprep.subr.bf16.mxu0 0
    %5406 = vmatpush1.bf16.msra.mxu0 0
    %5407 = vmatprep.subr.bf16.mxu0 0
    %5408 = vmatpush1.bf16.msra.mxu0 0
    %5409 = vmatprep.subr.bf16.mxu0 0
    %5410 = vmatpush1.bf16.msra.mxu0 0
    %5411 = vmatprep.subr.bf16.mxu0 0
    %5412 = vmatpush1.bf16.msra.mxu0 0
    %5413 = vmatprep.subr.bf16.mxu0 0
    %5414 = vmatpush1.bf16.msra.mxu0 0
    %5415 = vmatprep.subr.bf16.mxu0 0
    %5416 = vmatpush1.bf16.msra.mxu0 0
    %5417 = vmatprep.subr.bf16.mxu0 0
    %5418 = vmatpush1.bf16.msra.mxu0 0
    %5419 = vmatprep.subr.bf16.mxu0 0
    %5420 = vmatpush1.bf16.msra.mxu0 0
    %5421 = vmatprep.subr.bf16.mxu0 0
    %5422 = vmatpush1.bf16.msra.mxu0 0
    %5423 = vmatprep.subr.bf16.mxu0 0
    %5424 = vmatpush1.bf16.msra.mxu0 0
    %5425 = vmatprep.subr.bf16.mxu0 0
    %5426 = vmatpush1.bf16.msra.mxu0 0
    %5427 = vmatprep.subr.bf16.mxu0 0
    %5428 = vmatpush1.bf16.msra.mxu0 0
    %5429 = vmatprep.subr.bf16.mxu0 0
    %5430 = vmatpush1.bf16.msra.mxu0 0
    %5431 = vmatprep.mubr.bf16.mxu0 0
    %5432 = vmatmul.mubr.bf16.gmra.mrb[0].mxu0 %v5397
    %v5433 = vpop.f32.mrb[0].mxu0
    %v5434 = vadd.f32 0.0, %v5433
    %v5435 = vpop.f32.mrb[0].mxu0
    %v5436 = vpop.f32.mrb[0].mxu0
    %v5437 = vpop.f32.mrb[0].mxu0
    %5438 = vdwg.mxu0
    %v5439 = vsel %vm135, %v5124, 0.0
    %v5440 = vsel %vm135, %v5170, 0.0
    %v5441 = vadd.f32 %v5439, %v5440
    %v5442 = vsel %vm135, %v5216, 0.0
    %v5443 = vadd.f32 %v5441, %v5442
    %v5444 = vsel %vm135, %v5262, 0.0
    %v5445 = vadd.f32 %v5443, %v5444
    %v5446 = vsel %vm135, %v5305, 0.0
    %v5447 = vsel %vm135, %v5348, 0.0
    %v5448 = vadd.f32 %v5446, %v5447
    %v5449 = vsel %vm135, %v5391, 0.0
    %v5450 = vadd.f32 %v5448, %v5449
    %v5451 = vsel %vm135, %v5434, 0.0
    %v5452 = vadd.f32 %v5450, %v5451
    %v5453 = vlaneseq
    %v5454 = vshrl.u32 %v5453, 7
    %v5455 = vsub.s32 0, %v5454
    %v5456 = vrot.slane %v2955, %v5455
    %v5457 = vadd.f32 %v5445, %v5456
    %v5458 = vadd.f32 %v5452, %v5456
    %v5459 = vadd.f32 %v2952, %v5457
    %v5460 = vadd.f32 %v2953, %v5458
    %v5461 = vsel %vm135, %v5459, 0.0
    %5462 = vadd.xlane.f32.xlu0 %v5461
    %v5463 = vpop.xlane.xlu0 %5462
    %v5464 = vsel %vm135, %v5460, 0.0
    %5465 = vadd.xlane.f32.xlu0 %v5464
    %v5466 = vpop.xlane.xlu0 %5465
    %v5467 = vmul.f32 %v5463, %v142
    %v5468 = vmul.f32 %v5466, %v142
    %v5469 = vsub.f32 %v5459, %v5467
    %v5470 = vsub.f32 %v5460, %v5468
    %v5471 = vmul.f32 %v5469, %v5469
    %v5472 = vmul.f32 %v5470, %v5470
    %v5473 = vsel %vm135, %v5471, 0.0
    %5474 = vadd.xlane.f32.xlu0 %v5473
    %v5475 = vpop.xlane.xlu0 %5474
    %v5476 = vsel %vm135, %v5472, 0.0
    %5477 = vadd.xlane.f32.xlu0 %v5476
    %v5478 = vpop.xlane.xlu0 %5477
    %v5479 = vmul.f32 %v5475, %v142
    %v5480 = vmul.f32 %v5478, %v142
    %v5481 = vadd.f32 %v5479, 1e-12
    %v5482 = vadd.f32 %v5480, 1e-12
    %v5483 = vrsqrt.pop %v5481
    %v5484 = vrsqrt.pop %v5482
    %v5485 = vmul.f32 %v5469, %v5483
    %v5486 = vmul.f32 %v5470, %v5484
    %v5487 = vlaneseq
    %v5488 = vshrl.u32 %v5487, 7
    %v5489 = vsub.s32 1, %v5488
    %v5490 = vrot.slane %v2955, %v5489
    %v5491 = vmul.f32 %v5485, %v5490
    %v5492 = vmul.f32 %v5486, %v5490
    %v5493 = vlaneseq
    %v5494 = vshrl.u32 %v5493, 7
    %v5495 = vsub.s32 2, %v5494
    %v5496 = vrot.slane %v2955, %v5495
    %v5497 = vadd.f32 %v5491, %v5496
    %v5498 = vadd.f32 %v5492, %v5496
    %v5499 = vpack.c.bf16 %v5498, %v5497
    %s5500 = scalar_lea.vmem %s8, 16
    %v5501 = vld [vmem:[%s5500] sm:$0xf]
    %v5502 = vld [vmem:[%s5500 + $0x4] sm:$0xf]
    %v5503 = vld [vmem:[%s5500 + $0x8] sm:$0xf]
    %v5504 = vld [vmem:[%s5500 + $0xc] sm:$0xf]
    %s5505 = scalar_lea.vmem %s9, 1
    %v5506 = vld [vmem:[%s5505] sm:$0x1]
    %v5508 = vlaneseq
    %v5509 = vshrl.u32 %v5508, 7
    %v5510 = vsub.s32 0, %v5509
    %v5511 = vrot.slane %v5506, %v5510
    %v5517 = vunpack.c.l.b16 %v5501
    %v5518 = vunpack.c.l.b16 %v5502
    %v5519 = vunpack.c.l.b16 %v5503
    %v5520 = vunpack.c.l.b16 %v5504
    %v5521 = vpack.c.b16 %v5518, %v5517
    %v5522 = vpack.c.b16 %v5520, %v5519
    %v5526 = vsel %vm135, %v5499, 0
    %5528 = vmatprep.subr.bf16.mxu0 0
    %5529 = vmatpush1.bf16.msra.mxu0 %v5521
    %5530 = vmatprep.subr.bf16.mxu0 0
    %5531 = vmatpush1.bf16.msra.mxu0 %v5522
    %5532 = vmatprep.subr.bf16.mxu0 0
    %5533 = vmatpush1.bf16.msra.mxu0 0
    %5534 = vmatprep.subr.bf16.mxu0 0
    %5535 = vmatpush1.bf16.msra.mxu0 0
    %5536 = vmatprep.subr.bf16.mxu0 0
    %5537 = vmatpush1.bf16.msra.mxu0 0
    %5538 = vmatprep.subr.bf16.mxu0 0
    %5539 = vmatpush1.bf16.msra.mxu0 0
    %5540 = vmatprep.subr.bf16.mxu0 0
    %5541 = vmatpush1.bf16.msra.mxu0 0
    %5542 = vmatprep.subr.bf16.mxu0 0
    %5543 = vmatpush1.bf16.msra.mxu0 0
    %5544 = vmatprep.subr.bf16.mxu0 0
    %5545 = vmatpush1.bf16.msra.mxu0 0
    %5546 = vmatprep.subr.bf16.mxu0 0
    %5547 = vmatpush1.bf16.msra.mxu0 0
    %5548 = vmatprep.subr.bf16.mxu0 0
    %5549 = vmatpush1.bf16.msra.mxu0 0
    %5550 = vmatprep.subr.bf16.mxu0 0
    %5551 = vmatpush1.bf16.msra.mxu0 0
    %5552 = vmatprep.subr.bf16.mxu0 0
    %5553 = vmatpush1.bf16.msra.mxu0 0
    %5554 = vmatprep.subr.bf16.mxu0 0
    %5555 = vmatpush1.bf16.msra.mxu0 0
    %5556 = vmatprep.subr.bf16.mxu0 0
    %5557 = vmatpush1.bf16.msra.mxu0 0
    %5558 = vmatprep.subr.bf16.mxu0 0
    %5559 = vmatpush1.bf16.msra.mxu0 0
    %5560 = vmatprep.mubr.bf16.mxu0 0
    %5561 = vmatmul.mubr.bf16.gmra.mrb[0].mxu0 %v5526
    %v5562 = vpop.f32.mrb[0].mxu0
    %v5563 = vadd.f32 %v5511, %v5562
    %v5564 = vpop.f32.mrb[0].mxu0
    %v5565 = vpop.f32.mrb[0].mxu0
    %v5566 = vadd.f32 %v5511, %v5565
    %v5567 = vpop.f32.mrb[0].mxu0
    %5568 = vdwg.mxu0
    %v5569 = vmul.f32 %v5563, %v5563
    %v5570 = vmul.f32 %v5566, %v5566
    %v5571 = vmul.f32 %v5563, %v5569
    %v5572 = vmul.f32 %v5566, %v5570
    %v5573 = vmul.f32 %v5571, 0.044715
    %v5574 = vmul.f32 %v5572, 0.044715
    %v5575 = vadd.f32 %v5563, %v5573
    %v5576 = vadd.f32 %v5566, %v5574
    %v5577 = vmul.f32 %v5575, 0.7978846
    %v5578 = vmul.f32 %v5576, 0.7978846
    %v5579 = vtanh.pop %v5577
    %v5580 = vtanh.pop %v5578
    %v5581 = vadd.f32 %v5579, 1.0
    %v5582 = vadd.f32 %v5580, 1.0
    %v5583 = vmul.f32 %v5581, 0.5
    %v5584 = vmul.f32 %v5582, 0.5
    %v5585 = vmul.f32 %v5563, %v5583
    %v5586 = vmul.f32 %v5566, %v5584
    %v5587 = vpack.c.bf16 %v5586, %v5585
    %s5588 = scalar_lea.vmem %s10, 64
    %v5589 = vld [vmem:[%s5588] sm:$0xf]
    %v5590 = vld [vmem:[%s5588 + $0x4] sm:$0xf]
    %v5591 = vld [vmem:[%s5588 + $0x8] sm:$0xf]
    %v5592 = vld [vmem:[%s5588 + $0xc] sm:$0xf]
    %v5593 = vld [vmem:[%s5588 + $0x10] sm:$0xf]
    %v5594 = vld [vmem:[%s5588 + $0x14] sm:$0xf]
    %v5595 = vld [vmem:[%s5588 + $0x18] sm:$0xf]
    %v5596 = vld [vmem:[%s5588 + $0x1c] sm:$0xf]
    %v5597 = vld [vmem:[%s5588 + $0x20] sm:$0xf]
    %v5598 = vld [vmem:[%s5588 + $0x24] sm:$0xf]
    %v5599 = vld [vmem:[%s5588 + $0x28] sm:$0xf]
    %v5600 = vld [vmem:[%s5588 + $0x2c] sm:$0xf]
    %v5601 = vld [vmem:[%s5588 + $0x30] sm:$0xf]
    %v5602 = vld [vmem:[%s5588 + $0x34] sm:$0xf]
    %v5603 = vld [vmem:[%s5588 + $0x38] sm:$0xf]
    %v5604 = vld [vmem:[%s5588 + $0x3c] sm:$0xf]
    %v5605 = vlaneseq
    %v5606 = vshrl.u32 %v5605, 7
    %v5607 = vsub.s32 3, %v5606
    %v5608 = vrot.slane %v2955, %v5607
    %v5625 = vunpack.c.l.b16 %v5589
    %v5626 = vunpack.c.l.b16 %v5590
    %v5627 = vunpack.c.l.b16 %v5591
    %v5628 = vunpack.c.l.b16 %v5592
    %v5629 = vunpack.c.l.b16 %v5593
    %v5630 = vunpack.c.l.b16 %v5594
    %v5631 = vunpack.c.l.b16 %v5595
    %v5632 = vunpack.c.l.b16 %v5596
    %v5633 = vunpack.c.l.b16 %v5597
    %v5634 = vunpack.c.l.b16 %v5598
    %v5635 = vunpack.c.l.b16 %v5599
    %v5636 = vunpack.c.l.b16 %v5600
    %v5637 = vunpack.c.l.b16 %v5601
    %v5638 = vunpack.c.l.b16 %v5602
    %v5639 = vunpack.c.l.b16 %v5603
    %v5640 = vunpack.c.l.b16 %v5604
    %v5641 = vpack.c.b16 %v5626, %v5625
    %v5642 = vpack.c.b16 %v5628, %v5627
    %v5643 = vpack.c.b16 %v5630, %v5629
    %v5644 = vpack.c.b16 %v5632, %v5631
    %v5645 = vpack.c.b16 %v5634, %v5633
    %v5646 = vpack.c.b16 %v5636, %v5635
    %v5647 = vpack.c.b16 %v5638, %v5637
    %v5648 = vpack.c.b16 %v5640, %v5639
    %5657 = vmatprep.subr.bf16.mxu0 0
    %5658 = vmatpush1.bf16.msra.mxu0 %v5641
    %5659 = vmatprep.subr.bf16.mxu0 0
    %5660 = vmatpush1.bf16.msra.mxu0 %v5642
    %5661 = vmatprep.subr.bf16.mxu0 0
    %5662 = vmatpush1.bf16.msra.mxu0 %v5643
    %5663 = vmatprep.subr.bf16.mxu0 0
    %5664 = vmatpush1.bf16.msra.mxu0 %v5644
    %5665 = vmatprep.subr.bf16.mxu0 0
    %5666 = vmatpush1.bf16.msra.mxu0 %v5645
    %5667 = vmatprep.subr.bf16.mxu0 0
    %5668 = vmatpush1.bf16.msra.mxu0 %v5646
    %5669 = vmatprep.subr.bf16.mxu0 0
    %5670 = vmatpush1.bf16.msra.mxu0 %v5647
    %5671 = vmatprep.subr.bf16.mxu0 0
    %5672 = vmatpush1.bf16.msra.mxu0 %v5648
    %5673 = vmatprep.subr.bf16.mxu0 0
    %5674 = vmatpush1.bf16.msra.mxu0 0
    %5675 = vmatprep.subr.bf16.mxu0 0
    %5676 = vmatpush1.bf16.msra.mxu0 0
    %5677 = vmatprep.subr.bf16.mxu0 0
    %5678 = vmatpush1.bf16.msra.mxu0 0
    %5679 = vmatprep.subr.bf16.mxu0 0
    %5680 = vmatpush1.bf16.msra.mxu0 0
    %5681 = vmatprep.subr.bf16.mxu0 0
    %5682 = vmatpush1.bf16.msra.mxu0 0
    %5683 = vmatprep.subr.bf16.mxu0 0
    %5684 = vmatpush1.bf16.msra.mxu0 0
    %5685 = vmatprep.subr.bf16.mxu0 0
    %5686 = vmatpush1.bf16.msra.mxu0 0
    %5687 = vmatprep.subr.bf16.mxu0 0
    %5688 = vmatpush1.bf16.msra.mxu0 0
    %5689 = vmatprep.mubr.bf16.mxu0 0
    %5690 = vmatmul.mubr.bf16.gmra.mrb[0].mxu0 %v5587
    %v5691 = vpop.f32.mrb[0].mxu0
    %v5692 = vadd.f32 %v5608, %v5691
    %v5693 = vpop.f32.mrb[0].mxu0
    %v5694 = vpop.f32.mrb[0].mxu0
    %v5695 = vadd.f32 %v5608, %v5694
    %v5696 = vpop.f32.mrb[0].mxu0
    %5697 = vdwg.mxu0
    %v5698 = vadd.f32 %v5497, %v5692
    %v5699 = vadd.f32 %v5498, %v5695
    %v5700 = vsel %vm135, %v5698, 0.0
    %5701 = vadd.xlane.f32.xlu0 %v5700
    %v5702 = vpop.xlane.xlu0 %5701
    %v5703 = vsel %vm135, %v5699, 0.0
    %5704 = vadd.xlane.f32.xlu0 %v5703
    %v5705 = vpop.xlane.xlu0 %5704
    %v5706 = vmul.f32 %v5702, %v142
    %v5707 = vmul.f32 %v5705, %v142
    %v5708 = vsub.f32 %v5698, %v5706
    %v5709 = vsub.f32 %v5699, %v5707
    %v5710 = vmul.f32 %v5708, %v5708
    %v5711 = vmul.f32 %v5709, %v5709
    %v5712 = vsel %vm135, %v5710, 0.0
    %5713 = vadd.xlane.f32.xlu0 %v5712
    %v5714 = vpop.xlane.xlu0 %5713
    %v5715 = vsel %vm135, %v5711, 0.0
    %5716 = vadd.xlane.f32.xlu0 %v5715
    %v5717 = vpop.xlane.xlu0 %5716
    %v5718 = vmul.f32 %v5714, %v142
    %v5719 = vmul.f32 %v5717, %v142
    %v5720 = vadd.f32 %v5718, 1e-12
    %v5721 = vadd.f32 %v5719, 1e-12
    %v5722 = vrsqrt.pop %v5720
    %v5723 = vrsqrt.pop %v5721
    %v5724 = vmul.f32 %v5708, %v5722
    %v5725 = vmul.f32 %v5709, %v5723
    %v5726 = vlaneseq
    %v5727 = vshrl.u32 %v5726, 7
    %v5728 = vsub.s32 4, %v5727
    %v5729 = vrot.slane %v2955, %v5728
    %v5730 = vmul.f32 %v5724, %v5729
    %v5731 = vmul.f32 %v5725, %v5729
    %v5732 = vlaneseq
    %v5733 = vshrl.u32 %v5732, 7
    %v5734 = vsub.s32 5, %v5733
    %v5735 = vrot.slane %v2955, %v5734
    %v5736 = vadd.f32 %v5730, %v5735
    %v5737 = vadd.f32 %v5731, %v5735
    %5738 = vst.msk [vmem:[#allocation2] sm:$0xff] %vm135, %v5736
    %5739 = vst.msk [vmem:[#allocation2 + $0x8] sm:$0xff] %vm135, %v5737
    // Predicated region
    $region46: #{conditioner_forward.1} parent=1 // pred_check
      _
    $region47: #{conditioner_forward.1} parent=1 // pred_check_branch
      %5741 = sbr.rel (0) target = $region49
    $region48: #{conditioner_forward.1} parent=1 // pred_region
      %s5743 = ssub.s32 256, 256
      %5744 = vsyncadd [#allocation3], %s5743
      %s5745 = sshll.u32 [#allocation2], 4
      %s5746 = int_to_ptr.vmem [resolvable:$true] %s5745
      %5751 = dma.vmem_to_hbm [thread:$0]  %s5746, 256, %s11, [#allocation3], 128, 128, 8
    $region49: #{conditioner_forward.1} parent=1 // pred_fallthru
      _
    // Predicated region
    $region50: #{conditioner_forward.1} parent=1 // pred_check
      _
    $region51: #{conditioner_forward.1} parent=1 // pred_check_branch
      %5753 = sbr.rel (0) target = $region53
    $region52: #{conditioner_forward.1} parent=1 // pred_region
      %5754 = dma.done [#allocation3], 256
    $region53: #{conditioner_forward.1} parent=1 // pred_fallthru
      _
    %5755 = vsyncpa [#allocation3], 1

</llo_original>
